<compile_context>
chip_gen: v7x
topology: tpu7x:2x2x1
jax: 0.10.0
libtpu: 0.0.40
codegen_flags: <defaults>
</compile_context>

<pallas_src>
import jax
import jax.numpy as jnp
from jax.experimental import pallas as pl
from jax.experimental.pallas import tpu as pltpu


def _aff_channel_kernel(x_ref, w_ref, b_ref, o_ref):
    # x_ref: (TILE_M, C), w_ref: (C, C), b_ref: (1, C), o_ref: (TILE_M, C)
    acc = jnp.dot(
        x_ref[...],
        w_ref[...],
        preferred_element_type=jnp.float32,
        precision=jax.lax.Precision.HIGHEST,
    )
    o_ref[...] = (acc + b_ref[...]).astype(o_ref.dtype)


def _sublane_pack(dtype) -> int:
    # f32 -> 8, bf16/f16 -> 16, int8/fp8 -> 32
    itemsize = jnp.dtype(dtype).itemsize
    return max(8, 32 // max(itemsize, 1))


def aff_channel(x, alpha, beta, color, *, channel_first=True, tile_m=2048):
    """x: (..., C); alpha/beta: (1, 1, C); color: (C, C). Returns x.shape."""
    orig_shape = x.shape
    C = orig_shape[-1]
    rows = 1
    for d in orig_shape[:-1]:
        rows *= d
    x2d = x.reshape(rows, C)

    # ---- Fold alpha/beta into a single (C, C) matrix + (1, C) bias (O(C^2), once).
    alpha_f = alpha.reshape(C).astype(jnp.float32)
    beta_f = beta.reshape(C).astype(jnp.float32)
    color_f = color.astype(jnp.float32)
    if channel_first:
        # out_d = alpha_d * sum_c x_c * color[d, c] + beta_d
        w = color_f.T * alpha_f[None, :]
        b = beta_f
    else:
        # out_d = sum_c x_c * (alpha_c * color[d, c]) + sum_c beta_c * color[d, c]
        w = color_f.T * alpha_f[:, None]
        b = beta_f @ color_f.T
    w = w.astype(x.dtype)                      # bf16 in -> bf16 MXU operands
    b2d = b.reshape(1, C).astype(jnp.float32)  # f32 bias added to f32 accumulator

    # ---- Row tiling: dtype-aware sublane rounding, VMEM-budget cap, no host pad.
    pack = _sublane_pack(x.dtype)
    itemsize = jnp.dtype(x.dtype).itemsize
    # Keep double-buffered input + output tiles (~4 * tile * C_padded * itemsize)
    # comfortably under v5e's 16 MiB scoped-VMEM default.
    vmem_budget = 12 * 1024 * 1024
    lane_padded_c = max(C, 128)
    max_tile_rows = max(pack, vmem_budget // (4 * lane_padded_c * itemsize))
    rows_up = ((rows + pack - 1) // pack) * pack
    tile = min(tile_m, max_tile_rows, rows_up)
    tile = max(pack, (tile // pack) * pack)
    n_tiles = pl.cdiv(rows, tile)  # last block may be partial; Pallas masks it

    out2d = pl.pallas_call(
        _aff_channel_kernel,
        out_shape=jax.ShapeDtypeStruct((rows, C), x.dtype),
        grid_spec=pltpu.PrefetchScalarGridSpec(
            num_scalar_prefetch=0,
            grid=(n_tiles,),
            in_specs=[
                pl.BlockSpec((tile, C), lambda i: (i, 0)),  # x rows: streamed
                pl.BlockSpec((C, C), lambda i: (0, 0)),     # folded W: resident
                pl.BlockSpec((1, C), lambda i: (0, 0)),     # folded bias: resident
            ],
            out_specs=pl.BlockSpec((tile, C), lambda i: (i, 0)),
        ),
        compiler_params=pltpu.CompilerParams(
            dimension_semantics=("parallel",),  # megacore sharding across row tiles
        ),
    )(x2d, w, b2d)

    return out2d.reshape(orig_shape)


def aff_channel_ref(x, alpha, beta, color, *, channel_first=True):
    xf = x.astype(jnp.float32)
    cf = color.astype(jnp.float32)
    if channel_first:
        x1 = jnp.einsum("...c,dc->...d", xf, cf)
        return x1 * alpha + beta
    else:
        x1 = xf * alpha + beta
        return jnp.einsum("...c,dc->...d", x1, cf)


if __name__ == "__main__":
    # Lane-dense operating point: dim is a multiple of 128 so output stores are
    # unmasked full vregs; rows = B*N gives a multi-step "parallel" grid.
    B, N, dim = 2, 256, 128

    key = jax.random.PRNGKey(0)
    kx, ka, kb, kc = jax.random.split(key, 4)

    x = jax.random.normal(kx, (B, N, dim), dtype=jnp.float32)

    # Module init is ones/zeros/eye; perturb deterministically so the matmul,
    # scale, and bias paths are all exercised.
    alpha = jnp.ones((1, 1, dim), jnp.float32) + 0.1 * jax.random.normal(ka, (1, 1, dim))
    beta = jnp.zeros((1, 1, dim), jnp.float32) + 0.1 * jax.random.normal(kb, (1, 1, dim))
    color = jnp.eye(dim, dtype=jnp.float32) + 0.1 * jax.random.normal(kc, (dim, dim))

    # channel_first=True branch
    out = jax.block_until_ready(aff_channel(x, alpha, beta, color, channel_first=True))
    ref = aff_channel_ref(x, alpha, beta, color, channel_first=True)
    assert out.shape == (B, N, dim)
    assert jnp.allclose(out, ref, atol=1e-4, rtol=1e-4), "mismatch (channel_first=True)"

    # channel_first=False branch
    out2 = jax.block_until_ready(aff_channel(x, alpha, beta, color, channel_first=False))
    ref2 = aff_channel_ref(x, alpha, beta, color, channel_first=False)
    assert jnp.allclose(out2, ref2, atol=1e-4, rtol=1e-4), "mismatch (channel_first=False)"

    # Ragged row count (partial last block, no host-side pad/slice).
    x_rag = jax.random.normal(kx, (2, 9, dim), dtype=jnp.float32)
    out3 = jax.block_until_ready(aff_channel(x_rag, alpha, beta, color, channel_first=True))
    ref3 = aff_channel_ref(x_rag, alpha, beta, color, channel_first=True)
    assert jnp.allclose(out3, ref3, atol=1e-4, rtol=1e-4), "mismatch (ragged rows)"

    # Small non-lane-dense channel count (block equals full dim -> still legal).
    dim_s = 32
    ka2, kb2, kc2 = jax.random.split(ka, 3)
    alpha_s = jnp.ones((1, 1, dim_s), jnp.float32) + 0.1 * jax.random.normal(ka2, (1, 1, dim_s))
    beta_s = jnp.zeros((1, 1, dim_s), jnp.float32) + 0.1 * jax.random.normal(kb2, (1, 1, dim_s))
    color_s = jnp.eye(dim_s, dtype=jnp.float32) + 0.1 * jax.random.normal(kc2, (dim_s, dim_s))
    x_small = jax.random.normal(kx, (2, 8, dim_s), dtype=jnp.float32)
    out4 = jax.block_until_ready(
        aff_channel(x_small, alpha_s, beta_s, color_s, channel_first=False)
    )
    ref4 = aff_channel_ref(x_small, alpha_s, beta_s, color_s, channel_first=False)
    assert jnp.allclose(out4, ref4, atol=1e-4, rtol=1e-4), "mismatch (small dim)"

    print("KERNEL_OK")
</pallas_src>

<mosaic_0001>
module attributes {stable_mosaic.version = 11 : i64} {
  func.func @_aff_channel_kernel(%arg0: i32, %arg1: memref<512x128xf32, #tpu.memory_space<vmem>>, %arg2: memref<128x128xf32, #tpu.memory_space<vmem>>, %arg3: memref<1x128xf32, #tpu.memory_space<vmem>>, %arg4: memref<512x128xf32, #tpu.memory_space<vmem>>) attributes {dimension_semantics = [#tpu.dimension_semantics<parallel>], iteration_bounds = array<i64: 1>, scalar_prefetch = 0 : i64, scratch_operands = 0 : i64, tpu.core_type = #tpu.core_type<tc>, window_params = [{transform_indices = @transform_0, window_bounds = array<i64: 512, 128>}, {pipeline_mode = #tpu.pipeline_mode<synchronous>, transform_indices = @transform_1, window_bounds = array<i64: 128, 128>}, {pipeline_mode = #tpu.pipeline_mode<synchronous>, transform_indices = @transform_2, window_bounds = array<i64: 1, 128>}, {transform_indices = @transform_3, window_bounds = array<i64: 512, 128>}]} {
    %c0 = arith.constant 0 : index
    %c0_0 = arith.constant 0 : index
    %0 = vector.load %arg1[%c0, %c0_0] : memref<512x128xf32, #tpu.memory_space<vmem>>, vector<512x128xf32>
    %c0_1 = arith.constant 0 : index
    %c0_2 = arith.constant 0 : index
    %1 = vector.load %arg2[%c0_1, %c0_2] : memref<128x128xf32, #tpu.memory_space<vmem>>, vector<128x128xf32>
    %cst = arith.constant dense<0.000000e+00> : vector<512x128xf32>
    %2 = tpu.matmul %0, %1, %cst {dimension_numbers = #tpu.dot_dimension_numbers<[1], [0], [0], [1], [0, 0, 1, 1], [], []>, precision = #tpu.contract_precision<fp32>} : vector<512x128xf32>, vector<128x128xf32>, vector<512x128xf32> -> vector<512x128xf32>
    %c0_3 = arith.constant 0 : index
    %c0_4 = arith.constant 0 : index
    %3 = vector.load %arg3[%c0_3, %c0_4] : memref<1x128xf32, #tpu.memory_space<vmem>>, vector<1x128xf32>
    %4 = vector.broadcast %3 : vector<1x128xf32> to vector<512x128xf32>
    %5 = arith.addf %2, %4 : vector<512x128xf32>
    %c0_5 = arith.constant 0 : index
    %c0_6 = arith.constant 0 : index
    %6 = vector.load %arg4[%c0_5, %c0_6] : memref<512x128xf32, #tpu.memory_space<vmem>>, vector<512x128xf32>
    tpu.vector_store %arg4[%c0_5, %c0_6], %5 {strides = array<i32>} : memref<512x128xf32, #tpu.memory_space<vmem>>, vector<512x128xf32>,
    return
  }
  func.func @transform_0(%arg0: i32) -> (i32, i32) {
    %c0_i32 = arith.constant 0 : i32
    %c0_i32_0 = arith.constant 0 : i32
    return %arg0, %c0_i32 : i32, i32
  }
  func.func @transform_1(%arg0: i32) -> (i32, i32) {
    %c0_i32 = arith.constant 0 : i32
    %c0_i32_0 = arith.constant 0 : i32
    %c0_i32_1 = arith.constant 0 : i32
    return %c0_i32, %c0_i32_0 : i32, i32
  }
  func.func @transform_2(%arg0: i32) -> (i32, i32) {
    %c0_i32 = arith.constant 0 : i32
    %c0_i32_0 = arith.constant 0 : i32
    %c0_i32_1 = arith.constant 0 : i32
    return %c0_i32, %c0_i32_0 : i32, i32
  }
  func.func @transform_3(%arg0: i32) -> (i32, i32) {
    %c0_i32 = arith.constant 0 : i32
    %c0_i32_0 = arith.constant 0 : i32
    return %arg0, %c0_i32 : i32, i32
  }
}

</mosaic_0001>

<llo_original>
// kernel: tpu_custom_call.1
$region0: #{tpu_custom_call.1}
  #allocation0 [shape = 'u32[]', space=smem, size = 0x4, offset = 0x4, fixed_abs, tag = 'smem constant byte address 0x4 - core index']
  #allocation1 [shape = 'u32[144,128]{1,0:T(1,128)}', space=vmem, size = 0x12000, scoped, tag = 'internal scratch']
  %s0 = inlined_call_operand.hbm [shape: f32[512,128], index: 0, kind: input, shape index: {}]
  %s1 = inlined_call_operand.hbm [shape: f32[128,128], index: 1, kind: input, shape index: {}]
  %s2 = inlined_call_operand.vmem [shape: f32[1,128], index: 2, kind: input, shape index: {}]
  %s3 = inlined_call_operand.hbm [shape: f32[512,128], index: 3, kind: output, shape index: {}]
  %s4 = sld [smem:[#allocation0]]
  $region30: #{tpu_custom_call.1} parent=0
    _
  %s6 = ssub.s32 1, %s4
  %s7 = scalar_select 0, %s6, %s4
  $region1: #{tpu_custom_call.1} parent=0
    #allocation2 [shape = 'u8[262144]{0}', space=vmem, size = 0x40000, scoped, tag = 'input window, operand 0, single buffered']
    #allocation3 [shape = 's32[1]{0}', space=sflag, size = 0x4, scoped, tag = 'scoped memory for tpu_custom_call.1']
    #allocation4 [shape = 's32[1]{0}', space=sflag, size = 0x4, scoped, tag = 'scoped memory for tpu_custom_call.1']
    #allocation5 [shape = 'u8[65536]{0}', space=vmem, size = 0x10000, scoped, tag = 'input window, operand 1, single buffered']
    #allocation6 [shape = 's32[1]{0}', space=sflag, size = 0x4, scoped, tag = 'scoped memory for tpu_custom_call.1']
    #allocation7 [shape = 'u8[262144]{0}', space=vmem, size = 0x40000, scoped, tag = 'output window, operand 0, single buffered']
    %8 = vsyncpa [#allocation3], 0
    %9 = vsyncpa [#allocation6], 0
    %10 = vsyncpa [#allocation4], 0
    // Predicated region
    $region2: #{tpu_custom_call.1} parent=1 // pred_check
      _
    $region3: #{tpu_custom_call.1} parent=1 // pred_check_branch
      %12 = sbr.rel (0) target = $region5
    $region4: #{tpu_custom_call.1} parent=1 // pred_region
      %s14 = ssub.s32 8192, 8192
      %15 = vsyncadd [#allocation3], %s14
      %s16 = sshll.u32 [#allocation2], 4
      %s17 = int_to_ptr.vmem [resolvable:$true] %s16
      %22 = dma.hbm_to_vmem [thread:$0]  %s0, 8192, %s17, [#allocation3], 128, 128, 8
    $region5: #{tpu_custom_call.1} parent=1 // pred_fallthru
      _
    // Predicated region
    $region6: #{tpu_custom_call.1} parent=1 // pred_check
      _
    $region7: #{tpu_custom_call.1} parent=1 // pred_check_branch
      %24 = sbr.rel (0) target = $region9
    $region8: #{tpu_custom_call.1} parent=1 // pred_region
      %s26 = ssub.s32 2048, 2048
      %27 = vsyncadd [#allocation6], %s26
      %s28 = sshll.u32 [#allocation5], 4
      %s29 = int_to_ptr.vmem [resolvable:$true] %s28
      %34 = dma.hbm_to_vmem [thread:$0]  %s1, 2048, %s29, [#allocation6], 128, 128, 8
    $region9: #{tpu_custom_call.1} parent=1 // pred_fallthru
      _
    // Predicated region
    $region10: #{tpu_custom_call.1} parent=1 // pred_check
      _
    $region11: #{tpu_custom_call.1} parent=1 // pred_check_branch
      %36 = sbr.rel (0) target = $region13
    $region12: #{tpu_custom_call.1} parent=1 // pred_region
      _
    $region13: #{tpu_custom_call.1} parent=1 // pred_fallthru
      _
    // Predicated region
    $region14: #{tpu_custom_call.1} parent=1 // pred_check
      _
    $region15: #{tpu_custom_call.1} parent=1 // pred_check_branch
      %38 = sbr.rel (0) target = $region17
    $region16: #{tpu_custom_call.1} parent=1 // pred_region
      %39 = dma.done [#allocation3], 8192
    $region17: #{tpu_custom_call.1} parent=1 // pred_fallthru
      _
    // Predicated region
    $region18: #{tpu_custom_call.1} parent=1 // pred_check
      _
    $region19: #{tpu_custom_call.1} parent=1 // pred_check_branch
      %41 = sbr.rel (0) target = $region21
    $region20: #{tpu_custom_call.1} parent=1 // pred_region
      %42 = dma.done [#allocation6], 2048
    $region21: #{tpu_custom_call.1} parent=1 // pred_fallthru
      _
    %v43 = vld [vmem:[#allocation2] sm:$0xff]
    %v44 = vld [vmem:[#allocation2 + $0x8] sm:$0xff]
    %v45 = vld [vmem:[#allocation2 + $0x10] sm:$0xff]
    %v46 = vld [vmem:[#allocation2 + $0x18] sm:$0xff]
    %v47 = vld [vmem:[#allocation2 + $0x20] sm:$0xff]
    %v48 = vld [vmem:[#allocation2 + $0x28] sm:$0xff]
    %v49 = vld [vmem:[#allocation2 + $0x30] sm:$0xff]
    %v50 = vld [vmem:[#allocation2 + $0x38] sm:$0xff]
    %v51 = vld [vmem:[#allocation2 + $0x40] sm:$0xff]
    %v52 = vld [vmem:[#allocation2 + $0x48] sm:$0xff]
    %v53 = vld [vmem:[#allocation2 + $0x50] sm:$0xff]
    %v54 = vld [vmem:[#allocation2 + $0x58] sm:$0xff]
    %v55 = vld [vmem:[#allocation2 + $0x60] sm:$0xff]
    %v56 = vld [vmem:[#allocation2 + $0x68] sm:$0xff]
    %v57 = vld [vmem:[#allocation2 + $0x70] sm:$0xff]
    %v58 = vld [vmem:[#allocation2 + $0x78] sm:$0xff]
    %v59 = vld [vmem:[#allocation2 + $0x80] sm:$0xff]
    %v60 = vld [vmem:[#allocation2 + $0x88] sm:$0xff]
    %v61 = vld [vmem:[#allocation2 + $0x90] sm:$0xff]
    %v62 = vld [vmem:[#allocation2 + $0x98] sm:$0xff]
    %v63 = vld [vmem:[#allocation2 + $0xa0] sm:$0xff]
    %v64 = vld [vmem:[#allocation2 + $0xa8] sm:$0xff]
    %v65 = vld [vmem:[#allocation2 + $0xb0] sm:$0xff]
    %v66 = vld [vmem:[#allocation2 + $0xb8] sm:$0xff]
    %v67 = vld [vmem:[#allocation2 + $0xc0] sm:$0xff]
    %v68 = vld [vmem:[#allocation2 + $0xc8] sm:$0xff]
    %v69 = vld [vmem:[#allocation2 + $0xd0] sm:$0xff]
    %v70 = vld [vmem:[#allocation2 + $0xd8] sm:$0xff]
    %v71 = vld [vmem:[#allocation2 + $0xe0] sm:$0xff]
    %v72 = vld [vmem:[#allocation2 + $0xe8] sm:$0xff]
    %v73 = vld [vmem:[#allocation2 + $0xf0] sm:$0xff]
    %v74 = vld [vmem:[#allocation2 + $0xf8] sm:$0xff]
    %v75 = vld [vmem:[#allocation2 + $0x100] sm:$0xff]
    %v76 = vld [vmem:[#allocation2 + $0x108] sm:$0xff]
    %v77 = vld [vmem:[#allocation2 + $0x110] sm:$0xff]
    %v78 = vld [vmem:[#allocation2 + $0x118] sm:$0xff]
    %v79 = vld [vmem:[#allocation2 + $0x120] sm:$0xff]
    %v80 = vld [vmem:[#allocation2 + $0x128] sm:$0xff]
    %v81 = vld [vmem:[#allocation2 + $0x130] sm:$0xff]
    %v82 = vld [vmem:[#allocation2 + $0x138] sm:$0xff]
    %v83 = vld [vmem:[#allocation2 + $0x140] sm:$0xff]
    %v84 = vld [vmem:[#allocation2 + $0x148] sm:$0xff]
    %v85 = vld [vmem:[#allocation2 + $0x150] sm:$0xff]
    %v86 = vld [vmem:[#allocation2 + $0x158] sm:$0xff]
    %v87 = vld [vmem:[#allocation2 + $0x160] sm:$0xff]
    %v88 = vld [vmem:[#allocation2 + $0x168] sm:$0xff]
    %v89 = vld [vmem:[#allocation2 + $0x170] sm:$0xff]
    %v90 = vld [vmem:[#allocation2 + $0x178] sm:$0xff]
    %v91 = vld [vmem:[#allocation2 + $0x180] sm:$0xff]
    %v92 = vld [vmem:[#allocation2 + $0x188] sm:$0xff]
    %v93 = vld [vmem:[#allocation2 + $0x190] sm:$0xff]
    %v94 = vld [vmem:[#allocation2 + $0x198] sm:$0xff]
    %v95 = vld [vmem:[#allocation2 + $0x1a0] sm:$0xff]
    %v96 = vld [vmem:[#allocation2 + $0x1a8] sm:$0xff]
    %v97 = vld [vmem:[#allocation2 + $0x1b0] sm:$0xff]
    %v98 = vld [vmem:[#allocation2 + $0x1b8] sm:$0xff]
    %v99 = vld [vmem:[#allocation2 + $0x1c0] sm:$0xff]
    %v100 = vld [vmem:[#allocation2 + $0x1c8] sm:$0xff]
    %v101 = vld [vmem:[#allocation2 + $0x1d0] sm:$0xff]
    %v102 = vld [vmem:[#allocation2 + $0x1d8] sm:$0xff]
    %v103 = vld [vmem:[#allocation2 + $0x1e0] sm:$0xff]
    %v104 = vld [vmem:[#allocation2 + $0x1e8] sm:$0xff]
    %v105 = vld [vmem:[#allocation2 + $0x1f0] sm:$0xff]
    %v106 = vld [vmem:[#allocation2 + $0x1f8] sm:$0xff]
    %v107 = vld [vmem:[#allocation5] sm:$0xff]
    %v108 = vld [vmem:[#allocation5 + $0x8] sm:$0xff]
    %v109 = vld [vmem:[#allocation5 + $0x10] sm:$0xff]
    %v110 = vld [vmem:[#allocation5 + $0x18] sm:$0xff]
    %v111 = vld [vmem:[#allocation5 + $0x20] sm:$0xff]
    %v112 = vld [vmem:[#allocation5 + $0x28] sm:$0xff]
    %v113 = vld [vmem:[#allocation5 + $0x30] sm:$0xff]
    %v114 = vld [vmem:[#allocation5 + $0x38] sm:$0xff]
    %v115 = vld [vmem:[#allocation5 + $0x40] sm:$0xff]
    %v116 = vld [vmem:[#allocation5 + $0x48] sm:$0xff]
    %v117 = vld [vmem:[#allocation5 + $0x50] sm:$0xff]
    %v118 = vld [vmem:[#allocation5 + $0x58] sm:$0xff]
    %v119 = vld [vmem:[#allocation5 + $0x60] sm:$0xff]
    %v120 = vld [vmem:[#allocation5 + $0x68] sm:$0xff]
    %v121 = vld [vmem:[#allocation5 + $0x70] sm:$0xff]
    %v122 = vld [vmem:[#allocation5 + $0x78] sm:$0xff]
    %v123 = vld [vmem:[%s2] sm:$0x1]
    %v125 = vlaneseq
    %v126 = vshrl.u32 %v125, 7
    %v127 = vsub.s32 0, %v126
    %v128 = vrot.slane %v123, %v127
    %130 = vmatprep.subr.mxu0 0.0
    %v131 = vand.u32 %v107, 4294901760
    %132 = vmatpush1.msra.mxu0 %v131
    %133 = vmatprep.subr.mxu0 0.0
    %v134 = vand.u32 %v108, 4294901760
    %135 = vmatpush1.msra.mxu0 %v134
    %136 = vmatprep.subr.mxu0 0.0
    %v137 = vand.u32 %v109, 4294901760
    %138 = vmatpush1.msra.mxu0 %v137
    %139 = vmatprep.subr.mxu0 0.0
    %v140 = vand.u32 %v110, 4294901760
    %141 = vmatpush1.msra.mxu0 %v140
    %142 = vmatprep.subr.mxu0 0.0
    %v143 = vand.u32 %v111, 4294901760
    %144 = vmatpush1.msra.mxu0 %v143
    %145 = vmatprep.subr.mxu0 0.0
    %v146 = vand.u32 %v112, 4294901760
    %147 = vmatpush1.msra.mxu0 %v146
    %148 = vmatprep.subr.mxu0 0.0
    %v149 = vand.u32 %v113, 4294901760
    %150 = vmatpush1.msra.mxu0 %v149
    %151 = vmatprep.subr.mxu0 0.0
    %v152 = vand.u32 %v114, 4294901760
    %153 = vmatpush1.msra.mxu0 %v152
    %154 = vmatprep.subr.mxu0 0.0
    %v155 = vand.u32 %v115, 4294901760
    %156 = vmatpush1.msra.mxu0 %v155
    %157 = vmatprep.subr.mxu0 0.0
    %v158 = vand.u32 %v116, 4294901760
    %159 = vmatpush1.msra.mxu0 %v158
    %160 = vmatprep.subr.mxu0 0.0
    %v161 = vand.u32 %v117, 4294901760
    %162 = vmatpush1.msra.mxu0 %v161
    %163 = vmatprep.subr.mxu0 0.0
    %v164 = vand.u32 %v118, 4294901760
    %165 = vmatpush1.msra.mxu0 %v164
    %166 = vmatprep.subr.mxu0 0.0
    %v167 = vand.u32 %v119, 4294901760
    %168 = vmatpush1.msra.mxu0 %v167
    %169 = vmatprep.subr.mxu0 0.0
    %v170 = vand.u32 %v120, 4294901760
    %171 = vmatpush1.msra.mxu0 %v170
    %172 = vmatprep.subr.mxu0 0.0
    %v173 = vand.u32 %v121, 4294901760
    %174 = vmatpush1.msra.mxu0 %v173
    %175 = vmatprep.subr.mxu0 0.0
    %v176 = vand.u32 %v122, 4294901760
    %177 = vmatpush1.msra.mxu0 %v176
    %178 = vmatprep.subr.mxu0 0.0
    %179 = vmatpush1.msra.mxu0 0.0
    %180 = vmatprep.subr.mxu0 0.0
    %181 = vmatpush1.msra.mxu0 0.0
    %182 = vmatprep.subr.mxu0 0.0
    %183 = vmatpush1.msra.mxu0 0.0
    %184 = vmatprep.subr.mxu0 0.0
    %185 = vmatpush1.msra.mxu0 0.0
    %186 = vmatprep.subr.mxu0 0.0
    %187 = vmatpush1.msra.mxu0 0.0
    %188 = vmatprep.subr.mxu0 0.0
    %189 = vmatpush1.msra.mxu0 0.0
    %190 = vmatprep.subr.mxu0 0.0
    %191 = vmatpush1.msra.mxu0 0.0
    %192 = vmatprep.subr.mxu0 0.0
    %193 = vmatpush1.msra.mxu0 0.0
    %194 = vmatprep.subr.mxu0 0.0
    %195 = vmatpush1.msra.mxu0 0.0
    %196 = vmatprep.subr.mxu0 0.0
    %197 = vmatpush1.msra.mxu0 0.0
    %198 = vmatprep.subr.mxu0 0.0
    %199 = vmatpush1.msra.mxu0 0.0
    %200 = vmatprep.subr.mxu0 0.0
    %201 = vmatpush1.msra.mxu0 0.0
    %202 = vmatprep.subr.mxu0 0.0
    %203 = vmatpush1.msra.mxu0 0.0
    %204 = vmatprep.subr.mxu0 0.0
    %205 = vmatpush1.msra.mxu0 0.0
    %206 = vmatprep.subr.mxu0 0.0
    %207 = vmatpush1.msra.mxu0 0.0
    %208 = vmatprep.subr.mxu0 0.0
    %209 = vmatpush1.msra.mxu0 0.0
    %210 = vmatprep.mubr.f32.mxu0 0.0
    %v211 = vand.u32 %v43, 4294901760
    %v212 = vsub.f32 %v43, %v211
    %v213 = vand.u32 %v212, 4294901760
    %v214 = vsub.f32 %v212, %v213
    %v215 = vand.u32 %v214, 4294901760
    %216 = vmatmul.mubr.f32.gmra.mrb[0].mxu0 %v215
    %v217 = vpop.f32.mrb[0].mxu0
    %v218 = vadd.f32 %v128, %v217
    %v219 = vpop.f32.mrb[0].mxu0
    %220 = vmatprep.mubr.f32.mxu0 0.0
    %v221 = vand.u32 %v44, 4294901760
    %v222 = vsub.f32 %v44, %v221
    %v223 = vand.u32 %v222, 4294901760
    %v224 = vsub.f32 %v222, %v223
    %v225 = vand.u32 %v224, 4294901760
    %226 = vmatmul.mubr.f32.gmra.mrb[0].mxu0 %v225
    %v227 = vpop.f32.mrb[0].mxu0
    %v228 = vadd.f32 %v128, %v227
    %v229 = vpop.f32.mrb[0].mxu0
    %230 = vmatprep.mubr.f32.mxu0 0.0
    %v231 = vand.u32 %v45, 4294901760
    %v232 = vsub.f32 %v45, %v231
    %v233 = vand.u32 %v232, 4294901760
    %v234 = vsub.f32 %v232, %v233
    %v235 = vand.u32 %v234, 4294901760
    %236 = vmatmul.mubr.f32.gmra.mrb[0].mxu0 %v235
    %v237 = vpop.f32.mrb[0].mxu0
    %v238 = vadd.f32 %v128, %v237
    %v239 = vpop.f32.mrb[0].mxu0
    %240 = vmatprep.mubr.f32.mxu0 0.0
    %v241 = vand.u32 %v46, 4294901760
    %v242 = vsub.f32 %v46, %v241
    %v243 = vand.u32 %v242, 4294901760
    %v244 = vsub.f32 %v242, %v243
    %v245 = vand.u32 %v244, 4294901760
    %246 = vmatmul.mubr.f32.gmra.mrb[0].mxu0 %v245
    %v247 = vpop.f32.mrb[0].mxu0
    %v248 = vadd.f32 %v128, %v247
    %v249 = vpop.f32.mrb[0].mxu0
    %250 = vmatprep.mubr.f32.mxu0 0.0
    %v251 = vand.u32 %v47, 4294901760
    %v252 = vsub.f32 %v47, %v251
    %v253 = vand.u32 %v252, 4294901760
    %v254 = vsub.f32 %v252, %v253
    %v255 = vand.u32 %v254, 4294901760
    %256 = vmatmul.mubr.f32.gmra.mrb[0].mxu0 %v255
    %v257 = vpop.f32.mrb[0].mxu0
    %v258 = vadd.f32 %v128, %v257
    %v259 = vpop.f32.mrb[0].mxu0
    %260 = vmatprep.mubr.f32.mxu0 0.0
    %v261 = vand.u32 %v48, 4294901760
    %v262 = vsub.f32 %v48, %v261
    %v263 = vand.u32 %v262, 4294901760
    %v264 = vsub.f32 %v262, %v263
    %v265 = vand.u32 %v264, 4294901760
    %266 = vmatmul.mubr.f32.gmra.mrb[0].mxu0 %v265
    %v267 = vpop.f32.mrb[0].mxu0
    %v268 = vadd.f32 %v128, %v267
    %v269 = vpop.f32.mrb[0].mxu0
    %270 = vmatprep.mubr.f32.mxu0 0.0
    %v271 = vand.u32 %v49, 4294901760
    %v272 = vsub.f32 %v49, %v271
    %v273 = vand.u32 %v272, 4294901760
    %v274 = vsub.f32 %v272, %v273
    %v275 = vand.u32 %v274, 4294901760
    %276 = vmatmul.mubr.f32.gmra.mrb[0].mxu0 %v275
    %v277 = vpop.f32.mrb[0].mxu0
    %v278 = vadd.f32 %v128, %v277
    %v279 = vpop.f32.mrb[0].mxu0
    %280 = vmatprep.mubr.f32.mxu0 0.0
    %v281 = vand.u32 %v50, 4294901760
    %v282 = vsub.f32 %v50, %v281
    %v283 = vand.u32 %v282, 4294901760
    %v284 = vsub.f32 %v282, %v283
    %v285 = vand.u32 %v284, 4294901760
    %286 = vmatmul.mubr.f32.gmra.mrb[0].mxu0 %v285
    %v287 = vpop.f32.mrb[0].mxu0
    %v288 = vadd.f32 %v128, %v287
    %v289 = vpop.f32.mrb[0].mxu0
    %290 = vmatprep.mubr.f32.mxu0 0.0
    %v291 = vand.u32 %v51, 4294901760
    %v292 = vsub.f32 %v51, %v291
    %v293 = vand.u32 %v292, 4294901760
    %v294 = vsub.f32 %v292, %v293
    %v295 = vand.u32 %v294, 4294901760
    %296 = vmatmul.mubr.f32.gmra.mrb[0].mxu0 %v295
    %v297 = vpop.f32.mrb[0].mxu0
    %v298 = vadd.f32 %v128, %v297
    %v299 = vpop.f32.mrb[0].mxu0
    %300 = vmatprep.mubr.f32.mxu0 0.0
    %v301 = vand.u32 %v52, 4294901760
    %v302 = vsub.f32 %v52, %v301
    %v303 = vand.u32 %v302, 4294901760
    %v304 = vsub.f32 %v302, %v303
    %v305 = vand.u32 %v304, 4294901760
    %306 = vmatmul.mubr.f32.gmra.mrb[0].mxu0 %v305
    %v307 = vpop.f32.mrb[0].mxu0
    %v308 = vadd.f32 %v128, %v307
    %v309 = vpop.f32.mrb[0].mxu0
    %310 = vmatprep.mubr.f32.mxu0 0.0
    %v311 = vand.u32 %v53, 4294901760
    %v312 = vsub.f32 %v53, %v311
    %v313 = vand.u32 %v312, 4294901760
    %v314 = vsub.f32 %v312, %v313
    %v315 = vand.u32 %v314, 4294901760
    %316 = vmatmul.mubr.f32.gmra.mrb[0].mxu0 %v315
    %v317 = vpop.f32.mrb[0].mxu0
    %v318 = vadd.f32 %v128, %v317
    %v319 = vpop.f32.mrb[0].mxu0
    %320 = vmatprep.mubr.f32.mxu0 0.0
    %v321 = vand.u32 %v54, 4294901760
    %v322 = vsub.f32 %v54, %v321
    %v323 = vand.u32 %v322, 4294901760
    %v324 = vsub.f32 %v322, %v323
    %v325 = vand.u32 %v324, 4294901760
    %326 = vmatmul.mubr.f32.gmra.mrb[0].mxu0 %v325
    %v327 = vpop.f32.mrb[0].mxu0
    %v328 = vadd.f32 %v128, %v327
    %v329 = vpop.f32.mrb[0].mxu0
    %330 = vmatprep.mubr.f32.mxu0 0.0
    %v331 = vand.u32 %v55, 4294901760
    %v332 = vsub.f32 %v55, %v331
    %v333 = vand.u32 %v332, 4294901760
    %v334 = vsub.f32 %v332, %v333
    %v335 = vand.u32 %v334, 4294901760
    %336 = vmatmul.mubr.f32.gmra.mrb[0].mxu0 %v335
    %v337 = vpop.f32.mrb[0].mxu0
    %v338 = vadd.f32 %v128, %v337
    %v339 = vpop.f32.mrb[0].mxu0
    %340 = vmatprep.mubr.f32.mxu0 0.0
    %v341 = vand.u32 %v56, 4294901760
    %v342 = vsub.f32 %v56, %v341
    %v343 = vand.u32 %v342, 4294901760
    %v344 = vsub.f32 %v342, %v343
    %v345 = vand.u32 %v344, 4294901760
    %346 = vmatmul.mubr.f32.gmra.mrb[0].mxu0 %v345
    %v347 = vpop.f32.mrb[0].mxu0
    %v348 = vadd.f32 %v128, %v347
    %v349 = vpop.f32.mrb[0].mxu0
    %350 = vmatprep.mubr.f32.mxu0 0.0
    %v351 = vand.u32 %v57, 4294901760
    %v352 = vsub.f32 %v57, %v351
    %v353 = vand.u32 %v352, 4294901760
    %v354 = vsub.f32 %v352, %v353
    %v355 = vand.u32 %v354, 4294901760
    %356 = vmatmul.mubr.f32.gmra.mrb[0].mxu0 %v355
    %v357 = vpop.f32.mrb[0].mxu0
    %v358 = vadd.f32 %v128, %v357
    %v359 = vpop.f32.mrb[0].mxu0
    %360 = vmatprep.mubr.f32.mxu0 0.0
    %v361 = vand.u32 %v58, 4294901760
    %v362 = vsub.f32 %v58, %v361
    %v363 = vand.u32 %v362, 4294901760
    %v364 = vsub.f32 %v362, %v363
    %v365 = vand.u32 %v364, 4294901760
    %366 = vmatmul.mubr.f32.gmra.mrb[0].mxu0 %v365
    %v367 = vpop.f32.mrb[0].mxu0
    %v368 = vadd.f32 %v128, %v367
    %v369 = vpop.f32.mrb[0].mxu0
    %370 = vmatprep.mubr.f32.mxu0 0.0
    %v371 = vand.u32 %v59, 4294901760
    %v372 = vsub.f32 %v59, %v371
    %v373 = vand.u32 %v372, 4294901760
    %v374 = vsub.f32 %v372, %v373
    %v375 = vand.u32 %v374, 4294901760
    %376 = vmatmul.mubr.f32.gmra.mrb[0].mxu0 %v375
    %v377 = vpop.f32.mrb[0].mxu0
    %v378 = vadd.f32 %v128, %v377
    %v379 = vpop.f32.mrb[0].mxu0
    %380 = vmatprep.mubr.f32.mxu0 0.0
    %v381 = vand.u32 %v60, 4294901760
    %v382 = vsub.f32 %v60, %v381
    %v383 = vand.u32 %v382, 4294901760
    %v384 = vsub.f32 %v382, %v383
    %v385 = vand.u32 %v384, 4294901760
    %386 = vmatmul.mubr.f32.gmra.mrb[0].mxu0 %v385
    %v387 = vpop.f32.mrb[0].mxu0
    %v388 = vadd.f32 %v128, %v387
    %v389 = vpop.f32.mrb[0].mxu0
    %390 = vmatprep.mubr.f32.mxu0 0.0
    %v391 = vand.u32 %v61, 4294901760
    %v392 = vsub.f32 %v61, %v391
    %v393 = vand.u32 %v392, 4294901760
    %v394 = vsub.f32 %v392, %v393
    %v395 = vand.u32 %v394, 4294901760
    %396 = vmatmul.mubr.f32.gmra.mrb[0].mxu0 %v395
    %v397 = vpop.f32.mrb[0].mxu0
    %v398 = vadd.f32 %v128, %v397
    %v399 = vpop.f32.mrb[0].mxu0
    %400 = vmatprep.mubr.f32.mxu0 0.0
    %v401 = vand.u32 %v62, 4294901760
    %v402 = vsub.f32 %v62, %v401
    %v403 = vand.u32 %v402, 4294901760
    %v404 = vsub.f32 %v402, %v403
    %v405 = vand.u32 %v404, 4294901760
    %406 = vmatmul.mubr.f32.gmra.mrb[0].mxu0 %v405
    %v407 = vpop.f32.mrb[0].mxu0
    %v408 = vadd.f32 %v128, %v407
    %v409 = vpop.f32.mrb[0].mxu0
    %410 = vmatprep.mubr.f32.mxu0 0.0
    %v411 = vand.u32 %v63, 4294901760
    %v412 = vsub.f32 %v63, %v411
    %v413 = vand.u32 %v412, 4294901760
    %v414 = vsub.f32 %v412, %v413
    %v415 = vand.u32 %v414, 4294901760
    %416 = vmatmul.mubr.f32.gmra.mrb[0].mxu0 %v415
    %v417 = vpop.f32.mrb[0].mxu0
    %v418 = vadd.f32 %v128, %v417
    %v419 = vpop.f32.mrb[0].mxu0
    %420 = vmatprep.mubr.f32.mxu0 0.0
    %v421 = vand.u32 %v64, 4294901760
    %v422 = vsub.f32 %v64, %v421
    %v423 = vand.u32 %v422, 4294901760
    %v424 = vsub.f32 %v422, %v423
    %v425 = vand.u32 %v424, 4294901760
    %426 = vmatmul.mubr.f32.gmra.mrb[0].mxu0 %v425
    %v427 = vpop.f32.mrb[0].mxu0
    %v428 = vadd.f32 %v128, %v427
    %v429 = vpop.f32.mrb[0].mxu0
    %430 = vmatprep.mubr.f32.mxu0 0.0
    %v431 = vand.u32 %v65, 4294901760
    %v432 = vsub.f32 %v65, %v431
    %v433 = vand.u32 %v432, 4294901760
    %v434 = vsub.f32 %v432, %v433
    %v435 = vand.u32 %v434, 4294901760
    %436 = vmatmul.mubr.f32.gmra.mrb[0].mxu0 %v435
    %v437 = vpop.f32.mrb[0].mxu0
    %v438 = vadd.f32 %v128, %v437
    %v439 = vpop.f32.mrb[0].mxu0
    %440 = vmatprep.mubr.f32.mxu0 0.0
    %v441 = vand.u32 %v66, 4294901760
    %v442 = vsub.f32 %v66, %v441
    %v443 = vand.u32 %v442, 4294901760
    %v444 = vsub.f32 %v442, %v443
    %v445 = vand.u32 %v444, 4294901760
    %446 = vmatmul.mubr.f32.gmra.mrb[0].mxu0 %v445
    %v447 = vpop.f32.mrb[0].mxu0
    %v448 = vadd.f32 %v128, %v447
    %v449 = vpop.f32.mrb[0].mxu0
    %450 = vmatprep.mubr.f32.mxu0 0.0
    %v451 = vand.u32 %v67, 4294901760
    %v452 = vsub.f32 %v67, %v451
    %v453 = vand.u32 %v452, 4294901760
    %v454 = vsub.f32 %v452, %v453
    %v455 = vand.u32 %v454, 4294901760
    %456 = vmatmul.mubr.f32.gmra.mrb[0].mxu0 %v455
    %v457 = vpop.f32.mrb[0].mxu0
    %v458 = vadd.f32 %v128, %v457
    %v459 = vpop.f32.mrb[0].mxu0
    %460 = vmatprep.mubr.f32.mxu0 0.0
    %v461 = vand.u32 %v68, 4294901760
    %v462 = vsub.f32 %v68, %v461
    %v463 = vand.u32 %v462, 4294901760
    %v464 = vsub.f32 %v462, %v463
    %v465 = vand.u32 %v464, 4294901760
    %466 = vmatmul.mubr.f32.gmra.mrb[0].mxu0 %v465
    %v467 = vpop.f32.mrb[0].mxu0
    %v468 = vadd.f32 %v128, %v467
    %v469 = vpop.f32.mrb[0].mxu0
    %470 = vmatprep.mubr.f32.mxu0 0.0
    %v471 = vand.u32 %v69, 4294901760
    %v472 = vsub.f32 %v69, %v471
    %v473 = vand.u32 %v472, 4294901760
    %v474 = vsub.f32 %v472, %v473
    %v475 = vand.u32 %v474, 4294901760
    %476 = vmatmul.mubr.f32.gmra.mrb[0].mxu0 %v475
    %v477 = vpop.f32.mrb[0].mxu0
    %v478 = vadd.f32 %v128, %v477
    %v479 = vpop.f32.mrb[0].mxu0
    %480 = vmatprep.mubr.f32.mxu0 0.0
    %v481 = vand.u32 %v70, 4294901760
    %v482 = vsub.f32 %v70, %v481
    %v483 = vand.u32 %v482, 4294901760
    %v484 = vsub.f32 %v482, %v483
    %v485 = vand.u32 %v484, 4294901760
    %486 = vmatmul.mubr.f32.gmra.mrb[0].mxu0 %v485
    %v487 = vpop.f32.mrb[0].mxu0
    %v488 = vadd.f32 %v128, %v487
    %v489 = vpop.f32.mrb[0].mxu0
    %490 = vmatprep.mubr.f32.mxu0 0.0
    %v491 = vand.u32 %v71, 4294901760
    %v492 = vsub.f32 %v71, %v491
    %v493 = vand.u32 %v492, 4294901760
    %v494 = vsub.f32 %v492, %v493
    %v495 = vand.u32 %v494, 4294901760
    %496 = vmatmul.mubr.f32.gmra.mrb[0].mxu0 %v495
    %v497 = vpop.f32.mrb[0].mxu0
    %v498 = vadd.f32 %v128, %v497
    %v499 = vpop.f32.mrb[0].mxu0
    %500 = vmatprep.mubr.f32.mxu0 0.0
    %v501 = vand.u32 %v72, 4294901760
    %v502 = vsub.f32 %v72, %v501
    %v503 = vand.u32 %v502, 4294901760
    %v504 = vsub.f32 %v502, %v503
    %v505 = vand.u32 %v504, 4294901760
    %506 = vmatmul.mubr.f32.gmra.mrb[0].mxu0 %v505
    %v507 = vpop.f32.mrb[0].mxu0
    %v508 = vadd.f32 %v128, %v507
    %v509 = vpop.f32.mrb[0].mxu0
    %510 = vmatprep.mubr.f32.mxu0 0.0
    %v511 = vand.u32 %v73, 4294901760
    %v512 = vsub.f32 %v73, %v511
    %v513 = vand.u32 %v512, 4294901760
    %v514 = vsub.f32 %v512, %v513
    %v515 = vand.u32 %v514, 4294901760
    %516 = vmatmul.mubr.f32.gmra.mrb[0].mxu0 %v515
    %v517 = vpop.f32.mrb[0].mxu0
    %v518 = vadd.f32 %v128, %v517
    %v519 = vpop.f32.mrb[0].mxu0
    %520 = vmatprep.mubr.f32.mxu0 0.0
    %v521 = vand.u32 %v74, 4294901760
    %v522 = vsub.f32 %v74, %v521
    %v523 = vand.u32 %v522, 4294901760
    %v524 = vsub.f32 %v522, %v523
    %v525 = vand.u32 %v524, 4294901760
    %526 = vmatmul.mubr.f32.gmra.mrb[0].mxu0 %v525
    %v527 = vpop.f32.mrb[0].mxu0
    %v528 = vadd.f32 %v128, %v527
    %v529 = vpop.f32.mrb[0].mxu0
    %530 = vmatprep.mubr.f32.mxu0 0.0
    %v531 = vand.u32 %v75, 4294901760
    %v532 = vsub.f32 %v75, %v531
    %v533 = vand.u32 %v532, 4294901760
    %v534 = vsub.f32 %v532, %v533
    %v535 = vand.u32 %v534, 4294901760
    %536 = vmatmul.mubr.f32.gmra.mrb[0].mxu0 %v535
    %v537 = vpop.f32.mrb[0].mxu0
    %v538 = vadd.f32 %v128, %v537
    %v539 = vpop.f32.mrb[0].mxu0
    %540 = vmatprep.mubr.f32.mxu0 0.0
    %v541 = vand.u32 %v76, 4294901760
    %v542 = vsub.f32 %v76, %v541
    %v543 = vand.u32 %v542, 4294901760
    %v544 = vsub.f32 %v542, %v543
    %v545 = vand.u32 %v544, 4294901760
    %546 = vmatmul.mubr.f32.gmra.mrb[0].mxu0 %v545
    %v547 = vpop.f32.mrb[0].mxu0
    %v548 = vadd.f32 %v128, %v547
    %v549 = vpop.f32.mrb[0].mxu0
    %550 = vmatprep.mubr.f32.mxu0 0.0
    %v551 = vand.u32 %v77, 4294901760
    %v552 = vsub.f32 %v77, %v551
    %v553 = vand.u32 %v552, 4294901760
    %v554 = vsub.f32 %v552, %v553
    %v555 = vand.u32 %v554, 4294901760
    %556 = vmatmul.mubr.f32.gmra.mrb[0].mxu0 %v555
    %v557 = vpop.f32.mrb[0].mxu0
    %v558 = vadd.f32 %v128, %v557
    %v559 = vpop.f32.mrb[0].mxu0
    %560 = vmatprep.mubr.f32.mxu0 0.0
    %v561 = vand.u32 %v78, 4294901760
    %v562 = vsub.f32 %v78, %v561
    %v563 = vand.u32 %v562, 4294901760
    %v564 = vsub.f32 %v562, %v563
    %v565 = vand.u32 %v564, 4294901760
    %566 = vmatmul.mubr.f32.gmra.mrb[0].mxu0 %v565
    %v567 = vpop.f32.mrb[0].mxu0
    %v568 = vadd.f32 %v128, %v567
    %v569 = vpop.f32.mrb[0].mxu0
    %570 = vmatprep.mubr.f32.mxu0 0.0
    %v571 = vand.u32 %v79, 4294901760
    %v572 = vsub.f32 %v79, %v571
    %v573 = vand.u32 %v572, 4294901760
    %v574 = vsub.f32 %v572, %v573
    %v575 = vand.u32 %v574, 4294901760
    %576 = vmatmul.mubr.f32.gmra.mrb[0].mxu0 %v575
    %v577 = vpop.f32.mrb[0].mxu0
    %v578 = vadd.f32 %v128, %v577
    %v579 = vpop.f32.mrb[0].mxu0
    %580 = vmatprep.mubr.f32.mxu0 0.0
    %v581 = vand.u32 %v80, 4294901760
    %v582 = vsub.f32 %v80, %v581
    %v583 = vand.u32 %v582, 4294901760
    %v584 = vsub.f32 %v582, %v583
    %v585 = vand.u32 %v584, 4294901760
    %586 = vmatmul.mubr.f32.gmra.mrb[0].mxu0 %v585
    %v587 = vpop.f32.mrb[0].mxu0
    %v588 = vadd.f32 %v128, %v587
    %v589 = vpop.f32.mrb[0].mxu0
    %590 = vmatprep.mubr.f32.mxu0 0.0
    %v591 = vand.u32 %v81, 4294901760
    %v592 = vsub.f32 %v81, %v591
    %v593 = vand.u32 %v592, 4294901760
    %v594 = vsub.f32 %v592, %v593
    %v595 = vand.u32 %v594, 4294901760
    %596 = vmatmul.mubr.f32.gmra.mrb[0].mxu0 %v595
    %v597 = vpop.f32.mrb[0].mxu0
    %v598 = vadd.f32 %v128, %v597
    %v599 = vpop.f32.mrb[0].mxu0
    %600 = vmatprep.mubr.f32.mxu0 0.0
    %v601 = vand.u32 %v82, 4294901760
    %v602 = vsub.f32 %v82, %v601
    %v603 = vand.u32 %v602, 4294901760
    %v604 = vsub.f32 %v602, %v603
    %v605 = vand.u32 %v604, 4294901760
    %606 = vmatmul.mubr.f32.gmra.mrb[0].mxu0 %v605
    %v607 = vpop.f32.mrb[0].mxu0
    %v608 = vadd.f32 %v128, %v607
    %v609 = vpop.f32.mrb[0].mxu0
    %610 = vmatprep.mubr.f32.mxu0 0.0
    %v611 = vand.u32 %v83, 4294901760
    %v612 = vsub.f32 %v83, %v611
    %v613 = vand.u32 %v612, 4294901760
    %v614 = vsub.f32 %v612, %v613
    %v615 = vand.u32 %v614, 4294901760
    %616 = vmatmul.mubr.f32.gmra.mrb[0].mxu0 %v615
    %v617 = vpop.f32.mrb[0].mxu0
    %v618 = vadd.f32 %v128, %v617
    %v619 = vpop.f32.mrb[0].mxu0
    %620 = vmatprep.mubr.f32.mxu0 0.0
    %v621 = vand.u32 %v84, 4294901760
    %v622 = vsub.f32 %v84, %v621
    %v623 = vand.u32 %v622, 4294901760
    %v624 = vsub.f32 %v622, %v623
    %v625 = vand.u32 %v624, 4294901760
    %626 = vmatmul.mubr.f32.gmra.mrb[0].mxu0 %v625
    %v627 = vpop.f32.mrb[0].mxu0
    %v628 = vadd.f32 %v128, %v627
    %v629 = vpop.f32.mrb[0].mxu0
    %630 = vmatprep.mubr.f32.mxu0 0.0
    %v631 = vand.u32 %v85, 4294901760
    %v632 = vsub.f32 %v85, %v631
    %v633 = vand.u32 %v632, 4294901760
    %v634 = vsub.f32 %v632, %v633
    %v635 = vand.u32 %v634, 4294901760
    %636 = vmatmul.mubr.f32.gmra.mrb[0].mxu0 %v635
    %v637 = vpop.f32.mrb[0].mxu0
    %v638 = vadd.f32 %v128, %v637
    %v639 = vpop.f32.mrb[0].mxu0
    %640 = vmatprep.mubr.f32.mxu0 0.0
    %v641 = vand.u32 %v86, 4294901760
    %v642 = vsub.f32 %v86, %v641
    %v643 = vand.u32 %v642, 4294901760
    %v644 = vsub.f32 %v642, %v643
    %v645 = vand.u32 %v644, 4294901760
    %646 = vmatmul.mubr.f32.gmra.mrb[0].mxu0 %v645
    %v647 = vpop.f32.mrb[0].mxu0
    %v648 = vadd.f32 %v128, %v647
    %v649 = vpop.f32.mrb[0].mxu0
    %650 = vmatprep.mubr.f32.mxu0 0.0
    %v651 = vand.u32 %v87, 4294901760
    %v652 = vsub.f32 %v87, %v651
    %v653 = vand.u32 %v652, 4294901760
    %v654 = vsub.f32 %v652, %v653
    %v655 = vand.u32 %v654, 4294901760
    %656 = vmatmul.mubr.f32.gmra.mrb[0].mxu0 %v655
    %v657 = vpop.f32.mrb[0].mxu0
    %v658 = vadd.f32 %v128, %v657
    %v659 = vpop.f32.mrb[0].mxu0
    %660 = vmatprep.mubr.f32.mxu0 0.0
    %v661 = vand.u32 %v88, 4294901760
    %v662 = vsub.f32 %v88, %v661
    %v663 = vand.u32 %v662, 4294901760
    %v664 = vsub.f32 %v662, %v663
    %v665 = vand.u32 %v664, 4294901760
    %666 = vmatmul.mubr.f32.gmra.mrb[0].mxu0 %v665
    %v667 = vpop.f32.mrb[0].mxu0
    %v668 = vadd.f32 %v128, %v667
    %v669 = vpop.f32.mrb[0].mxu0
    %670 = vmatprep.mubr.f32.mxu0 0.0
    %v671 = vand.u32 %v89, 4294901760
    %v672 = vsub.f32 %v89, %v671
    %v673 = vand.u32 %v672, 4294901760
    %v674 = vsub.f32 %v672, %v673
    %v675 = vand.u32 %v674, 4294901760
    %676 = vmatmul.mubr.f32.gmra.mrb[0].mxu0 %v675
    %v677 = vpop.f32.mrb[0].mxu0
    %v678 = vadd.f32 %v128, %v677
    %v679 = vpop.f32.mrb[0].mxu0
    %680 = vmatprep.mubr.f32.mxu0 0.0
    %v681 = vand.u32 %v90, 4294901760
    %v682 = vsub.f32 %v90, %v681
    %v683 = vand.u32 %v682, 4294901760
    %v684 = vsub.f32 %v682, %v683
    %v685 = vand.u32 %v684, 4294901760
    %686 = vmatmul.mubr.f32.gmra.mrb[0].mxu0 %v685
    %v687 = vpop.f32.mrb[0].mxu0
    %v688 = vadd.f32 %v128, %v687
    %v689 = vpop.f32.mrb[0].mxu0
    %690 = vmatprep.mubr.f32.mxu0 0.0
    %v691 = vand.u32 %v91, 4294901760
    %v692 = vsub.f32 %v91, %v691
    %v693 = vand.u32 %v692, 4294901760
    %v694 = vsub.f32 %v692, %v693
    %v695 = vand.u32 %v694, 4294901760
    %696 = vmatmul.mubr.f32.gmra.mrb[0].mxu0 %v695
    %v697 = vpop.f32.mrb[0].mxu0
    %v698 = vadd.f32 %v128, %v697
    %v699 = vpop.f32.mrb[0].mxu0
    %700 = vmatprep.mubr.f32.mxu0 0.0
    %v701 = vand.u32 %v92, 4294901760
    %v702 = vsub.f32 %v92, %v701
    %v703 = vand.u32 %v702, 4294901760
    %v704 = vsub.f32 %v702, %v703
    %v705 = vand.u32 %v704, 4294901760
    %706 = vmatmul.mubr.f32.gmra.mrb[0].mxu0 %v705
    %v707 = vpop.f32.mrb[0].mxu0
    %v708 = vadd.f32 %v128, %v707
    %v709 = vpop.f32.mrb[0].mxu0
    %710 = vmatprep.mubr.f32.mxu0 0.0
    %v711 = vand.u32 %v93, 4294901760
    %v712 = vsub.f32 %v93, %v711
    %v713 = vand.u32 %v712, 4294901760
    %v714 = vsub.f32 %v712, %v713
    %v715 = vand.u32 %v714, 4294901760
    %716 = vmatmul.mubr.f32.gmra.mrb[0].mxu0 %v715
    %v717 = vpop.f32.mrb[0].mxu0
    %v718 = vadd.f32 %v128, %v717
    %v719 = vpop.f32.mrb[0].mxu0
    %720 = vmatprep.mubr.f32.mxu0 0.0
    %v721 = vand.u32 %v94, 4294901760
    %v722 = vsub.f32 %v94, %v721
    %v723 = vand.u32 %v722, 4294901760
    %v724 = vsub.f32 %v722, %v723
    %v725 = vand.u32 %v724, 4294901760
    %726 = vmatmul.mubr.f32.gmra.mrb[0].mxu0 %v725
    %v727 = vpop.f32.mrb[0].mxu0
    %v728 = vadd.f32 %v128, %v727
    %v729 = vpop.f32.mrb[0].mxu0
    %730 = vmatprep.mubr.f32.mxu0 0.0
    %v731 = vand.u32 %v95, 4294901760
    %v732 = vsub.f32 %v95, %v731
    %v733 = vand.u32 %v732, 4294901760
    %v734 = vsub.f32 %v732, %v733
    %v735 = vand.u32 %v734, 4294901760
    %736 = vmatmul.mubr.f32.gmra.mrb[0].mxu0 %v735
    %v737 = vpop.f32.mrb[0].mxu0
    %v738 = vadd.f32 %v128, %v737
    %v739 = vpop.f32.mrb[0].mxu0
    %740 = vmatprep.mubr.f32.mxu0 0.0
    %v741 = vand.u32 %v96, 4294901760
    %v742 = vsub.f32 %v96, %v741
    %v743 = vand.u32 %v742, 4294901760
    %v744 = vsub.f32 %v742, %v743
    %v745 = vand.u32 %v744, 4294901760
    %746 = vmatmul.mubr.f32.gmra.mrb[0].mxu0 %v745
    %v747 = vpop.f32.mrb[0].mxu0
    %v748 = vadd.f32 %v128, %v747
    %v749 = vpop.f32.mrb[0].mxu0
    %750 = vmatprep.mubr.f32.mxu0 0.0
    %v751 = vand.u32 %v97, 4294901760
    %v752 = vsub.f32 %v97, %v751
    %v753 = vand.u32 %v752, 4294901760
    %v754 = vsub.f32 %v752, %v753
    %v755 = vand.u32 %v754, 4294901760
    %756 = vmatmul.mubr.f32.gmra.mrb[0].mxu0 %v755
    %v757 = vpop.f32.mrb[0].mxu0
    %v758 = vadd.f32 %v128, %v757
    %v759 = vpop.f32.mrb[0].mxu0
    %760 = vmatprep.mubr.f32.mxu0 0.0
    %v761 = vand.u32 %v98, 4294901760
    %v762 = vsub.f32 %v98, %v761
    %v763 = vand.u32 %v762, 4294901760
    %v764 = vsub.f32 %v762, %v763
    %v765 = vand.u32 %v764, 4294901760
    %766 = vmatmul.mubr.f32.gmra.mrb[0].mxu0 %v765
    %v767 = vpop.f32.mrb[0].mxu0
    %v768 = vadd.f32 %v128, %v767
    %v769 = vpop.f32.mrb[0].mxu0
    %770 = vmatprep.mubr.f32.mxu0 0.0
    %v771 = vand.u32 %v99, 4294901760
    %v772 = vsub.f32 %v99, %v771
    %v773 = vand.u32 %v772, 4294901760
    %v774 = vsub.f32 %v772, %v773
    %v775 = vand.u32 %v774, 4294901760
    %776 = vmatmul.mubr.f32.gmra.mrb[0].mxu0 %v775
    %v777 = vpop.f32.mrb[0].mxu0
    %v778 = vadd.f32 %v128, %v777
    %v779 = vpop.f32.mrb[0].mxu0
    %780 = vmatprep.mubr.f32.mxu0 0.0
    %v781 = vand.u32 %v100, 4294901760
    %v782 = vsub.f32 %v100, %v781
    %v783 = vand.u32 %v782, 4294901760
    %v784 = vsub.f32 %v782, %v783
    %v785 = vand.u32 %v784, 4294901760
    %786 = vmatmul.mubr.f32.gmra.mrb[0].mxu0 %v785
    %v787 = vpop.f32.mrb[0].mxu0
    %v788 = vadd.f32 %v128, %v787
    %v789 = vpop.f32.mrb[0].mxu0
    %790 = vmatprep.mubr.f32.mxu0 0.0
    %v791 = vand.u32 %v101, 4294901760
    %v792 = vsub.f32 %v101, %v791
    %v793 = vand.u32 %v792, 4294901760
    %v794 = vsub.f32 %v792, %v793
    %v795 = vand.u32 %v794, 4294901760
    %796 = vmatmul.mubr.f32.gmra.mrb[0].mxu0 %v795
    %v797 = vpop.f32.mrb[0].mxu0
    %v798 = vadd.f32 %v128, %v797
    %v799 = vpop.f32.mrb[0].mxu0
    %800 = vmatprep.mubr.f32.mxu0 0.0
    %v801 = vand.u32 %v102, 4294901760
    %v802 = vsub.f32 %v102, %v801
    %v803 = vand.u32 %v802, 4294901760
    %v804 = vsub.f32 %v802, %v803
    %v805 = vand.u32 %v804, 4294901760
    %806 = vmatmul.mubr.f32.gmra.mrb[0].mxu0 %v805
    %v807 = vpop.f32.mrb[0].mxu0
    %v808 = vadd.f32 %v128, %v807
    %v809 = vpop.f32.mrb[0].mxu0
    %810 = vmatprep.mubr.f32.mxu0 0.0
    %v811 = vand.u32 %v103, 4294901760
    %v812 = vsub.f32 %v103, %v811
    %v813 = vand.u32 %v812, 4294901760
    %v814 = vsub.f32 %v812, %v813
    %v815 = vand.u32 %v814, 4294901760
    %816 = vmatmul.mubr.f32.gmra.mrb[0].mxu0 %v815
    %v817 = vpop.f32.mrb[0].mxu0
    %v818 = vadd.f32 %v128, %v817
    %v819 = vpop.f32.mrb[0].mxu0
    %820 = vmatprep.mubr.f32.mxu0 0.0
    %v821 = vand.u32 %v104, 4294901760
    %v822 = vsub.f32 %v104, %v821
    %v823 = vand.u32 %v822, 4294901760
    %v824 = vsub.f32 %v822, %v823
    %v825 = vand.u32 %v824, 4294901760
    %826 = vmatmul.mubr.f32.gmra.mrb[0].mxu0 %v825
    %v827 = vpop.f32.mrb[0].mxu0
    %v828 = vadd.f32 %v128, %v827
    %v829 = vpop.f32.mrb[0].mxu0
    %830 = vmatprep.mubr.f32.mxu0 0.0
    %v831 = vand.u32 %v105, 4294901760
    %v832 = vsub.f32 %v105, %v831
    %v833 = vand.u32 %v832, 4294901760
    %v834 = vsub.f32 %v832, %v833
    %v835 = vand.u32 %v834, 4294901760
    %836 = vmatmul.mubr.f32.gmra.mrb[0].mxu0 %v835
    %v837 = vpop.f32.mrb[0].mxu0
    %v838 = vadd.f32 %v128, %v837
    %v839 = vpop.f32.mrb[0].mxu0
    %840 = vmatprep.mubr.f32.mxu0 0.0
    %v841 = vand.u32 %v106, 4294901760
    %v842 = vsub.f32 %v106, %v841
    %v843 = vand.u32 %v842, 4294901760
    %v844 = vsub.f32 %v842, %v843
    %v845 = vand.u32 %v844, 4294901760
    %846 = vmatmul.mubr.f32.gmra.mrb[0].mxu0 %v845
    %v847 = vpop.f32.mrb[0].mxu0
    %v848 = vadd.f32 %v128, %v847
    %v849 = vpop.f32.mrb[0].mxu0
    %850 = vdwg.mxu0
    %851 = vmatprep.subr.mxu0 0.0
    %v852 = vand.u32 %v107, 4294901760
    %v853 = vsub.f32 %v107, %v852
    %v854 = vand.u32 %v853, 4294901760
    %v855 = vsub.f32 %v853, %v854
    %v856 = vand.u32 %v855, 4294901760
    %857 = vmatpush1.msra.mxu0 %v856
    %858 = vmatprep.subr.mxu0 0.0
    %v859 = vand.u32 %v108, 4294901760
    %v860 = vsub.f32 %v108, %v859
    %v861 = vand.u32 %v860, 4294901760
    %v862 = vsub.f32 %v860, %v861
    %v863 = vand.u32 %v862, 4294901760
    %864 = vmatpush1.msra.mxu0 %v863
    %865 = vmatprep.subr.mxu0 0.0
    %v866 = vand.u32 %v109, 4294901760
    %v867 = vsub.f32 %v109, %v866
    %v868 = vand.u32 %v867, 4294901760
    %v869 = vsub.f32 %v867, %v868
    %v870 = vand.u32 %v869, 4294901760
    %871 = vmatpush1.msra.mxu0 %v870
    %872 = vmatprep.subr.mxu0 0.0
    %v873 = vand.u32 %v110, 4294901760
    %v874 = vsub.f32 %v110, %v873
    %v875 = vand.u32 %v874, 4294901760
    %v876 = vsub.f32 %v874, %v875
    %v877 = vand.u32 %v876, 4294901760
    %878 = vmatpush1.msra.mxu0 %v877
    %879 = vmatprep.subr.mxu0 0.0
    %v880 = vand.u32 %v111, 4294901760
    %v881 = vsub.f32 %v111, %v880
    %v882 = vand.u32 %v881, 4294901760
    %v883 = vsub.f32 %v881, %v882
    %v884 = vand.u32 %v883, 4294901760
    %885 = vmatpush1.msra.mxu0 %v884
    %886 = vmatprep.subr.mxu0 0.0
    %v887 = vand.u32 %v112, 4294901760
    %v888 = vsub.f32 %v112, %v887
    %v889 = vand.u32 %v888, 4294901760
    %v890 = vsub.f32 %v888, %v889
    %v891 = vand.u32 %v890, 4294901760
    %892 = vmatpush1.msra.mxu0 %v891
    %893 = vmatprep.subr.mxu0 0.0
    %v894 = vand.u32 %v113, 4294901760
    %v895 = vsub.f32 %v113, %v894
    %v896 = vand.u32 %v895, 4294901760
    %v897 = vsub.f32 %v895, %v896
    %v898 = vand.u32 %v897, 4294901760
    %899 = vmatpush1.msra.mxu0 %v898
    %900 = vmatprep.subr.mxu0 0.0
    %v901 = vand.u32 %v114, 4294901760
    %v902 = vsub.f32 %v114, %v901
    %v903 = vand.u32 %v902, 4294901760
    %v904 = vsub.f32 %v902, %v903
    %v905 = vand.u32 %v904, 4294901760
    %906 = vmatpush1.msra.mxu0 %v905
    %907 = vmatprep.subr.mxu0 0.0
    %v908 = vand.u32 %v115, 4294901760
    %v909 = vsub.f32 %v115, %v908
    %v910 = vand.u32 %v909, 4294901760
    %v911 = vsub.f32 %v909, %v910
    %v912 = vand.u32 %v911, 4294901760
    %913 = vmatpush1.msra.mxu0 %v912
    %914 = vmatprep.subr.mxu0 0.0
    %v915 = vand.u32 %v116, 4294901760
    %v916 = vsub.f32 %v116, %v915
    %v917 = vand.u32 %v916, 4294901760
    %v918 = vsub.f32 %v916, %v917
    %v919 = vand.u32 %v918, 4294901760
    %920 = vmatpush1.msra.mxu0 %v919
    %921 = vmatprep.subr.mxu0 0.0
    %v922 = vand.u32 %v117, 4294901760
    %v923 = vsub.f32 %v117, %v922
    %v924 = vand.u32 %v923, 4294901760
    %v925 = vsub.f32 %v923, %v924
    %v926 = vand.u32 %v925, 4294901760
    %927 = vmatpush1.msra.mxu0 %v926
    %928 = vmatprep.subr.mxu0 0.0
    %v929 = vand.u32 %v118, 4294901760
    %v930 = vsub.f32 %v118, %v929
    %v931 = vand.u32 %v930, 4294901760
    %v932 = vsub.f32 %v930, %v931
    %v933 = vand.u32 %v932, 4294901760
    %934 = vmatpush1.msra.mxu0 %v933
    %935 = vmatprep.subr.mxu0 0.0
    %v936 = vand.u32 %v119, 4294901760
    %v937 = vsub.f32 %v119, %v936
    %v938 = vand.u32 %v937, 4294901760
    %v939 = vsub.f32 %v937, %v938
    %v940 = vand.u32 %v939, 4294901760
    %941 = vmatpush1.msra.mxu0 %v940
    %942 = vmatprep.subr.mxu0 0.0
    %v943 = vand.u32 %v120, 4294901760
    %v944 = vsub.f32 %v120, %v943
    %v945 = vand.u32 %v944, 4294901760
    %v946 = vsub.f32 %v944, %v945
    %v947 = vand.u32 %v946, 4294901760
    %948 = vmatpush1.msra.mxu0 %v947
    %949 = vmatprep.subr.mxu0 0.0
    %v950 = vand.u32 %v121, 4294901760
    %v951 = vsub.f32 %v121, %v950
    %v952 = vand.u32 %v951, 4294901760
    %v953 = vsub.f32 %v951, %v952
    %v954 = vand.u32 %v953, 4294901760
    %955 = vmatpush1.msra.mxu0 %v954
    %956 = vmatprep.subr.mxu0 0.0
    %v957 = vand.u32 %v122, 4294901760
    %v958 = vsub.f32 %v122, %v957
    %v959 = vand.u32 %v958, 4294901760
    %v960 = vsub.f32 %v958, %v959
    %v961 = vand.u32 %v960, 4294901760
    %962 = vmatpush1.msra.mxu0 %v961
    %963 = vmatprep.subr.mxu0 0.0
    %964 = vmatpush1.msra.mxu0 0.0
    %965 = vmatprep.subr.mxu0 0.0
    %966 = vmatpush1.msra.mxu0 0.0
    %967 = vmatprep.subr.mxu0 0.0
    %968 = vmatpush1.msra.mxu0 0.0
    %969 = vmatprep.subr.mxu0 0.0
    %970 = vmatpush1.msra.mxu0 0.0
    %971 = vmatprep.subr.mxu0 0.0
    %972 = vmatpush1.msra.mxu0 0.0
    %973 = vmatprep.subr.mxu0 0.0
    %974 = vmatpush1.msra.mxu0 0.0
    %975 = vmatprep.subr.mxu0 0.0
    %976 = vmatpush1.msra.mxu0 0.0
    %977 = vmatprep.subr.mxu0 0.0
    %978 = vmatpush1.msra.mxu0 0.0
    %979 = vmatprep.subr.mxu0 0.0
    %980 = vmatpush1.msra.mxu0 0.0
    %981 = vmatprep.subr.mxu0 0.0
    %982 = vmatpush1.msra.mxu0 0.0
    %983 = vmatprep.subr.mxu0 0.0
    %984 = vmatpush1.msra.mxu0 0.0
    %985 = vmatprep.subr.mxu0 0.0
    %986 = vmatpush1.msra.mxu0 0.0
    %987 = vmatprep.subr.mxu0 0.0
    %988 = vmatpush1.msra.mxu0 0.0
    %989 = vmatprep.subr.mxu0 0.0
    %990 = vmatpush1.msra.mxu0 0.0
    %991 = vmatprep.subr.mxu0 0.0
    %992 = vmatpush1.msra.mxu0 0.0
    %993 = vmatprep.subr.mxu0 0.0
    %994 = vmatpush1.msra.mxu0 0.0
    %995 = vmatprep.mubr.f32.mxu0 0.0
    %v996 = vand.u32 %v43, 4294901760
    %997 = vmatmul.mubr.f32.gmra.mrb[0].mxu0 %v996
    %v998 = vpop.f32.mrb[0].mxu0
    %v999 = vadd.f32 %v218, %v998
    %v1000 = vpop.f32.mrb[0].mxu0
    %1001 = vmatprep.mubr.f32.mxu0 0.0
    %v1002 = vand.u32 %v44, 4294901760
    %1003 = vmatmul.mubr.f32.gmra.mrb[0].mxu0 %v1002
    %v1004 = vpop.f32.mrb[0].mxu0
    %v1005 = vadd.f32 %v228, %v1004
    %v1006 = vpop.f32.mrb[0].mxu0
    %1007 = vmatprep.mubr.f32.mxu0 0.0
    %v1008 = vand.u32 %v45, 4294901760
    %1009 = vmatmul.mubr.f32.gmra.mrb[0].mxu0 %v1008
    %v1010 = vpop.f32.mrb[0].mxu0
    %v1011 = vadd.f32 %v238, %v1010
    %v1012 = vpop.f32.mrb[0].mxu0
    %1013 = vmatprep.mubr.f32.mxu0 0.0
    %v1014 = vand.u32 %v46, 4294901760
    %1015 = vmatmul.mubr.f32.gmra.mrb[0].mxu0 %v1014
    %v1016 = vpop.f32.mrb[0].mxu0
    %v1017 = vadd.f32 %v248, %v1016
    %v1018 = vpop.f32.mrb[0].mxu0
    %1019 = vmatprep.mubr.f32.mxu0 0.0
    %v1020 = vand.u32 %v47, 4294901760
    %1021 = vmatmul.mubr.f32.gmra.mrb[0].mxu0 %v1020
    %v1022 = vpop.f32.mrb[0].mxu0
    %v1023 = vadd.f32 %v258, %v1022
    %v1024 = vpop.f32.mrb[0].mxu0
    %1025 = vmatprep.mubr.f32.mxu0 0.0
    %v1026 = vand.u32 %v48, 4294901760
    %1027 = vmatmul.mubr.f32.gmra.mrb[0].mxu0 %v1026
    %v1028 = vpop.f32.mrb[0].mxu0
    %v1029 = vadd.f32 %v268, %v1028
    %v1030 = vpop.f32.mrb[0].mxu0
    %1031 = vmatprep.mubr.f32.mxu0 0.0
    %v1032 = vand.u32 %v49, 4294901760
    %1033 = vmatmul.mubr.f32.gmra.mrb[0].mxu0 %v1032
    %v1034 = vpop.f32.mrb[0].mxu0
    %v1035 = vadd.f32 %v278, %v1034
    %v1036 = vpop.f32.mrb[0].mxu0
    %1037 = vmatprep.mubr.f32.mxu0 0.0
    %v1038 = vand.u32 %v50, 4294901760
    %1039 = vmatmul.mubr.f32.gmra.mrb[0].mxu0 %v1038
    %v1040 = vpop.f32.mrb[0].mxu0
    %v1041 = vadd.f32 %v288, %v1040
    %v1042 = vpop.f32.mrb[0].mxu0
    %1043 = vmatprep.mubr.f32.mxu0 0.0
    %v1044 = vand.u32 %v51, 4294901760
    %1045 = vmatmul.mubr.f32.gmra.mrb[0].mxu0 %v1044
    %v1046 = vpop.f32.mrb[0].mxu0
    %v1047 = vadd.f32 %v298, %v1046
    %v1048 = vpop.f32.mrb[0].mxu0
    %1049 = vmatprep.mubr.f32.mxu0 0.0
    %v1050 = vand.u32 %v52, 4294901760
    %1051 = vmatmul.mubr.f32.gmra.mrb[0].mxu0 %v1050
    %v1052 = vpop.f32.mrb[0].mxu0
    %v1053 = vadd.f32 %v308, %v1052
    %v1054 = vpop.f32.mrb[0].mxu0
    %1055 = vmatprep.mubr.f32.mxu0 0.0
    %v1056 = vand.u32 %v53, 4294901760
    %1057 = vmatmul.mubr.f32.gmra.mrb[0].mxu0 %v1056
    %v1058 = vpop.f32.mrb[0].mxu0
    %v1059 = vadd.f32 %v318, %v1058
    %v1060 = vpop.f32.mrb[0].mxu0
    %1061 = vmatprep.mubr.f32.mxu0 0.0
    %v1062 = vand.u32 %v54, 4294901760
    %1063 = vmatmul.mubr.f32.gmra.mrb[0].mxu0 %v1062
    %v1064 = vpop.f32.mrb[0].mxu0
    %v1065 = vadd.f32 %v328, %v1064
    %v1066 = vpop.f32.mrb[0].mxu0
    %1067 = vmatprep.mubr.f32.mxu0 0.0
    %v1068 = vand.u32 %v55, 4294901760
    %1069 = vmatmul.mubr.f32.gmra.mrb[0].mxu0 %v1068
    %v1070 = vpop.f32.mrb[0].mxu0
    %v1071 = vadd.f32 %v338, %v1070
    %v1072 = vpop.f32.mrb[0].mxu0
    %1073 = vmatprep.mubr.f32.mxu0 0.0
    %v1074 = vand.u32 %v56, 4294901760
    %1075 = vmatmul.mubr.f32.gmra.mrb[0].mxu0 %v1074
    %v1076 = vpop.f32.mrb[0].mxu0
    %v1077 = vadd.f32 %v348, %v1076
    %v1078 = vpop.f32.mrb[0].mxu0
    %1079 = vmatprep.mubr.f32.mxu0 0.0
    %v1080 = vand.u32 %v57, 4294901760
    %1081 = vmatmul.mubr.f32.gmra.mrb[0].mxu0 %v1080
    %v1082 = vpop.f32.mrb[0].mxu0
    %v1083 = vadd.f32 %v358, %v1082
    %v1084 = vpop.f32.mrb[0].mxu0
    %1085 = vmatprep.mubr.f32.mxu0 0.0
    %v1086 = vand.u32 %v58, 4294901760
    %1087 = vmatmul.mubr.f32.gmra.mrb[0].mxu0 %v1086
    %v1088 = vpop.f32.mrb[0].mxu0
    %v1089 = vadd.f32 %v368, %v1088
    %v1090 = vpop.f32.mrb[0].mxu0
    %1091 = vmatprep.mubr.f32.mxu0 0.0
    %v1092 = vand.u32 %v59, 4294901760
    %1093 = vmatmul.mubr.f32.gmra.mrb[0].mxu0 %v1092
    %v1094 = vpop.f32.mrb[0].mxu0
    %v1095 = vadd.f32 %v378, %v1094
    %v1096 = vpop.f32.mrb[0].mxu0
    %1097 = vmatprep.mubr.f32.mxu0 0.0
    %v1098 = vand.u32 %v60, 4294901760
    %1099 = vmatmul.mubr.f32.gmra.mrb[0].mxu0 %v1098
    %v1100 = vpop.f32.mrb[0].mxu0
    %v1101 = vadd.f32 %v388, %v1100
    %v1102 = vpop.f32.mrb[0].mxu0
    %1103 = vmatprep.mubr.f32.mxu0 0.0
    %v1104 = vand.u32 %v61, 4294901760
    %1105 = vmatmul.mubr.f32.gmra.mrb[0].mxu0 %v1104
    %v1106 = vpop.f32.mrb[0].mxu0
    %v1107 = vadd.f32 %v398, %v1106
    %v1108 = vpop.f32.mrb[0].mxu0
    %1109 = vmatprep.mubr.f32.mxu0 0.0
    %v1110 = vand.u32 %v62, 4294901760
    %1111 = vmatmul.mubr.f32.gmra.mrb[0].mxu0 %v1110
    %v1112 = vpop.f32.mrb[0].mxu0
    %v1113 = vadd.f32 %v408, %v1112
    %v1114 = vpop.f32.mrb[0].mxu0
    %1115 = vmatprep.mubr.f32.mxu0 0.0
    %v1116 = vand.u32 %v63, 4294901760
    %1117 = vmatmul.mubr.f32.gmra.mrb[0].mxu0 %v1116
    %v1118 = vpop.f32.mrb[0].mxu0
    %v1119 = vadd.f32 %v418, %v1118
    %v1120 = vpop.f32.mrb[0].mxu0
    %1121 = vmatprep.mubr.f32.mxu0 0.0
    %v1122 = vand.u32 %v64, 4294901760
    %1123 = vmatmul.mubr.f32.gmra.mrb[0].mxu0 %v1122
    %v1124 = vpop.f32.mrb[0].mxu0
    %v1125 = vadd.f32 %v428, %v1124
    %v1126 = vpop.f32.mrb[0].mxu0
    %1127 = vmatprep.mubr.f32.mxu0 0.0
    %v1128 = vand.u32 %v65, 4294901760
    %1129 = vmatmul.mubr.f32.gmra.mrb[0].mxu0 %v1128
    %v1130 = vpop.f32.mrb[0].mxu0
    %v1131 = vadd.f32 %v438, %v1130
    %v1132 = vpop.f32.mrb[0].mxu0
    %1133 = vmatprep.mubr.f32.mxu0 0.0
    %v1134 = vand.u32 %v66, 4294901760
    %1135 = vmatmul.mubr.f32.gmra.mrb[0].mxu0 %v1134
    %v1136 = vpop.f32.mrb[0].mxu0
    %v1137 = vadd.f32 %v448, %v1136
    %v1138 = vpop.f32.mrb[0].mxu0
    %1139 = vmatprep.mubr.f32.mxu0 0.0
    %v1140 = vand.u32 %v67, 4294901760
    %1141 = vmatmul.mubr.f32.gmra.mrb[0].mxu0 %v1140
    %v1142 = vpop.f32.mrb[0].mxu0
    %v1143 = vadd.f32 %v458, %v1142
    %v1144 = vpop.f32.mrb[0].mxu0
    %1145 = vmatprep.mubr.f32.mxu0 0.0
    %v1146 = vand.u32 %v68, 4294901760
    %1147 = vmatmul.mubr.f32.gmra.mrb[0].mxu0 %v1146
    %v1148 = vpop.f32.mrb[0].mxu0
    %v1149 = vadd.f32 %v468, %v1148
    %v1150 = vpop.f32.mrb[0].mxu0
    %1151 = vmatprep.mubr.f32.mxu0 0.0
    %v1152 = vand.u32 %v69, 4294901760
    %1153 = vmatmul.mubr.f32.gmra.mrb[0].mxu0 %v1152
    %v1154 = vpop.f32.mrb[0].mxu0
    %v1155 = vadd.f32 %v478, %v1154
    %v1156 = vpop.f32.mrb[0].mxu0
    %1157 = vmatprep.mubr.f32.mxu0 0.0
    %v1158 = vand.u32 %v70, 4294901760
    %1159 = vmatmul.mubr.f32.gmra.mrb[0].mxu0 %v1158
    %v1160 = vpop.f32.mrb[0].mxu0
    %v1161 = vadd.f32 %v488, %v1160
    %v1162 = vpop.f32.mrb[0].mxu0
    %1163 = vmatprep.mubr.f32.mxu0 0.0
    %v1164 = vand.u32 %v71, 4294901760
    %1165 = vmatmul.mubr.f32.gmra.mrb[0].mxu0 %v1164
    %v1166 = vpop.f32.mrb[0].mxu0
    %v1167 = vadd.f32 %v498, %v1166
    %v1168 = vpop.f32.mrb[0].mxu0
    %1169 = vmatprep.mubr.f32.mxu0 0.0
    %v1170 = vand.u32 %v72, 4294901760
    %1171 = vmatmul.mubr.f32.gmra.mrb[0].mxu0 %v1170
    %v1172 = vpop.f32.mrb[0].mxu0
    %v1173 = vadd.f32 %v508, %v1172
    %v1174 = vpop.f32.mrb[0].mxu0
    %1175 = vmatprep.mubr.f32.mxu0 0.0
    %v1176 = vand.u32 %v73, 4294901760
    %1177 = vmatmul.mubr.f32.gmra.mrb[0].mxu0 %v1176
    %v1178 = vpop.f32.mrb[0].mxu0
    %v1179 = vadd.f32 %v518, %v1178
    %v1180 = vpop.f32.mrb[0].mxu0
    %1181 = vmatprep.mubr.f32.mxu0 0.0
    %v1182 = vand.u32 %v74, 4294901760
    %1183 = vmatmul.mubr.f32.gmra.mrb[0].mxu0 %v1182
    %v1184 = vpop.f32.mrb[0].mxu0
    %v1185 = vadd.f32 %v528, %v1184
    %v1186 = vpop.f32.mrb[0].mxu0
    %1187 = vmatprep.mubr.f32.mxu0 0.0
    %v1188 = vand.u32 %v75, 4294901760
    %1189 = vmatmul.mubr.f32.gmra.mrb[0].mxu0 %v1188
    %v1190 = vpop.f32.mrb[0].mxu0
    %v1191 = vadd.f32 %v538, %v1190
    %v1192 = vpop.f32.mrb[0].mxu0
    %1193 = vmatprep.mubr.f32.mxu0 0.0
    %v1194 = vand.u32 %v76, 4294901760
    %1195 = vmatmul.mubr.f32.gmra.mrb[0].mxu0 %v1194
    %v1196 = vpop.f32.mrb[0].mxu0
    %v1197 = vadd.f32 %v548, %v1196
    %v1198 = vpop.f32.mrb[0].mxu0
    %1199 = vmatprep.mubr.f32.mxu0 0.0
    %v1200 = vand.u32 %v77, 4294901760
    %1201 = vmatmul.mubr.f32.gmra.mrb[0].mxu0 %v1200
    %v1202 = vpop.f32.mrb[0].mxu0
    %v1203 = vadd.f32 %v558, %v1202
    %v1204 = vpop.f32.mrb[0].mxu0
    %1205 = vmatprep.mubr.f32.mxu0 0.0
    %v1206 = vand.u32 %v78, 4294901760
    %1207 = vmatmul.mubr.f32.gmra.mrb[0].mxu0 %v1206
    %v1208 = vpop.f32.mrb[0].mxu0
    %v1209 = vadd.f32 %v568, %v1208
    %v1210 = vpop.f32.mrb[0].mxu0
    %1211 = vmatprep.mubr.f32.mxu0 0.0
    %v1212 = vand.u32 %v79, 4294901760
    %1213 = vmatmul.mubr.f32.gmra.mrb[0].mxu0 %v1212
    %v1214 = vpop.f32.mrb[0].mxu0
    %v1215 = vadd.f32 %v578, %v1214
    %v1216 = vpop.f32.mrb[0].mxu0
    %1217 = vmatprep.mubr.f32.mxu0 0.0
    %v1218 = vand.u32 %v80, 4294901760
    %1219 = vmatmul.mubr.f32.gmra.mrb[0].mxu0 %v1218
    %v1220 = vpop.f32.mrb[0].mxu0
    %v1221 = vadd.f32 %v588, %v1220
    %v1222 = vpop.f32.mrb[0].mxu0
    %1223 = vmatprep.mubr.f32.mxu0 0.0
    %v1224 = vand.u32 %v81, 4294901760
    %1225 = vmatmul.mubr.f32.gmra.mrb[0].mxu0 %v1224
    %v1226 = vpop.f32.mrb[0].mxu0
    %v1227 = vadd.f32 %v598, %v1226
    %v1228 = vpop.f32.mrb[0].mxu0
    %1229 = vmatprep.mubr.f32.mxu0 0.0
    %v1230 = vand.u32 %v82, 4294901760
    %1231 = vmatmul.mubr.f32.gmra.mrb[0].mxu0 %v1230
    %v1232 = vpop.f32.mrb[0].mxu0
    %v1233 = vadd.f32 %v608, %v1232
    %v1234 = vpop.f32.mrb[0].mxu0
    %1235 = vmatprep.mubr.f32.mxu0 0.0
    %v1236 = vand.u32 %v83, 4294901760
    %1237 = vmatmul.mubr.f32.gmra.mrb[0].mxu0 %v1236
    %v1238 = vpop.f32.mrb[0].mxu0
    %v1239 = vadd.f32 %v618, %v1238
    %v1240 = vpop.f32.mrb[0].mxu0
    %1241 = vmatprep.mubr.f32.mxu0 0.0
    %v1242 = vand.u32 %v84, 4294901760
    %1243 = vmatmul.mubr.f32.gmra.mrb[0].mxu0 %v1242
    %v1244 = vpop.f32.mrb[0].mxu0
    %v1245 = vadd.f32 %v628, %v1244
    %v1246 = vpop.f32.mrb[0].mxu0
    %1247 = vmatprep.mubr.f32.mxu0 0.0
    %v1248 = vand.u32 %v85, 4294901760
    %1249 = vmatmul.mubr.f32.gmra.mrb[0].mxu0 %v1248
    %v1250 = vpop.f32.mrb[0].mxu0
    %v1251 = vadd.f32 %v638, %v1250
    %v1252 = vpop.f32.mrb[0].mxu0
    %1253 = vmatprep.mubr.f32.mxu0 0.0
    %v1254 = vand.u32 %v86, 4294901760
    %1255 = vmatmul.mubr.f32.gmra.mrb[0].mxu0 %v1254
    %v1256 = vpop.f32.mrb[0].mxu0
    %v1257 = vadd.f32 %v648, %v1256
    %v1258 = vpop.f32.mrb[0].mxu0
    %1259 = vmatprep.mubr.f32.mxu0 0.0
    %v1260 = vand.u32 %v87, 4294901760
    %1261 = vmatmul.mubr.f32.gmra.mrb[0].mxu0 %v1260
    %v1262 = vpop.f32.mrb[0].mxu0
    %v1263 = vadd.f32 %v658, %v1262
    %v1264 = vpop.f32.mrb[0].mxu0
    %1265 = vmatprep.mubr.f32.mxu0 0.0
    %v1266 = vand.u32 %v88, 4294901760
    %1267 = vmatmul.mubr.f32.gmra.mrb[0].mxu0 %v1266
    %v1268 = vpop.f32.mrb[0].mxu0
    %v1269 = vadd.f32 %v668, %v1268
    %v1270 = vpop.f32.mrb[0].mxu0
    %1271 = vmatprep.mubr.f32.mxu0 0.0
    %v1272 = vand.u32 %v89, 4294901760
    %1273 = vmatmul.mubr.f32.gmra.mrb[0].mxu0 %v1272
    %v1274 = vpop.f32.mrb[0].mxu0
    %v1275 = vadd.f32 %v678, %v1274
    %v1276 = vpop.f32.mrb[0].mxu0
    %1277 = vmatprep.mubr.f32.mxu0 0.0
    %v1278 = vand.u32 %v90, 4294901760
    %1279 = vmatmul.mubr.f32.gmra.mrb[0].mxu0 %v1278
    %v1280 = vpop.f32.mrb[0].mxu0
    %v1281 = vadd.f32 %v688, %v1280
    %v1282 = vpop.f32.mrb[0].mxu0
    %1283 = vmatprep.mubr.f32.mxu0 0.0
    %v1284 = vand.u32 %v91, 4294901760
    %1285 = vmatmul.mubr.f32.gmra.mrb[0].mxu0 %v1284
    %v1286 = vpop.f32.mrb[0].mxu0
    %v1287 = vadd.f32 %v698, %v1286
    %v1288 = vpop.f32.mrb[0].mxu0
    %1289 = vmatprep.mubr.f32.mxu0 0.0
    %v1290 = vand.u32 %v92, 4294901760
    %1291 = vmatmul.mubr.f32.gmra.mrb[0].mxu0 %v1290
    %v1292 = vpop.f32.mrb[0].mxu0
    %v1293 = vadd.f32 %v708, %v1292
    %v1294 = vpop.f32.mrb[0].mxu0
    %1295 = vmatprep.mubr.f32.mxu0 0.0
    %v1296 = vand.u32 %v93, 4294901760
    %1297 = vmatmul.mubr.f32.gmra.mrb[0].mxu0 %v1296
    %v1298 = vpop.f32.mrb[0].mxu0
    %v1299 = vadd.f32 %v718, %v1298
    %v1300 = vpop.f32.mrb[0].mxu0
    %1301 = vmatprep.mubr.f32.mxu0 0.0
    %v1302 = vand.u32 %v94, 4294901760
    %1303 = vmatmul.mubr.f32.gmra.mrb[0].mxu0 %v1302
    %v1304 = vpop.f32.mrb[0].mxu0
    %v1305 = vadd.f32 %v728, %v1304
    %v1306 = vpop.f32.mrb[0].mxu0
    %1307 = vmatprep.mubr.f32.mxu0 0.0
    %v1308 = vand.u32 %v95, 4294901760
    %1309 = vmatmul.mubr.f32.gmra.mrb[0].mxu0 %v1308
    %v1310 = vpop.f32.mrb[0].mxu0
    %v1311 = vadd.f32 %v738, %v1310
    %v1312 = vpop.f32.mrb[0].mxu0
    %1313 = vmatprep.mubr.f32.mxu0 0.0
    %v1314 = vand.u32 %v96, 4294901760
    %1315 = vmatmul.mubr.f32.gmra.mrb[0].mxu0 %v1314
    %v1316 = vpop.f32.mrb[0].mxu0
    %v1317 = vadd.f32 %v748, %v1316
    %v1318 = vpop.f32.mrb[0].mxu0
    %1319 = vmatprep.mubr.f32.mxu0 0.0
    %v1320 = vand.u32 %v97, 4294901760
    %1321 = vmatmul.mubr.f32.gmra.mrb[0].mxu0 %v1320
    %v1322 = vpop.f32.mrb[0].mxu0
    %v1323 = vadd.f32 %v758, %v1322
    %v1324 = vpop.f32.mrb[0].mxu0
    %1325 = vmatprep.mubr.f32.mxu0 0.0
    %v1326 = vand.u32 %v98, 4294901760
    %1327 = vmatmul.mubr.f32.gmra.mrb[0].mxu0 %v1326
    %v1328 = vpop.f32.mrb[0].mxu0
    %v1329 = vadd.f32 %v768, %v1328
    %v1330 = vpop.f32.mrb[0].mxu0
    %1331 = vmatprep.mubr.f32.mxu0 0.0
    %v1332 = vand.u32 %v99, 4294901760
    %1333 = vmatmul.mubr.f32.gmra.mrb[0].mxu0 %v1332
    %v1334 = vpop.f32.mrb[0].mxu0
    %v1335 = vadd.f32 %v778, %v1334
    %v1336 = vpop.f32.mrb[0].mxu0
    %1337 = vmatprep.mubr.f32.mxu0 0.0
    %v1338 = vand.u32 %v100, 4294901760
    %1339 = vmatmul.mubr.f32.gmra.mrb[0].mxu0 %v1338
    %v1340 = vpop.f32.mrb[0].mxu0
    %v1341 = vadd.f32 %v788, %v1340
    %v1342 = vpop.f32.mrb[0].mxu0
    %1343 = vmatprep.mubr.f32.mxu0 0.0
    %v1344 = vand.u32 %v101, 4294901760
    %1345 = vmatmul.mubr.f32.gmra.mrb[0].mxu0 %v1344
    %v1346 = vpop.f32.mrb[0].mxu0
    %v1347 = vadd.f32 %v798, %v1346
    %v1348 = vpop.f32.mrb[0].mxu0
    %1349 = vmatprep.mubr.f32.mxu0 0.0
    %v1350 = vand.u32 %v102, 4294901760
    %1351 = vmatmul.mubr.f32.gmra.mrb[0].mxu0 %v1350
    %v1352 = vpop.f32.mrb[0].mxu0
    %v1353 = vadd.f32 %v808, %v1352
    %v1354 = vpop.f32.mrb[0].mxu0
    %1355 = vmatprep.mubr.f32.mxu0 0.0
    %v1356 = vand.u32 %v103, 4294901760
    %1357 = vmatmul.mubr.f32.gmra.mrb[0].mxu0 %v1356
    %v1358 = vpop.f32.mrb[0].mxu0
    %v1359 = vadd.f32 %v818, %v1358
    %v1360 = vpop.f32.mrb[0].mxu0
    %1361 = vmatprep.mubr.f32.mxu0 0.0
    %v1362 = vand.u32 %v104, 4294901760
    %1363 = vmatmul.mubr.f32.gmra.mrb[0].mxu0 %v1362
    %v1364 = vpop.f32.mrb[0].mxu0
    %v1365 = vadd.f32 %v828, %v1364
    %v1366 = vpop.f32.mrb[0].mxu0
    %1367 = vmatprep.mubr.f32.mxu0 0.0
    %v1368 = vand.u32 %v105, 4294901760
    %1369 = vmatmul.mubr.f32.gmra.mrb[0].mxu0 %v1368
    %v1370 = vpop.f32.mrb[0].mxu0
    %v1371 = vadd.f32 %v838, %v1370
    %v1372 = vpop.f32.mrb[0].mxu0
    %1373 = vmatprep.mubr.f32.mxu0 0.0
    %v1374 = vand.u32 %v106, 4294901760
    %1375 = vmatmul.mubr.f32.gmra.mrb[0].mxu0 %v1374
    %v1376 = vpop.f32.mrb[0].mxu0
    %v1377 = vadd.f32 %v848, %v1376
    %v1378 = vpop.f32.mrb[0].mxu0
    %1379 = vdwg.mxu0
    %1380 = vmatprep.subr.mxu0 0.0
    %v1381 = vand.u32 %v107, 4294901760
    %v1382 = vsub.f32 %v107, %v1381
    %1383 = vmatpush1.msra.mxu0 %v1382
    %1384 = vmatprep.subr.mxu0 0.0
    %v1385 = vand.u32 %v108, 4294901760
    %v1386 = vsub.f32 %v108, %v1385
    %1387 = vmatpush1.msra.mxu0 %v1386
    %1388 = vmatprep.subr.mxu0 0.0
    %v1389 = vand.u32 %v109, 4294901760
    %v1390 = vsub.f32 %v109, %v1389
    %1391 = vmatpush1.msra.mxu0 %v1390
    %1392 = vmatprep.subr.mxu0 0.0
    %v1393 = vand.u32 %v110, 4294901760
    %v1394 = vsub.f32 %v110, %v1393
    %1395 = vmatpush1.msra.mxu0 %v1394
    %1396 = vmatprep.subr.mxu0 0.0
    %v1397 = vand.u32 %v111, 4294901760
    %v1398 = vsub.f32 %v111, %v1397
    %1399 = vmatpush1.msra.mxu0 %v1398
    %1400 = vmatprep.subr.mxu0 0.0
    %v1401 = vand.u32 %v112, 4294901760
    %v1402 = vsub.f32 %v112, %v1401
    %1403 = vmatpush1.msra.mxu0 %v1402
    %1404 = vmatprep.subr.mxu0 0.0
    %v1405 = vand.u32 %v113, 4294901760
    %v1406 = vsub.f32 %v113, %v1405
    %1407 = vmatpush1.msra.mxu0 %v1406
    %1408 = vmatprep.subr.mxu0 0.0
    %v1409 = vand.u32 %v114, 4294901760
    %v1410 = vsub.f32 %v114, %v1409
    %1411 = vmatpush1.msra.mxu0 %v1410
    %1412 = vmatprep.subr.mxu0 0.0
    %v1413 = vand.u32 %v115, 4294901760
    %v1414 = vsub.f32 %v115, %v1413
    %1415 = vmatpush1.msra.mxu0 %v1414
    %1416 = vmatprep.subr.mxu0 0.0
    %v1417 = vand.u32 %v116, 4294901760
    %v1418 = vsub.f32 %v116, %v1417
    %1419 = vmatpush1.msra.mxu0 %v1418
    %1420 = vmatprep.subr.mxu0 0.0
    %v1421 = vand.u32 %v117, 4294901760
    %v1422 = vsub.f32 %v117, %v1421
    %1423 = vmatpush1.msra.mxu0 %v1422
    %1424 = vmatprep.subr.mxu0 0.0
    %v1425 = vand.u32 %v118, 4294901760
    %v1426 = vsub.f32 %v118, %v1425
    %1427 = vmatpush1.msra.mxu0 %v1426
    %1428 = vmatprep.subr.mxu0 0.0
    %v1429 = vand.u32 %v119, 4294901760
    %v1430 = vsub.f32 %v119, %v1429
    %1431 = vmatpush1.msra.mxu0 %v1430
    %1432 = vmatprep.subr.mxu0 0.0
    %v1433 = vand.u32 %v120, 4294901760
    %v1434 = vsub.f32 %v120, %v1433
    %1435 = vmatpush1.msra.mxu0 %v1434
    %1436 = vmatprep.subr.mxu0 0.0
    %v1437 = vand.u32 %v121, 4294901760
    %v1438 = vsub.f32 %v121, %v1437
    %1439 = vmatpush1.msra.mxu0 %v1438
    %1440 = vmatprep.subr.mxu0 0.0
    %v1441 = vand.u32 %v122, 4294901760
    %v1442 = vsub.f32 %v122, %v1441
    %1443 = vmatpush1.msra.mxu0 %v1442
    %1444 = vmatprep.subr.mxu0 0.0
    %1445 = vmatpush1.msra.mxu0 0.0
    %1446 = vmatprep.subr.mxu0 0.0
    %1447 = vmatpush1.msra.mxu0 0.0
    %1448 = vmatprep.subr.mxu0 0.0
    %1449 = vmatpush1.msra.mxu0 0.0
    %1450 = vmatprep.subr.mxu0 0.0
    %1451 = vmatpush1.msra.mxu0 0.0
    %1452 = vmatprep.subr.mxu0 0.0
    %1453 = vmatpush1.msra.mxu0 0.0
    %1454 = vmatprep.subr.mxu0 0.0
    %1455 = vmatpush1.msra.mxu0 0.0
    %1456 = vmatprep.subr.mxu0 0.0
    %1457 = vmatpush1.msra.mxu0 0.0
    %1458 = vmatprep.subr.mxu0 0.0
    %1459 = vmatpush1.msra.mxu0 0.0
    %1460 = vmatprep.subr.mxu0 0.0
    %1461 = vmatpush1.msra.mxu0 0.0
    %1462 = vmatprep.subr.mxu0 0.0
    %1463 = vmatpush1.msra.mxu0 0.0
    %1464 = vmatprep.subr.mxu0 0.0
    %1465 = vmatpush1.msra.mxu0 0.0
    %1466 = vmatprep.subr.mxu0 0.0
    %1467 = vmatpush1.msra.mxu0 0.0
    %1468 = vmatprep.subr.mxu0 0.0
    %1469 = vmatpush1.msra.mxu0 0.0
    %1470 = vmatprep.subr.mxu0 0.0
    %1471 = vmatpush1.msra.mxu0 0.0
    %1472 = vmatprep.subr.mxu0 0.0
    %1473 = vmatpush1.msra.mxu0 0.0
    %1474 = vmatprep.subr.mxu0 0.0
    %1475 = vmatpush1.msra.mxu0 0.0
    %1476 = vmatprep.mubr.f32.mxu0 0.0
    %v1477 = vand.u32 %v43, 4294901760
    %v1478 = vsub.f32 %v43, %v1477
    %1479 = vmatmul.mubr.f32.gmra.mrb[0].mxu0 %v1478
    %v1480 = vpop.f32.mrb[0].mxu0
    %v1481 = vadd.f32 %v999, %v1480
    %v1482 = vpop.f32.mrb[0].mxu0
    %1483 = vmatprep.mubr.f32.mxu0 0.0
    %v1484 = vand.u32 %v44, 4294901760
    %v1485 = vsub.f32 %v44, %v1484
    %1486 = vmatmul.mubr.f32.gmra.mrb[0].mxu0 %v1485
    %v1487 = vpop.f32.mrb[0].mxu0
    %v1488 = vadd.f32 %v1005, %v1487
    %v1489 = vpop.f32.mrb[0].mxu0
    %1490 = vmatprep.mubr.f32.mxu0 0.0
    %v1491 = vand.u32 %v45, 4294901760
    %v1492 = vsub.f32 %v45, %v1491
    %1493 = vmatmul.mubr.f32.gmra.mrb[0].mxu0 %v1492
    %v1494 = vpop.f32.mrb[0].mxu0
    %v1495 = vadd.f32 %v1011, %v1494
    %v1496 = vpop.f32.mrb[0].mxu0
    %1497 = vmatprep.mubr.f32.mxu0 0.0
    %v1498 = vand.u32 %v46, 4294901760
    %v1499 = vsub.f32 %v46, %v1498
    %1500 = vmatmul.mubr.f32.gmra.mrb[0].mxu0 %v1499
    %v1501 = vpop.f32.mrb[0].mxu0
    %v1502 = vadd.f32 %v1017, %v1501
    %v1503 = vpop.f32.mrb[0].mxu0
    %1504 = vmatprep.mubr.f32.mxu0 0.0
    %v1505 = vand.u32 %v47, 4294901760
    %v1506 = vsub.f32 %v47, %v1505
    %1507 = vmatmul.mubr.f32.gmra.mrb[0].mxu0 %v1506
    %v1508 = vpop.f32.mrb[0].mxu0
    %v1509 = vadd.f32 %v1023, %v1508
    %v1510 = vpop.f32.mrb[0].mxu0
    %1511 = vmatprep.mubr.f32.mxu0 0.0
    %v1512 = vand.u32 %v48, 4294901760
    %v1513 = vsub.f32 %v48, %v1512
    %1514 = vmatmul.mubr.f32.gmra.mrb[0].mxu0 %v1513
    %v1515 = vpop.f32.mrb[0].mxu0
    %v1516 = vadd.f32 %v1029, %v1515
    %v1517 = vpop.f32.mrb[0].mxu0
    %1518 = vmatprep.mubr.f32.mxu0 0.0
    %v1519 = vand.u32 %v49, 4294901760
    %v1520 = vsub.f32 %v49, %v1519
    %1521 = vmatmul.mubr.f32.gmra.mrb[0].mxu0 %v1520
    %v1522 = vpop.f32.mrb[0].mxu0
    %v1523 = vadd.f32 %v1035, %v1522
    %v1524 = vpop.f32.mrb[0].mxu0
    %1525 = vmatprep.mubr.f32.mxu0 0.0
    %v1526 = vand.u32 %v50, 4294901760
    %v1527 = vsub.f32 %v50, %v1526
    %1528 = vmatmul.mubr.f32.gmra.mrb[0].mxu0 %v1527
    %v1529 = vpop.f32.mrb[0].mxu0
    %v1530 = vadd.f32 %v1041, %v1529
    %v1531 = vpop.f32.mrb[0].mxu0
    %1532 = vmatprep.mubr.f32.mxu0 0.0
    %v1533 = vand.u32 %v51, 4294901760
    %v1534 = vsub.f32 %v51, %v1533
    %1535 = vmatmul.mubr.f32.gmra.mrb[0].mxu0 %v1534
    %v1536 = vpop.f32.mrb[0].mxu0
    %v1537 = vadd.f32 %v1047, %v1536
    %v1538 = vpop.f32.mrb[0].mxu0
    %1539 = vmatprep.mubr.f32.mxu0 0.0
    %v1540 = vand.u32 %v52, 4294901760
    %v1541 = vsub.f32 %v52, %v1540
    %1542 = vmatmul.mubr.f32.gmra.mrb[0].mxu0 %v1541
    %v1543 = vpop.f32.mrb[0].mxu0
    %v1544 = vadd.f32 %v1053, %v1543
    %v1545 = vpop.f32.mrb[0].mxu0
    %1546 = vmatprep.mubr.f32.mxu0 0.0
    %v1547 = vand.u32 %v53, 4294901760
    %v1548 = vsub.f32 %v53, %v1547
    %1549 = vmatmul.mubr.f32.gmra.mrb[0].mxu0 %v1548
    %v1550 = vpop.f32.mrb[0].mxu0
    %v1551 = vadd.f32 %v1059, %v1550
    %v1552 = vpop.f32.mrb[0].mxu0
    %1553 = vmatprep.mubr.f32.mxu0 0.0
    %v1554 = vand.u32 %v54, 4294901760
    %v1555 = vsub.f32 %v54, %v1554
    %1556 = vmatmul.mubr.f32.gmra.mrb[0].mxu0 %v1555
    %v1557 = vpop.f32.mrb[0].mxu0
    %v1558 = vadd.f32 %v1065, %v1557
    %v1559 = vpop.f32.mrb[0].mxu0
    %1560 = vmatprep.mubr.f32.mxu0 0.0
    %v1561 = vand.u32 %v55, 4294901760
    %v1562 = vsub.f32 %v55, %v1561
    %1563 = vmatmul.mubr.f32.gmra.mrb[0].mxu0 %v1562
    %v1564 = vpop.f32.mrb[0].mxu0
    %v1565 = vadd.f32 %v1071, %v1564
    %v1566 = vpop.f32.mrb[0].mxu0
    %1567 = vmatprep.mubr.f32.mxu0 0.0
    %v1568 = vand.u32 %v56, 4294901760
    %v1569 = vsub.f32 %v56, %v1568
    %1570 = vmatmul.mubr.f32.gmra.mrb[0].mxu0 %v1569
    %v1571 = vpop.f32.mrb[0].mxu0
    %v1572 = vadd.f32 %v1077, %v1571
    %v1573 = vpop.f32.mrb[0].mxu0
    %1574 = vmatprep.mubr.f32.mxu0 0.0
    %v1575 = vand.u32 %v57, 4294901760
    %v1576 = vsub.f32 %v57, %v1575
    %1577 = vmatmul.mubr.f32.gmra.mrb[0].mxu0 %v1576
    %v1578 = vpop.f32.mrb[0].mxu0
    %v1579 = vadd.f32 %v1083, %v1578
    %v1580 = vpop.f32.mrb[0].mxu0
    %1581 = vmatprep.mubr.f32.mxu0 0.0
    %v1582 = vand.u32 %v58, 4294901760
    %v1583 = vsub.f32 %v58, %v1582
    %1584 = vmatmul.mubr.f32.gmra.mrb[0].mxu0 %v1583
    %v1585 = vpop.f32.mrb[0].mxu0
    %v1586 = vadd.f32 %v1089, %v1585
    %v1587 = vpop.f32.mrb[0].mxu0
    %1588 = vmatprep.mubr.f32.mxu0 0.0
    %v1589 = vand.u32 %v59, 4294901760
    %v1590 = vsub.f32 %v59, %v1589
    %1591 = vmatmul.mubr.f32.gmra.mrb[0].mxu0 %v1590
    %v1592 = vpop.f32.mrb[0].mxu0
    %v1593 = vadd.f32 %v1095, %v1592
    %v1594 = vpop.f32.mrb[0].mxu0
    %1595 = vmatprep.mubr.f32.mxu0 0.0
    %v1596 = vand.u32 %v60, 4294901760
    %v1597 = vsub.f32 %v60, %v1596
    %1598 = vmatmul.mubr.f32.gmra.mrb[0].mxu0 %v1597
    %v1599 = vpop.f32.mrb[0].mxu0
    %v1600 = vadd.f32 %v1101, %v1599
    %v1601 = vpop.f32.mrb[0].mxu0
    %1602 = vmatprep.mubr.f32.mxu0 0.0
    %v1603 = vand.u32 %v61, 4294901760
    %v1604 = vsub.f32 %v61, %v1603
    %1605 = vmatmul.mubr.f32.gmra.mrb[0].mxu0 %v1604
    %v1606 = vpop.f32.mrb[0].mxu0
    %v1607 = vadd.f32 %v1107, %v1606
    %v1608 = vpop.f32.mrb[0].mxu0
    %1609 = vmatprep.mubr.f32.mxu0 0.0
    %v1610 = vand.u32 %v62, 4294901760
    %v1611 = vsub.f32 %v62, %v1610
    %1612 = vmatmul.mubr.f32.gmra.mrb[0].mxu0 %v1611
    %v1613 = vpop.f32.mrb[0].mxu0
    %v1614 = vadd.f32 %v1113, %v1613
    %v1615 = vpop.f32.mrb[0].mxu0
    %1616 = vmatprep.mubr.f32.mxu0 0.0
    %v1617 = vand.u32 %v63, 4294901760
    %v1618 = vsub.f32 %v63, %v1617
    %1619 = vmatmul.mubr.f32.gmra.mrb[0].mxu0 %v1618
    %v1620 = vpop.f32.mrb[0].mxu0
    %v1621 = vadd.f32 %v1119, %v1620
    %v1622 = vpop.f32.mrb[0].mxu0
    %1623 = vmatprep.mubr.f32.mxu0 0.0
    %v1624 = vand.u32 %v64, 4294901760
    %v1625 = vsub.f32 %v64, %v1624
    %1626 = vmatmul.mubr.f32.gmra.mrb[0].mxu0 %v1625
    %v1627 = vpop.f32.mrb[0].mxu0
    %v1628 = vadd.f32 %v1125, %v1627
    %v1629 = vpop.f32.mrb[0].mxu0
    %1630 = vmatprep.mubr.f32.mxu0 0.0
    %v1631 = vand.u32 %v65, 4294901760
    %v1632 = vsub.f32 %v65, %v1631
    %1633 = vmatmul.mubr.f32.gmra.mrb[0].mxu0 %v1632
    %v1634 = vpop.f32.mrb[0].mxu0
    %v1635 = vadd.f32 %v1131, %v1634
    %v1636 = vpop.f32.mrb[0].mxu0
    %1637 = vmatprep.mubr.f32.mxu0 0.0
    %v1638 = vand.u32 %v66, 4294901760
    %v1639 = vsub.f32 %v66, %v1638
    %1640 = vmatmul.mubr.f32.gmra.mrb[0].mxu0 %v1639
    %v1641 = vpop.f32.mrb[0].mxu0
    %v1642 = vadd.f32 %v1137, %v1641
    %v1643 = vpop.f32.mrb[0].mxu0
    %1644 = vmatprep.mubr.f32.mxu0 0.0
    %v1645 = vand.u32 %v67, 4294901760
    %v1646 = vsub.f32 %v67, %v1645
    %1647 = vmatmul.mubr.f32.gmra.mrb[0].mxu0 %v1646
    %v1648 = vpop.f32.mrb[0].mxu0
    %v1649 = vadd.f32 %v1143, %v1648
    %v1650 = vpop.f32.mrb[0].mxu0
    %1651 = vmatprep.mubr.f32.mxu0 0.0
    %v1652 = vand.u32 %v68, 4294901760
    %v1653 = vsub.f32 %v68, %v1652
    %1654 = vmatmul.mubr.f32.gmra.mrb[0].mxu0 %v1653
    %v1655 = vpop.f32.mrb[0].mxu0
    %v1656 = vadd.f32 %v1149, %v1655
    %v1657 = vpop.f32.mrb[0].mxu0
    %1658 = vmatprep.mubr.f32.mxu0 0.0
    %v1659 = vand.u32 %v69, 4294901760
    %v1660 = vsub.f32 %v69, %v1659
    %1661 = vmatmul.mubr.f32.gmra.mrb[0].mxu0 %v1660
    %v1662 = vpop.f32.mrb[0].mxu0
    %v1663 = vadd.f32 %v1155, %v1662
    %v1664 = vpop.f32.mrb[0].mxu0
    %1665 = vmatprep.mubr.f32.mxu0 0.0
    %v1666 = vand.u32 %v70, 4294901760
    %v1667 = vsub.f32 %v70, %v1666
    %1668 = vmatmul.mubr.f32.gmra.mrb[0].mxu0 %v1667
    %v1669 = vpop.f32.mrb[0].mxu0
    %v1670 = vadd.f32 %v1161, %v1669
    %v1671 = vpop.f32.mrb[0].mxu0
    %1672 = vmatprep.mubr.f32.mxu0 0.0
    %v1673 = vand.u32 %v71, 4294901760
    %v1674 = vsub.f32 %v71, %v1673
    %1675 = vmatmul.mubr.f32.gmra.mrb[0].mxu0 %v1674
    %v1676 = vpop.f32.mrb[0].mxu0
    %v1677 = vadd.f32 %v1167, %v1676
    %v1678 = vpop.f32.mrb[0].mxu0
    %1679 = vmatprep.mubr.f32.mxu0 0.0
    %v1680 = vand.u32 %v72, 4294901760
    %v1681 = vsub.f32 %v72, %v1680
    %1682 = vmatmul.mubr.f32.gmra.mrb[0].mxu0 %v1681
    %v1683 = vpop.f32.mrb[0].mxu0
    %v1684 = vadd.f32 %v1173, %v1683
    %v1685 = vpop.f32.mrb[0].mxu0
    %1686 = vmatprep.mubr.f32.mxu0 0.0
    %v1687 = vand.u32 %v73, 4294901760
    %v1688 = vsub.f32 %v73, %v1687
    %1689 = vmatmul.mubr.f32.gmra.mrb[0].mxu0 %v1688
    %v1690 = vpop.f32.mrb[0].mxu0
    %v1691 = vadd.f32 %v1179, %v1690
    %v1692 = vpop.f32.mrb[0].mxu0
    %1693 = vmatprep.mubr.f32.mxu0 0.0
    %v1694 = vand.u32 %v74, 4294901760
    %v1695 = vsub.f32 %v74, %v1694
    %1696 = vmatmul.mubr.f32.gmra.mrb[0].mxu0 %v1695
    %v1697 = vpop.f32.mrb[0].mxu0
    %v1698 = vadd.f32 %v1185, %v1697
    %v1699 = vpop.f32.mrb[0].mxu0
    %1700 = vmatprep.mubr.f32.mxu0 0.0
    %v1701 = vand.u32 %v75, 4294901760
    %v1702 = vsub.f32 %v75, %v1701
    %1703 = vmatmul.mubr.f32.gmra.mrb[0].mxu0 %v1702
    %v1704 = vpop.f32.mrb[0].mxu0
    %v1705 = vadd.f32 %v1191, %v1704
    %v1706 = vpop.f32.mrb[0].mxu0
    %1707 = vmatprep.mubr.f32.mxu0 0.0
    %v1708 = vand.u32 %v76, 4294901760
    %v1709 = vsub.f32 %v76, %v1708
    %1710 = vmatmul.mubr.f32.gmra.mrb[0].mxu0 %v1709
    %v1711 = vpop.f32.mrb[0].mxu0
    %v1712 = vadd.f32 %v1197, %v1711
    %v1713 = vpop.f32.mrb[0].mxu0
    %1714 = vmatprep.mubr.f32.mxu0 0.0
    %v1715 = vand.u32 %v77, 4294901760
    %v1716 = vsub.f32 %v77, %v1715
    %1717 = vmatmul.mubr.f32.gmra.mrb[0].mxu0 %v1716
    %v1718 = vpop.f32.mrb[0].mxu0
    %v1719 = vadd.f32 %v1203, %v1718
    %v1720 = vpop.f32.mrb[0].mxu0
    %1721 = vmatprep.mubr.f32.mxu0 0.0
    %v1722 = vand.u32 %v78, 4294901760
    %v1723 = vsub.f32 %v78, %v1722
    %1724 = vmatmul.mubr.f32.gmra.mrb[0].mxu0 %v1723
    %v1725 = vpop.f32.mrb[0].mxu0
    %v1726 = vadd.f32 %v1209, %v1725
    %v1727 = vpop.f32.mrb[0].mxu0
    %1728 = vmatprep.mubr.f32.mxu0 0.0
    %v1729 = vand.u32 %v79, 4294901760
    %v1730 = vsub.f32 %v79, %v1729
    %1731 = vmatmul.mubr.f32.gmra.mrb[0].mxu0 %v1730
    %v1732 = vpop.f32.mrb[0].mxu0
    %v1733 = vadd.f32 %v1215, %v1732
    %v1734 = vpop.f32.mrb[0].mxu0
    %1735 = vmatprep.mubr.f32.mxu0 0.0
    %v1736 = vand.u32 %v80, 4294901760
    %v1737 = vsub.f32 %v80, %v1736
    %1738 = vmatmul.mubr.f32.gmra.mrb[0].mxu0 %v1737
    %v1739 = vpop.f32.mrb[0].mxu0
    %v1740 = vadd.f32 %v1221, %v1739
    %v1741 = vpop.f32.mrb[0].mxu0
    %1742 = vmatprep.mubr.f32.mxu0 0.0
    %v1743 = vand.u32 %v81, 4294901760
    %v1744 = vsub.f32 %v81, %v1743
    %1745 = vmatmul.mubr.f32.gmra.mrb[0].mxu0 %v1744
    %v1746 = vpop.f32.mrb[0].mxu0
    %v1747 = vadd.f32 %v1227, %v1746
    %v1748 = vpop.f32.mrb[0].mxu0
    %1749 = vmatprep.mubr.f32.mxu0 0.0
    %v1750 = vand.u32 %v82, 4294901760
    %v1751 = vsub.f32 %v82, %v1750
    %1752 = vmatmul.mubr.f32.gmra.mrb[0].mxu0 %v1751
    %v1753 = vpop.f32.mrb[0].mxu0
    %v1754 = vadd.f32 %v1233, %v1753
    %v1755 = vpop.f32.mrb[0].mxu0
    %1756 = vmatprep.mubr.f32.mxu0 0.0
    %v1757 = vand.u32 %v83, 4294901760
    %v1758 = vsub.f32 %v83, %v1757
    %1759 = vmatmul.mubr.f32.gmra.mrb[0].mxu0 %v1758
    %v1760 = vpop.f32.mrb[0].mxu0
    %v1761 = vadd.f32 %v1239, %v1760
    %v1762 = vpop.f32.mrb[0].mxu0
    %1763 = vmatprep.mubr.f32.mxu0 0.0
    %v1764 = vand.u32 %v84, 4294901760
    %v1765 = vsub.f32 %v84, %v1764
    %1766 = vmatmul.mubr.f32.gmra.mrb[0].mxu0 %v1765
    %v1767 = vpop.f32.mrb[0].mxu0
    %v1768 = vadd.f32 %v1245, %v1767
    %v1769 = vpop.f32.mrb[0].mxu0
    %1770 = vmatprep.mubr.f32.mxu0 0.0
    %v1771 = vand.u32 %v85, 4294901760
    %v1772 = vsub.f32 %v85, %v1771
    %1773 = vmatmul.mubr.f32.gmra.mrb[0].mxu0 %v1772
    %v1774 = vpop.f32.mrb[0].mxu0
    %v1775 = vadd.f32 %v1251, %v1774
    %v1776 = vpop.f32.mrb[0].mxu0
    %1777 = vmatprep.mubr.f32.mxu0 0.0
    %v1778 = vand.u32 %v86, 4294901760
    %v1779 = vsub.f32 %v86, %v1778
    %1780 = vmatmul.mubr.f32.gmra.mrb[0].mxu0 %v1779
    %v1781 = vpop.f32.mrb[0].mxu0
    %v1782 = vadd.f32 %v1257, %v1781
    %v1783 = vpop.f32.mrb[0].mxu0
    %1784 = vmatprep.mubr.f32.mxu0 0.0
    %v1785 = vand.u32 %v87, 4294901760
    %v1786 = vsub.f32 %v87, %v1785
    %1787 = vmatmul.mubr.f32.gmra.mrb[0].mxu0 %v1786
    %v1788 = vpop.f32.mrb[0].mxu0
    %v1789 = vadd.f32 %v1263, %v1788
    %v1790 = vpop.f32.mrb[0].mxu0
    %1791 = vmatprep.mubr.f32.mxu0 0.0
    %v1792 = vand.u32 %v88, 4294901760
    %v1793 = vsub.f32 %v88, %v1792
    %1794 = vmatmul.mubr.f32.gmra.mrb[0].mxu0 %v1793
    %v1795 = vpop.f32.mrb[0].mxu0
    %v1796 = vadd.f32 %v1269, %v1795
    %v1797 = vpop.f32.mrb[0].mxu0
    %1798 = vmatprep.mubr.f32.mxu0 0.0
    %v1799 = vand.u32 %v89, 4294901760
    %v1800 = vsub.f32 %v89, %v1799
    %1801 = vmatmul.mubr.f32.gmra.mrb[0].mxu0 %v1800
    %v1802 = vpop.f32.mrb[0].mxu0
    %v1803 = vadd.f32 %v1275, %v1802
    %v1804 = vpop.f32.mrb[0].mxu0
    %1805 = vmatprep.mubr.f32.mxu0 0.0
    %v1806 = vand.u32 %v90, 4294901760
    %v1807 = vsub.f32 %v90, %v1806
    %1808 = vmatmul.mubr.f32.gmra.mrb[0].mxu0 %v1807
    %v1809 = vpop.f32.mrb[0].mxu0
    %v1810 = vadd.f32 %v1281, %v1809
    %v1811 = vpop.f32.mrb[0].mxu0
    %1812 = vmatprep.mubr.f32.mxu0 0.0
    %v1813 = vand.u32 %v91, 4294901760
    %v1814 = vsub.f32 %v91, %v1813
    %1815 = vmatmul.mubr.f32.gmra.mrb[0].mxu0 %v1814
    %v1816 = vpop.f32.mrb[0].mxu0
    %v1817 = vadd.f32 %v1287, %v1816
    %v1818 = vpop.f32.mrb[0].mxu0
    %1819 = vmatprep.mubr.f32.mxu0 0.0
    %v1820 = vand.u32 %v92, 4294901760
    %v1821 = vsub.f32 %v92, %v1820
    %1822 = vmatmul.mubr.f32.gmra.mrb[0].mxu0 %v1821
    %v1823 = vpop.f32.mrb[0].mxu0
    %v1824 = vadd.f32 %v1293, %v1823
    %v1825 = vpop.f32.mrb[0].mxu0
    %1826 = vmatprep.mubr.f32.mxu0 0.0
    %v1827 = vand.u32 %v93, 4294901760
    %v1828 = vsub.f32 %v93, %v1827
    %1829 = vmatmul.mubr.f32.gmra.mrb[0].mxu0 %v1828
    %v1830 = vpop.f32.mrb[0].mxu0
    %v1831 = vadd.f32 %v1299, %v1830
    %v1832 = vpop.f32.mrb[0].mxu0
    %1833 = vmatprep.mubr.f32.mxu0 0.0
    %v1834 = vand.u32 %v94, 4294901760
    %v1835 = vsub.f32 %v94, %v1834
    %1836 = vmatmul.mubr.f32.gmra.mrb[0].mxu0 %v1835
    %v1837 = vpop.f32.mrb[0].mxu0
    %v1838 = vadd.f32 %v1305, %v1837
    %v1839 = vpop.f32.mrb[0].mxu0
    %1840 = vmatprep.mubr.f32.mxu0 0.0
    %v1841 = vand.u32 %v95, 4294901760
    %v1842 = vsub.f32 %v95, %v1841
    %1843 = vmatmul.mubr.f32.gmra.mrb[0].mxu0 %v1842
    %v1844 = vpop.f32.mrb[0].mxu0
    %v1845 = vadd.f32 %v1311, %v1844
    %v1846 = vpop.f32.mrb[0].mxu0
    %1847 = vmatprep.mubr.f32.mxu0 0.0
    %v1848 = vand.u32 %v96, 4294901760
    %v1849 = vsub.f32 %v96, %v1848
    %1850 = vmatmul.mubr.f32.gmra.mrb[0].mxu0 %v1849
    %v1851 = vpop.f32.mrb[0].mxu0
    %v1852 = vadd.f32 %v1317, %v1851
    %v1853 = vpop.f32.mrb[0].mxu0
    %1854 = vmatprep.mubr.f32.mxu0 0.0
    %v1855 = vand.u32 %v97, 4294901760
    %v1856 = vsub.f32 %v97, %v1855
    %1857 = vmatmul.mubr.f32.gmra.mrb[0].mxu0 %v1856
    %v1858 = vpop.f32.mrb[0].mxu0
    %v1859 = vadd.f32 %v1323, %v1858
    %v1860 = vpop.f32.mrb[0].mxu0
    %1861 = vmatprep.mubr.f32.mxu0 0.0
    %v1862 = vand.u32 %v98, 4294901760
    %v1863 = vsub.f32 %v98, %v1862
    %1864 = vmatmul.mubr.f32.gmra.mrb[0].mxu0 %v1863
    %v1865 = vpop.f32.mrb[0].mxu0
    %v1866 = vadd.f32 %v1329, %v1865
    %v1867 = vpop.f32.mrb[0].mxu0
    %1868 = vmatprep.mubr.f32.mxu0 0.0
    %v1869 = vand.u32 %v99, 4294901760
    %v1870 = vsub.f32 %v99, %v1869
    %1871 = vmatmul.mubr.f32.gmra.mrb[0].mxu0 %v1870
    %v1872 = vpop.f32.mrb[0].mxu0
    %v1873 = vadd.f32 %v1335, %v1872
    %v1874 = vpop.f32.mrb[0].mxu0
    %1875 = vmatprep.mubr.f32.mxu0 0.0
    %v1876 = vand.u32 %v100, 4294901760
    %v1877 = vsub.f32 %v100, %v1876
    %1878 = vmatmul.mubr.f32.gmra.mrb[0].mxu0 %v1877
    %v1879 = vpop.f32.mrb[0].mxu0
    %v1880 = vadd.f32 %v1341, %v1879
    %v1881 = vpop.f32.mrb[0].mxu0
    %1882 = vmatprep.mubr.f32.mxu0 0.0
    %v1883 = vand.u32 %v101, 4294901760
    %v1884 = vsub.f32 %v101, %v1883
    %1885 = vmatmul.mubr.f32.gmra.mrb[0].mxu0 %v1884
    %v1886 = vpop.f32.mrb[0].mxu0
    %v1887 = vadd.f32 %v1347, %v1886
    %v1888 = vpop.f32.mrb[0].mxu0
    %1889 = vmatprep.mubr.f32.mxu0 0.0
    %v1890 = vand.u32 %v102, 4294901760
    %v1891 = vsub.f32 %v102, %v1890
    %1892 = vmatmul.mubr.f32.gmra.mrb[0].mxu0 %v1891
    %v1893 = vpop.f32.mrb[0].mxu0
    %v1894 = vadd.f32 %v1353, %v1893
    %v1895 = vpop.f32.mrb[0].mxu0
    %1896 = vmatprep.mubr.f32.mxu0 0.0
    %v1897 = vand.u32 %v103, 4294901760
    %v1898 = vsub.f32 %v103, %v1897
    %1899 = vmatmul.mubr.f32.gmra.mrb[0].mxu0 %v1898
    %v1900 = vpop.f32.mrb[0].mxu0
    %v1901 = vadd.f32 %v1359, %v1900
    %v1902 = vpop.f32.mrb[0].mxu0
    %1903 = vmatprep.mubr.f32.mxu0 0.0
    %v1904 = vand.u32 %v104, 4294901760
    %v1905 = vsub.f32 %v104, %v1904
    %1906 = vmatmul.mubr.f32.gmra.mrb[0].mxu0 %v1905
    %v1907 = vpop.f32.mrb[0].mxu0
    %v1908 = vadd.f32 %v1365, %v1907
    %v1909 = vpop.f32.mrb[0].mxu0
    %1910 = vmatprep.mubr.f32.mxu0 0.0
    %v1911 = vand.u32 %v105, 4294901760
    %v1912 = vsub.f32 %v105, %v1911
    %1913 = vmatmul.mubr.f32.gmra.mrb[0].mxu0 %v1912
    %v1914 = vpop.f32.mrb[0].mxu0
    %v1915 = vadd.f32 %v1371, %v1914
    %v1916 = vpop.f32.mrb[0].mxu0
    %1917 = vmatprep.mubr.f32.mxu0 0.0
    %v1918 = vand.u32 %v106, 4294901760
    %v1919 = vsub.f32 %v106, %v1918
    %1920 = vmatmul.mubr.f32.gmra.mrb[0].mxu0 %v1919
    %v1921 = vpop.f32.mrb[0].mxu0
    %v1922 = vadd.f32 %v1377, %v1921
    %v1923 = vpop.f32.mrb[0].mxu0
    %1924 = vdwg.mxu0
    %1925 = vmatprep.subr.mxu0 0.0
    %v1926 = vand.u32 %v107, 4294901760
    %1927 = vmatpush1.msra.mxu0 %v1926
    %1928 = vmatprep.subr.mxu0 0.0
    %v1929 = vand.u32 %v108, 4294901760
    %1930 = vmatpush1.msra.mxu0 %v1929
    %1931 = vmatprep.subr.mxu0 0.0
    %v1932 = vand.u32 %v109, 4294901760
    %1933 = vmatpush1.msra.mxu0 %v1932
    %1934 = vmatprep.subr.mxu0 0.0
    %v1935 = vand.u32 %v110, 4294901760
    %1936 = vmatpush1.msra.mxu0 %v1935
    %1937 = vmatprep.subr.mxu0 0.0
    %v1938 = vand.u32 %v111, 4294901760
    %1939 = vmatpush1.msra.mxu0 %v1938
    %1940 = vmatprep.subr.mxu0 0.0
    %v1941 = vand.u32 %v112, 4294901760
    %1942 = vmatpush1.msra.mxu0 %v1941
    %1943 = vmatprep.subr.mxu0 0.0
    %v1944 = vand.u32 %v113, 4294901760
    %1945 = vmatpush1.msra.mxu0 %v1944
    %1946 = vmatprep.subr.mxu0 0.0
    %v1947 = vand.u32 %v114, 4294901760
    %1948 = vmatpush1.msra.mxu0 %v1947
    %1949 = vmatprep.subr.mxu0 0.0
    %v1950 = vand.u32 %v115, 4294901760
    %1951 = vmatpush1.msra.mxu0 %v1950
    %1952 = vmatprep.subr.mxu0 0.0
    %v1953 = vand.u32 %v116, 4294901760
    %1954 = vmatpush1.msra.mxu0 %v1953
    %1955 = vmatprep.subr.mxu0 0.0
    %v1956 = vand.u32 %v117, 4294901760
    %1957 = vmatpush1.msra.mxu0 %v1956
    %1958 = vmatprep.subr.mxu0 0.0
    %v1959 = vand.u32 %v118, 4294901760
    %1960 = vmatpush1.msra.mxu0 %v1959
    %1961 = vmatprep.subr.mxu0 0.0
    %v1962 = vand.u32 %v119, 4294901760
    %1963 = vmatpush1.msra.mxu0 %v1962
    %1964 = vmatprep.subr.mxu0 0.0
    %v1965 = vand.u32 %v120, 4294901760
    %1966 = vmatpush1.msra.mxu0 %v1965
    %1967 = vmatprep.subr.mxu0 0.0
    %v1968 = vand.u32 %v121, 4294901760
    %1969 = vmatpush1.msra.mxu0 %v1968
    %1970 = vmatprep.subr.mxu0 0.0
    %v1971 = vand.u32 %v122, 4294901760
    %1972 = vmatpush1.msra.mxu0 %v1971
    %1973 = vmatprep.subr.mxu0 0.0
    %1974 = vmatpush1.msra.mxu0 0.0
    %1975 = vmatprep.subr.mxu0 0.0
    %1976 = vmatpush1.msra.mxu0 0.0
    %1977 = vmatprep.subr.mxu0 0.0
    %1978 = vmatpush1.msra.mxu0 0.0
    %1979 = vmatprep.subr.mxu0 0.0
    %1980 = vmatpush1.msra.mxu0 0.0
    %1981 = vmatprep.subr.mxu0 0.0
    %1982 = vmatpush1.msra.mxu0 0.0
    %1983 = vmatprep.subr.mxu0 0.0
    %1984 = vmatpush1.msra.mxu0 0.0
    %1985 = vmatprep.subr.mxu0 0.0
    %1986 = vmatpush1.msra.mxu0 0.0
    %1987 = vmatprep.subr.mxu0 0.0
    %1988 = vmatpush1.msra.mxu0 0.0
    %1989 = vmatprep.subr.mxu0 0.0
    %1990 = vmatpush1.msra.mxu0 0.0
    %1991 = vmatprep.subr.mxu0 0.0
    %1992 = vmatpush1.msra.mxu0 0.0
    %1993 = vmatprep.subr.mxu0 0.0
    %1994 = vmatpush1.msra.mxu0 0.0
    %1995 = vmatprep.subr.mxu0 0.0
    %1996 = vmatpush1.msra.mxu0 0.0
    %1997 = vmatprep.subr.mxu0 0.0
    %1998 = vmatpush1.msra.mxu0 0.0
    %1999 = vmatprep.subr.mxu0 0.0
    %2000 = vmatpush1.msra.mxu0 0.0
    %2001 = vmatprep.subr.mxu0 0.0
    %2002 = vmatpush1.msra.mxu0 0.0
    %2003 = vmatprep.subr.mxu0 0.0
    %2004 = vmatpush1.msra.mxu0 0.0
    %2005 = vmatprep.mubr.f32.mxu0 0.0
    %v2006 = vand.u32 %v43, 4294901760
    %v2007 = vsub.f32 %v43, %v2006
    %v2008 = vand.u32 %v2007, 4294901760
    %2009 = vmatmul.mubr.f32.gmra.mrb[0].mxu0 %v2008
    %v2010 = vpop.f32.mrb[0].mxu0
    %v2011 = vadd.f32 %v1481, %v2010
    %v2012 = vpop.f32.mrb[0].mxu0
    %2013 = vmatprep.mubr.f32.mxu0 0.0
    %v2014 = vand.u32 %v44, 4294901760
    %v2015 = vsub.f32 %v44, %v2014
    %v2016 = vand.u32 %v2015, 4294901760
    %2017 = vmatmul.mubr.f32.gmra.mrb[0].mxu0 %v2016
    %v2018 = vpop.f32.mrb[0].mxu0
    %v2019 = vadd.f32 %v1488, %v2018
    %v2020 = vpop.f32.mrb[0].mxu0
    %2021 = vmatprep.mubr.f32.mxu0 0.0
    %v2022 = vand.u32 %v45, 4294901760
    %v2023 = vsub.f32 %v45, %v2022
    %v2024 = vand.u32 %v2023, 4294901760
    %2025 = vmatmul.mubr.f32.gmra.mrb[0].mxu0 %v2024
    %v2026 = vpop.f32.mrb[0].mxu0
    %v2027 = vadd.f32 %v1495, %v2026
    %v2028 = vpop.f32.mrb[0].mxu0
    %2029 = vmatprep.mubr.f32.mxu0 0.0
    %v2030 = vand.u32 %v46, 4294901760
    %v2031 = vsub.f32 %v46, %v2030
    %v2032 = vand.u32 %v2031, 4294901760
    %2033 = vmatmul.mubr.f32.gmra.mrb[0].mxu0 %v2032
    %v2034 = vpop.f32.mrb[0].mxu0
    %v2035 = vadd.f32 %v1502, %v2034
    %v2036 = vpop.f32.mrb[0].mxu0
    %2037 = vmatprep.mubr.f32.mxu0 0.0
    %v2038 = vand.u32 %v47, 4294901760
    %v2039 = vsub.f32 %v47, %v2038
    %v2040 = vand.u32 %v2039, 4294901760
    %2041 = vmatmul.mubr.f32.gmra.mrb[0].mxu0 %v2040
    %v2042 = vpop.f32.mrb[0].mxu0
    %v2043 = vadd.f32 %v1509, %v2042
    %v2044 = vpop.f32.mrb[0].mxu0
    %2045 = vmatprep.mubr.f32.mxu0 0.0
    %v2046 = vand.u32 %v48, 4294901760
    %v2047 = vsub.f32 %v48, %v2046
    %v2048 = vand.u32 %v2047, 4294901760
    %2049 = vmatmul.mubr.f32.gmra.mrb[0].mxu0 %v2048
    %v2050 = vpop.f32.mrb[0].mxu0
    %v2051 = vadd.f32 %v1516, %v2050
    %v2052 = vpop.f32.mrb[0].mxu0
    %2053 = vmatprep.mubr.f32.mxu0 0.0
    %v2054 = vand.u32 %v49, 4294901760
    %v2055 = vsub.f32 %v49, %v2054
    %v2056 = vand.u32 %v2055, 4294901760
    %2057 = vmatmul.mubr.f32.gmra.mrb[0].mxu0 %v2056
    %v2058 = vpop.f32.mrb[0].mxu0
    %v2059 = vadd.f32 %v1523, %v2058
    %v2060 = vpop.f32.mrb[0].mxu0
    %2061 = vmatprep.mubr.f32.mxu0 0.0
    %v2062 = vand.u32 %v50, 4294901760
    %v2063 = vsub.f32 %v50, %v2062
    %v2064 = vand.u32 %v2063, 4294901760
    %2065 = vmatmul.mubr.f32.gmra.mrb[0].mxu0 %v2064
    %v2066 = vpop.f32.mrb[0].mxu0
    %v2067 = vadd.f32 %v1530, %v2066
    %v2068 = vpop.f32.mrb[0].mxu0
    %2069 = vmatprep.mubr.f32.mxu0 0.0
    %v2070 = vand.u32 %v51, 4294901760
    %v2071 = vsub.f32 %v51, %v2070
    %v2072 = vand.u32 %v2071, 4294901760
    %2073 = vmatmul.mubr.f32.gmra.mrb[0].mxu0 %v2072
    %v2074 = vpop.f32.mrb[0].mxu0
    %v2075 = vadd.f32 %v1537, %v2074
    %v2076 = vpop.f32.mrb[0].mxu0
    %2077 = vmatprep.mubr.f32.mxu0 0.0
    %v2078 = vand.u32 %v52, 4294901760
    %v2079 = vsub.f32 %v52, %v2078
    %v2080 = vand.u32 %v2079, 4294901760
    %2081 = vmatmul.mubr.f32.gmra.mrb[0].mxu0 %v2080
    %v2082 = vpop.f32.mrb[0].mxu0
    %v2083 = vadd.f32 %v1544, %v2082
    %v2084 = vpop.f32.mrb[0].mxu0
    %2085 = vmatprep.mubr.f32.mxu0 0.0
    %v2086 = vand.u32 %v53, 4294901760
    %v2087 = vsub.f32 %v53, %v2086
    %v2088 = vand.u32 %v2087, 4294901760
    %2089 = vmatmul.mubr.f32.gmra.mrb[0].mxu0 %v2088
    %v2090 = vpop.f32.mrb[0].mxu0
    %v2091 = vadd.f32 %v1551, %v2090
    %v2092 = vpop.f32.mrb[0].mxu0
    %2093 = vmatprep.mubr.f32.mxu0 0.0
    %v2094 = vand.u32 %v54, 4294901760
    %v2095 = vsub.f32 %v54, %v2094
    %v2096 = vand.u32 %v2095, 4294901760
    %2097 = vmatmul.mubr.f32.gmra.mrb[0].mxu0 %v2096
    %v2098 = vpop.f32.mrb[0].mxu0
    %v2099 = vadd.f32 %v1558, %v2098
    %v2100 = vpop.f32.mrb[0].mxu0
    %2101 = vmatprep.mubr.f32.mxu0 0.0
    %v2102 = vand.u32 %v55, 4294901760
    %v2103 = vsub.f32 %v55, %v2102
    %v2104 = vand.u32 %v2103, 4294901760
    %2105 = vmatmul.mubr.f32.gmra.mrb[0].mxu0 %v2104
    %v2106 = vpop.f32.mrb[0].mxu0
    %v2107 = vadd.f32 %v1565, %v2106
    %v2108 = vpop.f32.mrb[0].mxu0
    %2109 = vmatprep.mubr.f32.mxu0 0.0
    %v2110 = vand.u32 %v56, 4294901760
    %v2111 = vsub.f32 %v56, %v2110
    %v2112 = vand.u32 %v2111, 4294901760
    %2113 = vmatmul.mubr.f32.gmra.mrb[0].mxu0 %v2112
    %v2114 = vpop.f32.mrb[0].mxu0
    %v2115 = vadd.f32 %v1572, %v2114
    %v2116 = vpop.f32.mrb[0].mxu0
    %2117 = vmatprep.mubr.f32.mxu0 0.0
    %v2118 = vand.u32 %v57, 4294901760
    %v2119 = vsub.f32 %v57, %v2118
    %v2120 = vand.u32 %v2119, 4294901760
    %2121 = vmatmul.mubr.f32.gmra.mrb[0].mxu0 %v2120
    %v2122 = vpop.f32.mrb[0].mxu0
    %v2123 = vadd.f32 %v1579, %v2122
    %v2124 = vpop.f32.mrb[0].mxu0
    %2125 = vmatprep.mubr.f32.mxu0 0.0
    %v2126 = vand.u32 %v58, 4294901760
    %v2127 = vsub.f32 %v58, %v2126
    %v2128 = vand.u32 %v2127, 4294901760
    %2129 = vmatmul.mubr.f32.gmra.mrb[0].mxu0 %v2128
    %v2130 = vpop.f32.mrb[0].mxu0
    %v2131 = vadd.f32 %v1586, %v2130
    %v2132 = vpop.f32.mrb[0].mxu0
    %2133 = vmatprep.mubr.f32.mxu0 0.0
    %v2134 = vand.u32 %v59, 4294901760
    %v2135 = vsub.f32 %v59, %v2134
    %v2136 = vand.u32 %v2135, 4294901760
    %2137 = vmatmul.mubr.f32.gmra.mrb[0].mxu0 %v2136
    %v2138 = vpop.f32.mrb[0].mxu0
    %v2139 = vadd.f32 %v1593, %v2138
    %v2140 = vpop.f32.mrb[0].mxu0
    %2141 = vmatprep.mubr.f32.mxu0 0.0
    %v2142 = vand.u32 %v60, 4294901760
    %v2143 = vsub.f32 %v60, %v2142
    %v2144 = vand.u32 %v2143, 4294901760
    %2145 = vmatmul.mubr.f32.gmra.mrb[0].mxu0 %v2144
    %v2146 = vpop.f32.mrb[0].mxu0
    %v2147 = vadd.f32 %v1600, %v2146
    %v2148 = vpop.f32.mrb[0].mxu0
    %2149 = vmatprep.mubr.f32.mxu0 0.0
    %v2150 = vand.u32 %v61, 4294901760
    %v2151 = vsub.f32 %v61, %v2150
    %v2152 = vand.u32 %v2151, 4294901760
    %2153 = vmatmul.mubr.f32.gmra.mrb[0].mxu0 %v2152
    %v2154 = vpop.f32.mrb[0].mxu0
    %v2155 = vadd.f32 %v1607, %v2154
    %v2156 = vpop.f32.mrb[0].mxu0
    %2157 = vmatprep.mubr.f32.mxu0 0.0
    %v2158 = vand.u32 %v62, 4294901760
    %v2159 = vsub.f32 %v62, %v2158
    %v2160 = vand.u32 %v2159, 4294901760
    %2161 = vmatmul.mubr.f32.gmra.mrb[0].mxu0 %v2160
    %v2162 = vpop.f32.mrb[0].mxu0
    %v2163 = vadd.f32 %v1614, %v2162
    %v2164 = vpop.f32.mrb[0].mxu0
    %2165 = vmatprep.mubr.f32.mxu0 0.0
    %v2166 = vand.u32 %v63, 4294901760
    %v2167 = vsub.f32 %v63, %v2166
    %v2168 = vand.u32 %v2167, 4294901760
    %2169 = vmatmul.mubr.f32.gmra.mrb[0].mxu0 %v2168
    %v2170 = vpop.f32.mrb[0].mxu0
    %v2171 = vadd.f32 %v1621, %v2170
    %v2172 = vpop.f32.mrb[0].mxu0
    %2173 = vmatprep.mubr.f32.mxu0 0.0
    %v2174 = vand.u32 %v64, 4294901760
    %v2175 = vsub.f32 %v64, %v2174
    %v2176 = vand.u32 %v2175, 4294901760
    %2177 = vmatmul.mubr.f32.gmra.mrb[0].mxu0 %v2176
    %v2178 = vpop.f32.mrb[0].mxu0
    %v2179 = vadd.f32 %v1628, %v2178
    %v2180 = vpop.f32.mrb[0].mxu0
    %2181 = vmatprep.mubr.f32.mxu0 0.0
    %v2182 = vand.u32 %v65, 4294901760
    %v2183 = vsub.f32 %v65, %v2182
    %v2184 = vand.u32 %v2183, 4294901760
    %2185 = vmatmul.mubr.f32.gmra.mrb[0].mxu0 %v2184
    %v2186 = vpop.f32.mrb[0].mxu0
    %v2187 = vadd.f32 %v1635, %v2186
    %v2188 = vpop.f32.mrb[0].mxu0
    %2189 = vmatprep.mubr.f32.mxu0 0.0
    %v2190 = vand.u32 %v66, 4294901760
    %v2191 = vsub.f32 %v66, %v2190
    %v2192 = vand.u32 %v2191, 4294901760
    %2193 = vmatmul.mubr.f32.gmra.mrb[0].mxu0 %v2192
    %v2194 = vpop.f32.mrb[0].mxu0
    %v2195 = vadd.f32 %v1642, %v2194
    %v2196 = vpop.f32.mrb[0].mxu0
    %2197 = vmatprep.mubr.f32.mxu0 0.0
    %v2198 = vand.u32 %v67, 4294901760
    %v2199 = vsub.f32 %v67, %v2198
    %v2200 = vand.u32 %v2199, 4294901760
    %2201 = vmatmul.mubr.f32.gmra.mrb[0].mxu0 %v2200
    %v2202 = vpop.f32.mrb[0].mxu0
    %v2203 = vadd.f32 %v1649, %v2202
    %v2204 = vpop.f32.mrb[0].mxu0
    %2205 = vmatprep.mubr.f32.mxu0 0.0
    %v2206 = vand.u32 %v68, 4294901760
    %v2207 = vsub.f32 %v68, %v2206
    %v2208 = vand.u32 %v2207, 4294901760
    %2209 = vmatmul.mubr.f32.gmra.mrb[0].mxu0 %v2208
    %v2210 = vpop.f32.mrb[0].mxu0
    %v2211 = vadd.f32 %v1656, %v2210
    %v2212 = vpop.f32.mrb[0].mxu0
    %2213 = vmatprep.mubr.f32.mxu0 0.0
    %v2214 = vand.u32 %v69, 4294901760
    %v2215 = vsub.f32 %v69, %v2214
    %v2216 = vand.u32 %v2215, 4294901760
    %2217 = vmatmul.mubr.f32.gmra.mrb[0].mxu0 %v2216
    %v2218 = vpop.f32.mrb[0].mxu0
    %v2219 = vadd.f32 %v1663, %v2218
    %v2220 = vpop.f32.mrb[0].mxu0
    %2221 = vmatprep.mubr.f32.mxu0 0.0
    %v2222 = vand.u32 %v70, 4294901760
    %v2223 = vsub.f32 %v70, %v2222
    %v2224 = vand.u32 %v2223, 4294901760
    %2225 = vmatmul.mubr.f32.gmra.mrb[0].mxu0 %v2224
    %v2226 = vpop.f32.mrb[0].mxu0
    %v2227 = vadd.f32 %v1670, %v2226
    %v2228 = vpop.f32.mrb[0].mxu0
    %2229 = vmatprep.mubr.f32.mxu0 0.0
    %v2230 = vand.u32 %v71, 4294901760
    %v2231 = vsub.f32 %v71, %v2230
    %v2232 = vand.u32 %v2231, 4294901760
    %2233 = vmatmul.mubr.f32.gmra.mrb[0].mxu0 %v2232
    %v2234 = vpop.f32.mrb[0].mxu0
    %v2235 = vadd.f32 %v1677, %v2234
    %v2236 = vpop.f32.mrb[0].mxu0
    %2237 = vmatprep.mubr.f32.mxu0 0.0
    %v2238 = vand.u32 %v72, 4294901760
    %v2239 = vsub.f32 %v72, %v2238
    %v2240 = vand.u32 %v2239, 4294901760
    %2241 = vmatmul.mubr.f32.gmra.mrb[0].mxu0 %v2240
    %v2242 = vpop.f32.mrb[0].mxu0
    %v2243 = vadd.f32 %v1684, %v2242
    %v2244 = vpop.f32.mrb[0].mxu0
    %2245 = vmatprep.mubr.f32.mxu0 0.0
    %v2246 = vand.u32 %v73, 4294901760
    %v2247 = vsub.f32 %v73, %v2246
    %v2248 = vand.u32 %v2247, 4294901760
    %2249 = vmatmul.mubr.f32.gmra.mrb[0].mxu0 %v2248
    %v2250 = vpop.f32.mrb[0].mxu0
    %v2251 = vadd.f32 %v1691, %v2250
    %v2252 = vpop.f32.mrb[0].mxu0
    %2253 = vmatprep.mubr.f32.mxu0 0.0
    %v2254 = vand.u32 %v74, 4294901760
    %v2255 = vsub.f32 %v74, %v2254
    %v2256 = vand.u32 %v2255, 4294901760
    %2257 = vmatmul.mubr.f32.gmra.mrb[0].mxu0 %v2256
    %v2258 = vpop.f32.mrb[0].mxu0
    %v2259 = vadd.f32 %v1698, %v2258
    %v2260 = vpop.f32.mrb[0].mxu0
    %2261 = vmatprep.mubr.f32.mxu0 0.0
    %v2262 = vand.u32 %v75, 4294901760
    %v2263 = vsub.f32 %v75, %v2262
    %v2264 = vand.u32 %v2263, 4294901760
    %2265 = vmatmul.mubr.f32.gmra.mrb[0].mxu0 %v2264
    %v2266 = vpop.f32.mrb[0].mxu0
    %v2267 = vadd.f32 %v1705, %v2266
    %v2268 = vpop.f32.mrb[0].mxu0
    %2269 = vmatprep.mubr.f32.mxu0 0.0
    %v2270 = vand.u32 %v76, 4294901760
    %v2271 = vsub.f32 %v76, %v2270
    %v2272 = vand.u32 %v2271, 4294901760
    %2273 = vmatmul.mubr.f32.gmra.mrb[0].mxu0 %v2272
    %v2274 = vpop.f32.mrb[0].mxu0
    %v2275 = vadd.f32 %v1712, %v2274
    %v2276 = vpop.f32.mrb[0].mxu0
    %2277 = vmatprep.mubr.f32.mxu0 0.0
    %v2278 = vand.u32 %v77, 4294901760
    %v2279 = vsub.f32 %v77, %v2278
    %v2280 = vand.u32 %v2279, 4294901760
    %2281 = vmatmul.mubr.f32.gmra.mrb[0].mxu0 %v2280
    %v2282 = vpop.f32.mrb[0].mxu0
    %v2283 = vadd.f32 %v1719, %v2282
    %v2284 = vpop.f32.mrb[0].mxu0
    %2285 = vmatprep.mubr.f32.mxu0 0.0
    %v2286 = vand.u32 %v78, 4294901760
    %v2287 = vsub.f32 %v78, %v2286
    %v2288 = vand.u32 %v2287, 4294901760
    %2289 = vmatmul.mubr.f32.gmra.mrb[0].mxu0 %v2288
    %v2290 = vpop.f32.mrb[0].mxu0
    %v2291 = vadd.f32 %v1726, %v2290
    %v2292 = vpop.f32.mrb[0].mxu0
    %2293 = vmatprep.mubr.f32.mxu0 0.0
    %v2294 = vand.u32 %v79, 4294901760
    %v2295 = vsub.f32 %v79, %v2294
    %v2296 = vand.u32 %v2295, 4294901760
    %2297 = vmatmul.mubr.f32.gmra.mrb[0].mxu0 %v2296
    %v2298 = vpop.f32.mrb[0].mxu0
    %v2299 = vadd.f32 %v1733, %v2298
    %v2300 = vpop.f32.mrb[0].mxu0
    %2301 = vmatprep.mubr.f32.mxu0 0.0
    %v2302 = vand.u32 %v80, 4294901760
    %v2303 = vsub.f32 %v80, %v2302
    %v2304 = vand.u32 %v2303, 4294901760
    %2305 = vmatmul.mubr.f32.gmra.mrb[0].mxu0 %v2304
    %v2306 = vpop.f32.mrb[0].mxu0
    %v2307 = vadd.f32 %v1740, %v2306
    %v2308 = vpop.f32.mrb[0].mxu0
    %2309 = vmatprep.mubr.f32.mxu0 0.0
    %v2310 = vand.u32 %v81, 4294901760
    %v2311 = vsub.f32 %v81, %v2310
    %v2312 = vand.u32 %v2311, 4294901760
    %2313 = vmatmul.mubr.f32.gmra.mrb[0].mxu0 %v2312
    %v2314 = vpop.f32.mrb[0].mxu0
    %v2315 = vadd.f32 %v1747, %v2314
    %v2316 = vpop.f32.mrb[0].mxu0
    %2317 = vmatprep.mubr.f32.mxu0 0.0
    %v2318 = vand.u32 %v82, 4294901760
    %v2319 = vsub.f32 %v82, %v2318
    %v2320 = vand.u32 %v2319, 4294901760
    %2321 = vmatmul.mubr.f32.gmra.mrb[0].mxu0 %v2320
    %v2322 = vpop.f32.mrb[0].mxu0
    %v2323 = vadd.f32 %v1754, %v2322
    %v2324 = vpop.f32.mrb[0].mxu0
    %2325 = vmatprep.mubr.f32.mxu0 0.0
    %v2326 = vand.u32 %v83, 4294901760
    %v2327 = vsub.f32 %v83, %v2326
    %v2328 = vand.u32 %v2327, 4294901760
    %2329 = vmatmul.mubr.f32.gmra.mrb[0].mxu0 %v2328
    %v2330 = vpop.f32.mrb[0].mxu0
    %v2331 = vadd.f32 %v1761, %v2330
    %v2332 = vpop.f32.mrb[0].mxu0
    %2333 = vmatprep.mubr.f32.mxu0 0.0
    %v2334 = vand.u32 %v84, 4294901760
    %v2335 = vsub.f32 %v84, %v2334
    %v2336 = vand.u32 %v2335, 4294901760
    %2337 = vmatmul.mubr.f32.gmra.mrb[0].mxu0 %v2336
    %v2338 = vpop.f32.mrb[0].mxu0
    %v2339 = vadd.f32 %v1768, %v2338
    %v2340 = vpop.f32.mrb[0].mxu0
    %2341 = vmatprep.mubr.f32.mxu0 0.0
    %v2342 = vand.u32 %v85, 4294901760
    %v2343 = vsub.f32 %v85, %v2342
    %v2344 = vand.u32 %v2343, 4294901760
    %2345 = vmatmul.mubr.f32.gmra.mrb[0].mxu0 %v2344
    %v2346 = vpop.f32.mrb[0].mxu0
    %v2347 = vadd.f32 %v1775, %v2346
    %v2348 = vpop.f32.mrb[0].mxu0
    %2349 = vmatprep.mubr.f32.mxu0 0.0
    %v2350 = vand.u32 %v86, 4294901760
    %v2351 = vsub.f32 %v86, %v2350
    %v2352 = vand.u32 %v2351, 4294901760
    %2353 = vmatmul.mubr.f32.gmra.mrb[0].mxu0 %v2352
    %v2354 = vpop.f32.mrb[0].mxu0
    %v2355 = vadd.f32 %v1782, %v2354
    %v2356 = vpop.f32.mrb[0].mxu0
    %2357 = vmatprep.mubr.f32.mxu0 0.0
    %v2358 = vand.u32 %v87, 4294901760
    %v2359 = vsub.f32 %v87, %v2358
    %v2360 = vand.u32 %v2359, 4294901760
    %2361 = vmatmul.mubr.f32.gmra.mrb[0].mxu0 %v2360
    %v2362 = vpop.f32.mrb[0].mxu0
    %v2363 = vadd.f32 %v1789, %v2362
    %v2364 = vpop.f32.mrb[0].mxu0
    %2365 = vmatprep.mubr.f32.mxu0 0.0
    %v2366 = vand.u32 %v88, 4294901760
    %v2367 = vsub.f32 %v88, %v2366
    %v2368 = vand.u32 %v2367, 4294901760
    %2369 = vmatmul.mubr.f32.gmra.mrb[0].mxu0 %v2368
    %v2370 = vpop.f32.mrb[0].mxu0
    %v2371 = vadd.f32 %v1796, %v2370
    %v2372 = vpop.f32.mrb[0].mxu0
    %2373 = vmatprep.mubr.f32.mxu0 0.0
    %v2374 = vand.u32 %v89, 4294901760
    %v2375 = vsub.f32 %v89, %v2374
    %v2376 = vand.u32 %v2375, 4294901760
    %2377 = vmatmul.mubr.f32.gmra.mrb[0].mxu0 %v2376
    %v2378 = vpop.f32.mrb[0].mxu0
    %v2379 = vadd.f32 %v1803, %v2378
    %v2380 = vpop.f32.mrb[0].mxu0
    %2381 = vmatprep.mubr.f32.mxu0 0.0
    %v2382 = vand.u32 %v90, 4294901760
    %v2383 = vsub.f32 %v90, %v2382
    %v2384 = vand.u32 %v2383, 4294901760
    %2385 = vmatmul.mubr.f32.gmra.mrb[0].mxu0 %v2384
    %v2386 = vpop.f32.mrb[0].mxu0
    %v2387 = vadd.f32 %v1810, %v2386
    %v2388 = vpop.f32.mrb[0].mxu0
    %2389 = vmatprep.mubr.f32.mxu0 0.0
    %v2390 = vand.u32 %v91, 4294901760
    %v2391 = vsub.f32 %v91, %v2390
    %v2392 = vand.u32 %v2391, 4294901760
    %2393 = vmatmul.mubr.f32.gmra.mrb[0].mxu0 %v2392
    %v2394 = vpop.f32.mrb[0].mxu0
    %v2395 = vadd.f32 %v1817, %v2394
    %v2396 = vpop.f32.mrb[0].mxu0
    %2397 = vmatprep.mubr.f32.mxu0 0.0
    %v2398 = vand.u32 %v92, 4294901760
    %v2399 = vsub.f32 %v92, %v2398
    %v2400 = vand.u32 %v2399, 4294901760
    %2401 = vmatmul.mubr.f32.gmra.mrb[0].mxu0 %v2400
    %v2402 = vpop.f32.mrb[0].mxu0
    %v2403 = vadd.f32 %v1824, %v2402
    %v2404 = vpop.f32.mrb[0].mxu0
    %2405 = vmatprep.mubr.f32.mxu0 0.0
    %v2406 = vand.u32 %v93, 4294901760
    %v2407 = vsub.f32 %v93, %v2406
    %v2408 = vand.u32 %v2407, 4294901760
    %2409 = vmatmul.mubr.f32.gmra.mrb[0].mxu0 %v2408
    %v2410 = vpop.f32.mrb[0].mxu0
    %v2411 = vadd.f32 %v1831, %v2410
    %v2412 = vpop.f32.mrb[0].mxu0
    %2413 = vmatprep.mubr.f32.mxu0 0.0
    %v2414 = vand.u32 %v94, 4294901760
    %v2415 = vsub.f32 %v94, %v2414
    %v2416 = vand.u32 %v2415, 4294901760
    %2417 = vmatmul.mubr.f32.gmra.mrb[0].mxu0 %v2416
    %v2418 = vpop.f32.mrb[0].mxu0
    %v2419 = vadd.f32 %v1838, %v2418
    %v2420 = vpop.f32.mrb[0].mxu0
    %2421 = vmatprep.mubr.f32.mxu0 0.0
    %v2422 = vand.u32 %v95, 4294901760
    %v2423 = vsub.f32 %v95, %v2422
    %v2424 = vand.u32 %v2423, 4294901760
    %2425 = vmatmul.mubr.f32.gmra.mrb[0].mxu0 %v2424
    %v2426 = vpop.f32.mrb[0].mxu0
    %v2427 = vadd.f32 %v1845, %v2426
    %v2428 = vpop.f32.mrb[0].mxu0
    %2429 = vmatprep.mubr.f32.mxu0 0.0
    %v2430 = vand.u32 %v96, 4294901760
    %v2431 = vsub.f32 %v96, %v2430
    %v2432 = vand.u32 %v2431, 4294901760
    %2433 = vmatmul.mubr.f32.gmra.mrb[0].mxu0 %v2432
    %v2434 = vpop.f32.mrb[0].mxu0
    %v2435 = vadd.f32 %v1852, %v2434
    %v2436 = vpop.f32.mrb[0].mxu0
    %2437 = vmatprep.mubr.f32.mxu0 0.0
    %v2438 = vand.u32 %v97, 4294901760
    %v2439 = vsub.f32 %v97, %v2438
    %v2440 = vand.u32 %v2439, 4294901760
    %2441 = vmatmul.mubr.f32.gmra.mrb[0].mxu0 %v2440
    %v2442 = vpop.f32.mrb[0].mxu0
    %v2443 = vadd.f32 %v1859, %v2442
    %v2444 = vpop.f32.mrb[0].mxu0
    %2445 = vmatprep.mubr.f32.mxu0 0.0
    %v2446 = vand.u32 %v98, 4294901760
    %v2447 = vsub.f32 %v98, %v2446
    %v2448 = vand.u32 %v2447, 4294901760
    %2449 = vmatmul.mubr.f32.gmra.mrb[0].mxu0 %v2448
    %v2450 = vpop.f32.mrb[0].mxu0
    %v2451 = vadd.f32 %v1866, %v2450
    %v2452 = vpop.f32.mrb[0].mxu0
    %2453 = vmatprep.mubr.f32.mxu0 0.0
    %v2454 = vand.u32 %v99, 4294901760
    %v2455 = vsub.f32 %v99, %v2454
    %v2456 = vand.u32 %v2455, 4294901760
    %2457 = vmatmul.mubr.f32.gmra.mrb[0].mxu0 %v2456
    %v2458 = vpop.f32.mrb[0].mxu0
    %v2459 = vadd.f32 %v1873, %v2458
    %v2460 = vpop.f32.mrb[0].mxu0
    %2461 = vmatprep.mubr.f32.mxu0 0.0
    %v2462 = vand.u32 %v100, 4294901760
    %v2463 = vsub.f32 %v100, %v2462
    %v2464 = vand.u32 %v2463, 4294901760
    %2465 = vmatmul.mubr.f32.gmra.mrb[0].mxu0 %v2464
    %v2466 = vpop.f32.mrb[0].mxu0
    %v2467 = vadd.f32 %v1880, %v2466
    %v2468 = vpop.f32.mrb[0].mxu0
    %2469 = vmatprep.mubr.f32.mxu0 0.0
    %v2470 = vand.u32 %v101, 4294901760
    %v2471 = vsub.f32 %v101, %v2470
    %v2472 = vand.u32 %v2471, 4294901760
    %2473 = vmatmul.mubr.f32.gmra.mrb[0].mxu0 %v2472
    %v2474 = vpop.f32.mrb[0].mxu0
    %v2475 = vadd.f32 %v1887, %v2474
    %v2476 = vpop.f32.mrb[0].mxu0
    %2477 = vmatprep.mubr.f32.mxu0 0.0
    %v2478 = vand.u32 %v102, 4294901760
    %v2479 = vsub.f32 %v102, %v2478
    %v2480 = vand.u32 %v2479, 4294901760
    %2481 = vmatmul.mubr.f32.gmra.mrb[0].mxu0 %v2480
    %v2482 = vpop.f32.mrb[0].mxu0
    %v2483 = vadd.f32 %v1894, %v2482
    %v2484 = vpop.f32.mrb[0].mxu0
    %2485 = vmatprep.mubr.f32.mxu0 0.0
    %v2486 = vand.u32 %v103, 4294901760
    %v2487 = vsub.f32 %v103, %v2486
    %v2488 = vand.u32 %v2487, 4294901760
    %2489 = vmatmul.mubr.f32.gmra.mrb[0].mxu0 %v2488
    %v2490 = vpop.f32.mrb[0].mxu0
    %v2491 = vadd.f32 %v1901, %v2490
    %v2492 = vpop.f32.mrb[0].mxu0
    %2493 = vmatprep.mubr.f32.mxu0 0.0
    %v2494 = vand.u32 %v104, 4294901760
    %v2495 = vsub.f32 %v104, %v2494
    %v2496 = vand.u32 %v2495, 4294901760
    %2497 = vmatmul.mubr.f32.gmra.mrb[0].mxu0 %v2496
    %v2498 = vpop.f32.mrb[0].mxu0
    %v2499 = vadd.f32 %v1908, %v2498
    %v2500 = vpop.f32.mrb[0].mxu0
    %2501 = vmatprep.mubr.f32.mxu0 0.0
    %v2502 = vand.u32 %v105, 4294901760
    %v2503 = vsub.f32 %v105, %v2502
    %v2504 = vand.u32 %v2503, 4294901760
    %2505 = vmatmul.mubr.f32.gmra.mrb[0].mxu0 %v2504
    %v2506 = vpop.f32.mrb[0].mxu0
    %v2507 = vadd.f32 %v1915, %v2506
    %v2508 = vpop.f32.mrb[0].mxu0
    %2509 = vmatprep.mubr.f32.mxu0 0.0
    %v2510 = vand.u32 %v106, 4294901760
    %v2511 = vsub.f32 %v106, %v2510
    %v2512 = vand.u32 %v2511, 4294901760
    %2513 = vmatmul.mubr.f32.gmra.mrb[0].mxu0 %v2512
    %v2514 = vpop.f32.mrb[0].mxu0
    %v2515 = vadd.f32 %v1922, %v2514
    %v2516 = vpop.f32.mrb[0].mxu0
    %2517 = vdwg.mxu0
    %2518 = vmatprep.subr.mxu0 0.0
    %v2519 = vand.u32 %v107, 4294901760
    %v2520 = vsub.f32 %v107, %v2519
    %v2521 = vand.u32 %v2520, 4294901760
    %2522 = vmatpush1.msra.mxu0 %v2521
    %2523 = vmatprep.subr.mxu0 0.0
    %v2524 = vand.u32 %v108, 4294901760
    %v2525 = vsub.f32 %v108, %v2524
    %v2526 = vand.u32 %v2525, 4294901760
    %2527 = vmatpush1.msra.mxu0 %v2526
    %2528 = vmatprep.subr.mxu0 0.0
    %v2529 = vand.u32 %v109, 4294901760
    %v2530 = vsub.f32 %v109, %v2529
    %v2531 = vand.u32 %v2530, 4294901760
    %2532 = vmatpush1.msra.mxu0 %v2531
    %2533 = vmatprep.subr.mxu0 0.0
    %v2534 = vand.u32 %v110, 4294901760
    %v2535 = vsub.f32 %v110, %v2534
    %v2536 = vand.u32 %v2535, 4294901760
    %2537 = vmatpush1.msra.mxu0 %v2536
    %2538 = vmatprep.subr.mxu0 0.0
    %v2539 = vand.u32 %v111, 4294901760
    %v2540 = vsub.f32 %v111, %v2539
    %v2541 = vand.u32 %v2540, 4294901760
    %2542 = vmatpush1.msra.mxu0 %v2541
    %2543 = vmatprep.subr.mxu0 0.0
    %v2544 = vand.u32 %v112, 4294901760
    %v2545 = vsub.f32 %v112, %v2544
    %v2546 = vand.u32 %v2545, 4294901760
    %2547 = vmatpush1.msra.mxu0 %v2546
    %2548 = vmatprep.subr.mxu0 0.0
    %v2549 = vand.u32 %v113, 4294901760
    %v2550 = vsub.f32 %v113, %v2549
    %v2551 = vand.u32 %v2550, 4294901760
    %2552 = vmatpush1.msra.mxu0 %v2551
    %2553 = vmatprep.subr.mxu0 0.0
    %v2554 = vand.u32 %v114, 4294901760
    %v2555 = vsub.f32 %v114, %v2554
    %v2556 = vand.u32 %v2555, 4294901760
    %2557 = vmatpush1.msra.mxu0 %v2556
    %2558 = vmatprep.subr.mxu0 0.0
    %v2559 = vand.u32 %v115, 4294901760
    %v2560 = vsub.f32 %v115, %v2559
    %v2561 = vand.u32 %v2560, 4294901760
    %2562 = vmatpush1.msra.mxu0 %v2561
    %2563 = vmatprep.subr.mxu0 0.0
    %v2564 = vand.u32 %v116, 4294901760
    %v2565 = vsub.f32 %v116, %v2564
    %v2566 = vand.u32 %v2565, 4294901760
    %2567 = vmatpush1.msra.mxu0 %v2566
    %2568 = vmatprep.subr.mxu0 0.0
    %v2569 = vand.u32 %v117, 4294901760
    %v2570 = vsub.f32 %v117, %v2569
    %v2571 = vand.u32 %v2570, 4294901760
    %2572 = vmatpush1.msra.mxu0 %v2571
    %2573 = vmatprep.subr.mxu0 0.0
    %v2574 = vand.u32 %v118, 4294901760
    %v2575 = vsub.f32 %v118, %v2574
    %v2576 = vand.u32 %v2575, 4294901760
    %2577 = vmatpush1.msra.mxu0 %v2576
    %2578 = vmatprep.subr.mxu0 0.0
    %v2579 = vand.u32 %v119, 4294901760
    %v2580 = vsub.f32 %v119, %v2579
    %v2581 = vand.u32 %v2580, 4294901760
    %2582 = vmatpush1.msra.mxu0 %v2581
    %2583 = vmatprep.subr.mxu0 0.0
    %v2584 = vand.u32 %v120, 4294901760
    %v2585 = vsub.f32 %v120, %v2584
    %v2586 = vand.u32 %v2585, 4294901760
    %2587 = vmatpush1.msra.mxu0 %v2586
    %2588 = vmatprep.subr.mxu0 0.0
    %v2589 = vand.u32 %v121, 4294901760
    %v2590 = vsub.f32 %v121, %v2589
    %v2591 = vand.u32 %v2590, 4294901760
    %2592 = vmatpush1.msra.mxu0 %v2591
    %2593 = vmatprep.subr.mxu0 0.0
    %v2594 = vand.u32 %v122, 4294901760
    %v2595 = vsub.f32 %v122, %v2594
    %v2596 = vand.u32 %v2595, 4294901760
    %2597 = vmatpush1.msra.mxu0 %v2596
    %2598 = vmatprep.subr.mxu0 0.0
    %2599 = vmatpush1.msra.mxu0 0.0
    %2600 = vmatprep.subr.mxu0 0.0
    %2601 = vmatpush1.msra.mxu0 0.0
    %2602 = vmatprep.subr.mxu0 0.0
    %2603 = vmatpush1.msra.mxu0 0.0
    %2604 = vmatprep.subr.mxu0 0.0
    %2605 = vmatpush1.msra.mxu0 0.0
    %2606 = vmatprep.subr.mxu0 0.0
    %2607 = vmatpush1.msra.mxu0 0.0
    %2608 = vmatprep.subr.mxu0 0.0
    %2609 = vmatpush1.msra.mxu0 0.0
    %2610 = vmatprep.subr.mxu0 0.0
    %2611 = vmatpush1.msra.mxu0 0.0
    %2612 = vmatprep.subr.mxu0 0.0
    %2613 = vmatpush1.msra.mxu0 0.0
    %2614 = vmatprep.subr.mxu0 0.0
    %2615 = vmatpush1.msra.mxu0 0.0
    %2616 = vmatprep.subr.mxu0 0.0
    %2617 = vmatpush1.msra.mxu0 0.0
    %2618 = vmatprep.subr.mxu0 0.0
    %2619 = vmatpush1.msra.mxu0 0.0
    %2620 = vmatprep.subr.mxu0 0.0
    %2621 = vmatpush1.msra.mxu0 0.0
    %2622 = vmatprep.subr.mxu0 0.0
    %2623 = vmatpush1.msra.mxu0 0.0
    %2624 = vmatprep.subr.mxu0 0.0
    %2625 = vmatpush1.msra.mxu0 0.0
    %2626 = vmatprep.subr.mxu0 0.0
    %2627 = vmatpush1.msra.mxu0 0.0
    %2628 = vmatprep.subr.mxu0 0.0
    %2629 = vmatpush1.msra.mxu0 0.0
    %2630 = vmatprep.mubr.f32.mxu0 0.0
    %v2631 = vand.u32 %v43, 4294901760
    %2632 = vmatmul.mubr.f32.gmra.mrb[0].mxu0 %v2631
    %v2633 = vpop.f32.mrb[0].mxu0
    %v2634 = vadd.f32 %v2011, %v2633
    %v2635 = vpop.f32.mrb[0].mxu0
    %2636 = vmatprep.mubr.f32.mxu0 0.0
    %v2637 = vand.u32 %v44, 4294901760
    %2638 = vmatmul.mubr.f32.gmra.mrb[0].mxu0 %v2637
    %v2639 = vpop.f32.mrb[0].mxu0
    %v2640 = vadd.f32 %v2019, %v2639
    %v2641 = vpop.f32.mrb[0].mxu0
    %2642 = vmatprep.mubr.f32.mxu0 0.0
    %v2643 = vand.u32 %v45, 4294901760
    %2644 = vmatmul.mubr.f32.gmra.mrb[0].mxu0 %v2643
    %v2645 = vpop.f32.mrb[0].mxu0
    %v2646 = vadd.f32 %v2027, %v2645
    %v2647 = vpop.f32.mrb[0].mxu0
    %2648 = vmatprep.mubr.f32.mxu0 0.0
    %v2649 = vand.u32 %v46, 4294901760
    %2650 = vmatmul.mubr.f32.gmra.mrb[0].mxu0 %v2649
    %v2651 = vpop.f32.mrb[0].mxu0
    %v2652 = vadd.f32 %v2035, %v2651
    %v2653 = vpop.f32.mrb[0].mxu0
    %2654 = vmatprep.mubr.f32.mxu0 0.0
    %v2655 = vand.u32 %v47, 4294901760
    %2656 = vmatmul.mubr.f32.gmra.mrb[0].mxu0 %v2655
    %v2657 = vpop.f32.mrb[0].mxu0
    %v2658 = vadd.f32 %v2043, %v2657
    %v2659 = vpop.f32.mrb[0].mxu0
    %2660 = vmatprep.mubr.f32.mxu0 0.0
    %v2661 = vand.u32 %v48, 4294901760
    %2662 = vmatmul.mubr.f32.gmra.mrb[0].mxu0 %v2661
    %v2663 = vpop.f32.mrb[0].mxu0
    %v2664 = vadd.f32 %v2051, %v2663
    %v2665 = vpop.f32.mrb[0].mxu0
    %2666 = vmatprep.mubr.f32.mxu0 0.0
    %v2667 = vand.u32 %v49, 4294901760
    %2668 = vmatmul.mubr.f32.gmra.mrb[0].mxu0 %v2667
    %v2669 = vpop.f32.mrb[0].mxu0
    %v2670 = vadd.f32 %v2059, %v2669
    %v2671 = vpop.f32.mrb[0].mxu0
    %2672 = vmatprep.mubr.f32.mxu0 0.0
    %v2673 = vand.u32 %v50, 4294901760
    %2674 = vmatmul.mubr.f32.gmra.mrb[0].mxu0 %v2673
    %v2675 = vpop.f32.mrb[0].mxu0
    %v2676 = vadd.f32 %v2067, %v2675
    %v2677 = vpop.f32.mrb[0].mxu0
    %2678 = vmatprep.mubr.f32.mxu0 0.0
    %v2679 = vand.u32 %v51, 4294901760
    %2680 = vmatmul.mubr.f32.gmra.mrb[0].mxu0 %v2679
    %v2681 = vpop.f32.mrb[0].mxu0
    %v2682 = vadd.f32 %v2075, %v2681
    %v2683 = vpop.f32.mrb[0].mxu0
    %2684 = vmatprep.mubr.f32.mxu0 0.0
    %v2685 = vand.u32 %v52, 4294901760
    %2686 = vmatmul.mubr.f32.gmra.mrb[0].mxu0 %v2685
    %v2687 = vpop.f32.mrb[0].mxu0
    %v2688 = vadd.f32 %v2083, %v2687
    %v2689 = vpop.f32.mrb[0].mxu0
    %2690 = vmatprep.mubr.f32.mxu0 0.0
    %v2691 = vand.u32 %v53, 4294901760
    %2692 = vmatmul.mubr.f32.gmra.mrb[0].mxu0 %v2691
    %v2693 = vpop.f32.mrb[0].mxu0
    %v2694 = vadd.f32 %v2091, %v2693
    %v2695 = vpop.f32.mrb[0].mxu0
    %2696 = vmatprep.mubr.f32.mxu0 0.0
    %v2697 = vand.u32 %v54, 4294901760
    %2698 = vmatmul.mubr.f32.gmra.mrb[0].mxu0 %v2697
    %v2699 = vpop.f32.mrb[0].mxu0
    %v2700 = vadd.f32 %v2099, %v2699
    %v2701 = vpop.f32.mrb[0].mxu0
    %2702 = vmatprep.mubr.f32.mxu0 0.0
    %v2703 = vand.u32 %v55, 4294901760
    %2704 = vmatmul.mubr.f32.gmra.mrb[0].mxu0 %v2703
    %v2705 = vpop.f32.mrb[0].mxu0
    %v2706 = vadd.f32 %v2107, %v2705
    %v2707 = vpop.f32.mrb[0].mxu0
    %2708 = vmatprep.mubr.f32.mxu0 0.0
    %v2709 = vand.u32 %v56, 4294901760
    %2710 = vmatmul.mubr.f32.gmra.mrb[0].mxu0 %v2709
    %v2711 = vpop.f32.mrb[0].mxu0
    %v2712 = vadd.f32 %v2115, %v2711
    %v2713 = vpop.f32.mrb[0].mxu0
    %2714 = vmatprep.mubr.f32.mxu0 0.0
    %v2715 = vand.u32 %v57, 4294901760
    %2716 = vmatmul.mubr.f32.gmra.mrb[0].mxu0 %v2715
    %v2717 = vpop.f32.mrb[0].mxu0
    %v2718 = vadd.f32 %v2123, %v2717
    %v2719 = vpop.f32.mrb[0].mxu0
    %2720 = vmatprep.mubr.f32.mxu0 0.0
    %v2721 = vand.u32 %v58, 4294901760
    %2722 = vmatmul.mubr.f32.gmra.mrb[0].mxu0 %v2721
    %v2723 = vpop.f32.mrb[0].mxu0
    %v2724 = vadd.f32 %v2131, %v2723
    %v2725 = vpop.f32.mrb[0].mxu0
    %2726 = vmatprep.mubr.f32.mxu0 0.0
    %v2727 = vand.u32 %v59, 4294901760
    %2728 = vmatmul.mubr.f32.gmra.mrb[0].mxu0 %v2727
    %v2729 = vpop.f32.mrb[0].mxu0
    %v2730 = vadd.f32 %v2139, %v2729
    %v2731 = vpop.f32.mrb[0].mxu0
    %2732 = vmatprep.mubr.f32.mxu0 0.0
    %v2733 = vand.u32 %v60, 4294901760
    %2734 = vmatmul.mubr.f32.gmra.mrb[0].mxu0 %v2733
    %v2735 = vpop.f32.mrb[0].mxu0
    %v2736 = vadd.f32 %v2147, %v2735
    %v2737 = vpop.f32.mrb[0].mxu0
    %2738 = vmatprep.mubr.f32.mxu0 0.0
    %v2739 = vand.u32 %v61, 4294901760
    %2740 = vmatmul.mubr.f32.gmra.mrb[0].mxu0 %v2739
    %v2741 = vpop.f32.mrb[0].mxu0
    %v2742 = vadd.f32 %v2155, %v2741
    %v2743 = vpop.f32.mrb[0].mxu0
    %2744 = vmatprep.mubr.f32.mxu0 0.0
    %v2745 = vand.u32 %v62, 4294901760
    %2746 = vmatmul.mubr.f32.gmra.mrb[0].mxu0 %v2745
    %v2747 = vpop.f32.mrb[0].mxu0
    %v2748 = vadd.f32 %v2163, %v2747
    %v2749 = vpop.f32.mrb[0].mxu0
    %2750 = vmatprep.mubr.f32.mxu0 0.0
    %v2751 = vand.u32 %v63, 4294901760
    %2752 = vmatmul.mubr.f32.gmra.mrb[0].mxu0 %v2751
    %v2753 = vpop.f32.mrb[0].mxu0
    %v2754 = vadd.f32 %v2171, %v2753
    %v2755 = vpop.f32.mrb[0].mxu0
    %2756 = vmatprep.mubr.f32.mxu0 0.0
    %v2757 = vand.u32 %v64, 4294901760
    %2758 = vmatmul.mubr.f32.gmra.mrb[0].mxu0 %v2757
    %v2759 = vpop.f32.mrb[0].mxu0
    %v2760 = vadd.f32 %v2179, %v2759
    %v2761 = vpop.f32.mrb[0].mxu0
    %2762 = vmatprep.mubr.f32.mxu0 0.0
    %v2763 = vand.u32 %v65, 4294901760
    %2764 = vmatmul.mubr.f32.gmra.mrb[0].mxu0 %v2763
    %v2765 = vpop.f32.mrb[0].mxu0
    %v2766 = vadd.f32 %v2187, %v2765
    %v2767 = vpop.f32.mrb[0].mxu0
    %2768 = vmatprep.mubr.f32.mxu0 0.0
    %v2769 = vand.u32 %v66, 4294901760
    %2770 = vmatmul.mubr.f32.gmra.mrb[0].mxu0 %v2769
    %v2771 = vpop.f32.mrb[0].mxu0
    %v2772 = vadd.f32 %v2195, %v2771
    %v2773 = vpop.f32.mrb[0].mxu0
    %2774 = vmatprep.mubr.f32.mxu0 0.0
    %v2775 = vand.u32 %v67, 4294901760
    %2776 = vmatmul.mubr.f32.gmra.mrb[0].mxu0 %v2775
    %v2777 = vpop.f32.mrb[0].mxu0
    %v2778 = vadd.f32 %v2203, %v2777
    %v2779 = vpop.f32.mrb[0].mxu0
    %2780 = vmatprep.mubr.f32.mxu0 0.0
    %v2781 = vand.u32 %v68, 4294901760
    %2782 = vmatmul.mubr.f32.gmra.mrb[0].mxu0 %v2781
    %v2783 = vpop.f32.mrb[0].mxu0
    %v2784 = vadd.f32 %v2211, %v2783
    %v2785 = vpop.f32.mrb[0].mxu0
    %2786 = vmatprep.mubr.f32.mxu0 0.0
    %v2787 = vand.u32 %v69, 4294901760
    %2788 = vmatmul.mubr.f32.gmra.mrb[0].mxu0 %v2787
    %v2789 = vpop.f32.mrb[0].mxu0
    %v2790 = vadd.f32 %v2219, %v2789
    %v2791 = vpop.f32.mrb[0].mxu0
    %2792 = vmatprep.mubr.f32.mxu0 0.0
    %v2793 = vand.u32 %v70, 4294901760
    %2794 = vmatmul.mubr.f32.gmra.mrb[0].mxu0 %v2793
    %v2795 = vpop.f32.mrb[0].mxu0
    %v2796 = vadd.f32 %v2227, %v2795
    %v2797 = vpop.f32.mrb[0].mxu0
    %2798 = vmatprep.mubr.f32.mxu0 0.0
    %v2799 = vand.u32 %v71, 4294901760
    %2800 = vmatmul.mubr.f32.gmra.mrb[0].mxu0 %v2799
    %v2801 = vpop.f32.mrb[0].mxu0
    %v2802 = vadd.f32 %v2235, %v2801
    %v2803 = vpop.f32.mrb[0].mxu0
    %2804 = vmatprep.mubr.f32.mxu0 0.0
    %v2805 = vand.u32 %v72, 4294901760
    %2806 = vmatmul.mubr.f32.gmra.mrb[0].mxu0 %v2805
    %v2807 = vpop.f32.mrb[0].mxu0
    %v2808 = vadd.f32 %v2243, %v2807
    %v2809 = vpop.f32.mrb[0].mxu0
    %2810 = vmatprep.mubr.f32.mxu0 0.0
    %v2811 = vand.u32 %v73, 4294901760
    %2812 = vmatmul.mubr.f32.gmra.mrb[0].mxu0 %v2811
    %v2813 = vpop.f32.mrb[0].mxu0
    %v2814 = vadd.f32 %v2251, %v2813
    %v2815 = vpop.f32.mrb[0].mxu0
    %2816 = vmatprep.mubr.f32.mxu0 0.0
    %v2817 = vand.u32 %v74, 4294901760
    %2818 = vmatmul.mubr.f32.gmra.mrb[0].mxu0 %v2817
    %v2819 = vpop.f32.mrb[0].mxu0
    %v2820 = vadd.f32 %v2259, %v2819
    %v2821 = vpop.f32.mrb[0].mxu0
    %2822 = vmatprep.mubr.f32.mxu0 0.0
    %v2823 = vand.u32 %v75, 4294901760
    %2824 = vmatmul.mubr.f32.gmra.mrb[0].mxu0 %v2823
    %v2825 = vpop.f32.mrb[0].mxu0
    %v2826 = vadd.f32 %v2267, %v2825
    %v2827 = vpop.f32.mrb[0].mxu0
    %2828 = vmatprep.mubr.f32.mxu0 0.0
    %v2829 = vand.u32 %v76, 4294901760
    %2830 = vmatmul.mubr.f32.gmra.mrb[0].mxu0 %v2829
    %v2831 = vpop.f32.mrb[0].mxu0
    %v2832 = vadd.f32 %v2275, %v2831
    %v2833 = vpop.f32.mrb[0].mxu0
    %2834 = vmatprep.mubr.f32.mxu0 0.0
    %v2835 = vand.u32 %v77, 4294901760
    %2836 = vmatmul.mubr.f32.gmra.mrb[0].mxu0 %v2835
    %v2837 = vpop.f32.mrb[0].mxu0
    %v2838 = vadd.f32 %v2283, %v2837
    %v2839 = vpop.f32.mrb[0].mxu0
    %2840 = vmatprep.mubr.f32.mxu0 0.0
    %v2841 = vand.u32 %v78, 4294901760
    %2842 = vmatmul.mubr.f32.gmra.mrb[0].mxu0 %v2841
    %v2843 = vpop.f32.mrb[0].mxu0
    %v2844 = vadd.f32 %v2291, %v2843
    %v2845 = vpop.f32.mrb[0].mxu0
    %2846 = vmatprep.mubr.f32.mxu0 0.0
    %v2847 = vand.u32 %v79, 4294901760
    %2848 = vmatmul.mubr.f32.gmra.mrb[0].mxu0 %v2847
    %v2849 = vpop.f32.mrb[0].mxu0
    %v2850 = vadd.f32 %v2299, %v2849
    %v2851 = vpop.f32.mrb[0].mxu0
    %2852 = vmatprep.mubr.f32.mxu0 0.0
    %v2853 = vand.u32 %v80, 4294901760
    %2854 = vmatmul.mubr.f32.gmra.mrb[0].mxu0 %v2853
    %v2855 = vpop.f32.mrb[0].mxu0
    %v2856 = vadd.f32 %v2307, %v2855
    %v2857 = vpop.f32.mrb[0].mxu0
    %2858 = vmatprep.mubr.f32.mxu0 0.0
    %v2859 = vand.u32 %v81, 4294901760
    %2860 = vmatmul.mubr.f32.gmra.mrb[0].mxu0 %v2859
    %v2861 = vpop.f32.mrb[0].mxu0
    %v2862 = vadd.f32 %v2315, %v2861
    %v2863 = vpop.f32.mrb[0].mxu0
    %2864 = vmatprep.mubr.f32.mxu0 0.0
    %v2865 = vand.u32 %v82, 4294901760
    %2866 = vmatmul.mubr.f32.gmra.mrb[0].mxu0 %v2865
    %v2867 = vpop.f32.mrb[0].mxu0
    %v2868 = vadd.f32 %v2323, %v2867
    %v2869 = vpop.f32.mrb[0].mxu0
    %2870 = vmatprep.mubr.f32.mxu0 0.0
    %v2871 = vand.u32 %v83, 4294901760
    %2872 = vmatmul.mubr.f32.gmra.mrb[0].mxu0 %v2871
    %v2873 = vpop.f32.mrb[0].mxu0
    %v2874 = vadd.f32 %v2331, %v2873
    %v2875 = vpop.f32.mrb[0].mxu0
    %2876 = vmatprep.mubr.f32.mxu0 0.0
    %v2877 = vand.u32 %v84, 4294901760
    %2878 = vmatmul.mubr.f32.gmra.mrb[0].mxu0 %v2877
    %v2879 = vpop.f32.mrb[0].mxu0
    %v2880 = vadd.f32 %v2339, %v2879
    %v2881 = vpop.f32.mrb[0].mxu0
    %2882 = vmatprep.mubr.f32.mxu0 0.0
    %v2883 = vand.u32 %v85, 4294901760
    %2884 = vmatmul.mubr.f32.gmra.mrb[0].mxu0 %v2883
    %v2885 = vpop.f32.mrb[0].mxu0
    %v2886 = vadd.f32 %v2347, %v2885
    %v2887 = vpop.f32.mrb[0].mxu0
    %2888 = vmatprep.mubr.f32.mxu0 0.0
    %v2889 = vand.u32 %v86, 4294901760
    %2890 = vmatmul.mubr.f32.gmra.mrb[0].mxu0 %v2889
    %v2891 = vpop.f32.mrb[0].mxu0
    %v2892 = vadd.f32 %v2355, %v2891
    %v2893 = vpop.f32.mrb[0].mxu0
    %2894 = vmatprep.mubr.f32.mxu0 0.0
    %v2895 = vand.u32 %v87, 4294901760
    %2896 = vmatmul.mubr.f32.gmra.mrb[0].mxu0 %v2895
    %v2897 = vpop.f32.mrb[0].mxu0
    %v2898 = vadd.f32 %v2363, %v2897
    %v2899 = vpop.f32.mrb[0].mxu0
    %2900 = vmatprep.mubr.f32.mxu0 0.0
    %v2901 = vand.u32 %v88, 4294901760
    %2902 = vmatmul.mubr.f32.gmra.mrb[0].mxu0 %v2901
    %v2903 = vpop.f32.mrb[0].mxu0
    %v2904 = vadd.f32 %v2371, %v2903
    %v2905 = vpop.f32.mrb[0].mxu0
    %2906 = vmatprep.mubr.f32.mxu0 0.0
    %v2907 = vand.u32 %v89, 4294901760
    %2908 = vmatmul.mubr.f32.gmra.mrb[0].mxu0 %v2907
    %v2909 = vpop.f32.mrb[0].mxu0
    %v2910 = vadd.f32 %v2379, %v2909
    %v2911 = vpop.f32.mrb[0].mxu0
    %2912 = vmatprep.mubr.f32.mxu0 0.0
    %v2913 = vand.u32 %v90, 4294901760
    %2914 = vmatmul.mubr.f32.gmra.mrb[0].mxu0 %v2913
    %v2915 = vpop.f32.mrb[0].mxu0
    %v2916 = vadd.f32 %v2387, %v2915
    %v2917 = vpop.f32.mrb[0].mxu0
    %2918 = vmatprep.mubr.f32.mxu0 0.0
    %v2919 = vand.u32 %v91, 4294901760
    %2920 = vmatmul.mubr.f32.gmra.mrb[0].mxu0 %v2919
    %v2921 = vpop.f32.mrb[0].mxu0
    %v2922 = vadd.f32 %v2395, %v2921
    %v2923 = vpop.f32.mrb[0].mxu0
    %2924 = vmatprep.mubr.f32.mxu0 0.0
    %v2925 = vand.u32 %v92, 4294901760
    %2926 = vmatmul.mubr.f32.gmra.mrb[0].mxu0 %v2925
    %v2927 = vpop.f32.mrb[0].mxu0
    %v2928 = vadd.f32 %v2403, %v2927
    %v2929 = vpop.f32.mrb[0].mxu0
    %2930 = vmatprep.mubr.f32.mxu0 0.0
    %v2931 = vand.u32 %v93, 4294901760
    %2932 = vmatmul.mubr.f32.gmra.mrb[0].mxu0 %v2931
    %v2933 = vpop.f32.mrb[0].mxu0
    %v2934 = vadd.f32 %v2411, %v2933
    %v2935 = vpop.f32.mrb[0].mxu0
    %2936 = vmatprep.mubr.f32.mxu0 0.0
    %v2937 = vand.u32 %v94, 4294901760
    %2938 = vmatmul.mubr.f32.gmra.mrb[0].mxu0 %v2937
    %v2939 = vpop.f32.mrb[0].mxu0
    %v2940 = vadd.f32 %v2419, %v2939
    %v2941 = vpop.f32.mrb[0].mxu0
    %2942 = vmatprep.mubr.f32.mxu0 0.0
    %v2943 = vand.u32 %v95, 4294901760
    %2944 = vmatmul.mubr.f32.gmra.mrb[0].mxu0 %v2943
    %v2945 = vpop.f32.mrb[0].mxu0
    %v2946 = vadd.f32 %v2427, %v2945
    %v2947 = vpop.f32.mrb[0].mxu0
    %2948 = vmatprep.mubr.f32.mxu0 0.0
    %v2949 = vand.u32 %v96, 4294901760
    %2950 = vmatmul.mubr.f32.gmra.mrb[0].mxu0 %v2949
    %v2951 = vpop.f32.mrb[0].mxu0
    %v2952 = vadd.f32 %v2435, %v2951
    %v2953 = vpop.f32.mrb[0].mxu0
    %2954 = vmatprep.mubr.f32.mxu0 0.0
    %v2955 = vand.u32 %v97, 4294901760
    %2956 = vmatmul.mubr.f32.gmra.mrb[0].mxu0 %v2955
    %v2957 = vpop.f32.mrb[0].mxu0
    %v2958 = vadd.f32 %v2443, %v2957
    %v2959 = vpop.f32.mrb[0].mxu0
    %2960 = vmatprep.mubr.f32.mxu0 0.0
    %v2961 = vand.u32 %v98, 4294901760
    %2962 = vmatmul.mubr.f32.gmra.mrb[0].mxu0 %v2961
    %v2963 = vpop.f32.mrb[0].mxu0
    %v2964 = vadd.f32 %v2451, %v2963
    %v2965 = vpop.f32.mrb[0].mxu0
    %2966 = vmatprep.mubr.f32.mxu0 0.0
    %v2967 = vand.u32 %v99, 4294901760
    %2968 = vmatmul.mubr.f32.gmra.mrb[0].mxu0 %v2967
    %v2969 = vpop.f32.mrb[0].mxu0
    %v2970 = vadd.f32 %v2459, %v2969
    %v2971 = vpop.f32.mrb[0].mxu0
    %2972 = vmatprep.mubr.f32.mxu0 0.0
    %v2973 = vand.u32 %v100, 4294901760
    %2974 = vmatmul.mubr.f32.gmra.mrb[0].mxu0 %v2973
    %v2975 = vpop.f32.mrb[0].mxu0
    %v2976 = vadd.f32 %v2467, %v2975
    %v2977 = vpop.f32.mrb[0].mxu0
    %2978 = vmatprep.mubr.f32.mxu0 0.0
    %v2979 = vand.u32 %v101, 4294901760
    %2980 = vmatmul.mubr.f32.gmra.mrb[0].mxu0 %v2979
    %v2981 = vpop.f32.mrb[0].mxu0
    %v2982 = vadd.f32 %v2475, %v2981
    %v2983 = vpop.f32.mrb[0].mxu0
    %2984 = vmatprep.mubr.f32.mxu0 0.0
    %v2985 = vand.u32 %v102, 4294901760
    %2986 = vmatmul.mubr.f32.gmra.mrb[0].mxu0 %v2985
    %v2987 = vpop.f32.mrb[0].mxu0
    %v2988 = vadd.f32 %v2483, %v2987
    %v2989 = vpop.f32.mrb[0].mxu0
    %2990 = vmatprep.mubr.f32.mxu0 0.0
    %v2991 = vand.u32 %v103, 4294901760
    %2992 = vmatmul.mubr.f32.gmra.mrb[0].mxu0 %v2991
    %v2993 = vpop.f32.mrb[0].mxu0
    %v2994 = vadd.f32 %v2491, %v2993
    %v2995 = vpop.f32.mrb[0].mxu0
    %2996 = vmatprep.mubr.f32.mxu0 0.0
    %v2997 = vand.u32 %v104, 4294901760
    %2998 = vmatmul.mubr.f32.gmra.mrb[0].mxu0 %v2997
    %v2999 = vpop.f32.mrb[0].mxu0
    %v3000 = vadd.f32 %v2499, %v2999
    %v3001 = vpop.f32.mrb[0].mxu0
    %3002 = vmatprep.mubr.f32.mxu0 0.0
    %v3003 = vand.u32 %v105, 4294901760
    %3004 = vmatmul.mubr.f32.gmra.mrb[0].mxu0 %v3003
    %v3005 = vpop.f32.mrb[0].mxu0
    %v3006 = vadd.f32 %v2507, %v3005
    %v3007 = vpop.f32.mrb[0].mxu0
    %3008 = vmatprep.mubr.f32.mxu0 0.0
    %v3009 = vand.u32 %v106, 4294901760
    %3010 = vmatmul.mubr.f32.gmra.mrb[0].mxu0 %v3009
    %v3011 = vpop.f32.mrb[0].mxu0
    %v3012 = vadd.f32 %v2515, %v3011
    %v3013 = vpop.f32.mrb[0].mxu0
    %3014 = vdwg.mxu0
    %3015 = vmatprep.subr.mxu0 0.0
    %v3016 = vand.u32 %v107, 4294901760
    %3017 = vmatpush1.msra.mxu0 %v3016
    %3018 = vmatprep.subr.mxu0 0.0
    %v3019 = vand.u32 %v108, 4294901760
    %3020 = vmatpush1.msra.mxu0 %v3019
    %3021 = vmatprep.subr.mxu0 0.0
    %v3022 = vand.u32 %v109, 4294901760
    %3023 = vmatpush1.msra.mxu0 %v3022
    %3024 = vmatprep.subr.mxu0 0.0
    %v3025 = vand.u32 %v110, 4294901760
    %3026 = vmatpush1.msra.mxu0 %v3025
    %3027 = vmatprep.subr.mxu0 0.0
    %v3028 = vand.u32 %v111, 4294901760
    %3029 = vmatpush1.msra.mxu0 %v3028
    %3030 = vmatprep.subr.mxu0 0.0
    %v3031 = vand.u32 %v112, 4294901760
    %3032 = vmatpush1.msra.mxu0 %v3031
    %3033 = vmatprep.subr.mxu0 0.0
    %v3034 = vand.u32 %v113, 4294901760
    %3035 = vmatpush1.msra.mxu0 %v3034
    %3036 = vmatprep.subr.mxu0 0.0
    %v3037 = vand.u32 %v114, 4294901760
    %3038 = vmatpush1.msra.mxu0 %v3037
    %3039 = vmatprep.subr.mxu0 0.0
    %v3040 = vand.u32 %v115, 4294901760
    %3041 = vmatpush1.msra.mxu0 %v3040
    %3042 = vmatprep.subr.mxu0 0.0
    %v3043 = vand.u32 %v116, 4294901760
    %3044 = vmatpush1.msra.mxu0 %v3043
    %3045 = vmatprep.subr.mxu0 0.0
    %v3046 = vand.u32 %v117, 4294901760
    %3047 = vmatpush1.msra.mxu0 %v3046
    %3048 = vmatprep.subr.mxu0 0.0
    %v3049 = vand.u32 %v118, 4294901760
    %3050 = vmatpush1.msra.mxu0 %v3049
    %3051 = vmatprep.subr.mxu0 0.0
    %v3052 = vand.u32 %v119, 4294901760
    %3053 = vmatpush1.msra.mxu0 %v3052
    %3054 = vmatprep.subr.mxu0 0.0
    %v3055 = vand.u32 %v120, 4294901760
    %3056 = vmatpush1.msra.mxu0 %v3055
    %3057 = vmatprep.subr.mxu0 0.0
    %v3058 = vand.u32 %v121, 4294901760
    %3059 = vmatpush1.msra.mxu0 %v3058
    %3060 = vmatprep.subr.mxu0 0.0
    %v3061 = vand.u32 %v122, 4294901760
    %3062 = vmatpush1.msra.mxu0 %v3061
    %3063 = vmatprep.subr.mxu0 0.0
    %3064 = vmatpush1.msra.mxu0 0.0
    %3065 = vmatprep.subr.mxu0 0.0
    %3066 = vmatpush1.msra.mxu0 0.0
    %3067 = vmatprep.subr.mxu0 0.0
    %3068 = vmatpush1.msra.mxu0 0.0
    %3069 = vmatprep.subr.mxu0 0.0
    %3070 = vmatpush1.msra.mxu0 0.0
    %3071 = vmatprep.subr.mxu0 0.0
    %3072 = vmatpush1.msra.mxu0 0.0
    %3073 = vmatprep.subr.mxu0 0.0
    %3074 = vmatpush1.msra.mxu0 0.0
    %3075 = vmatprep.subr.mxu0 0.0
    %3076 = vmatpush1.msra.mxu0 0.0
    %3077 = vmatprep.subr.mxu0 0.0
    %3078 = vmatpush1.msra.mxu0 0.0
    %3079 = vmatprep.subr.mxu0 0.0
    %3080 = vmatpush1.msra.mxu0 0.0
    %3081 = vmatprep.subr.mxu0 0.0
    %3082 = vmatpush1.msra.mxu0 0.0
    %3083 = vmatprep.subr.mxu0 0.0
    %3084 = vmatpush1.msra.mxu0 0.0
    %3085 = vmatprep.subr.mxu0 0.0
    %3086 = vmatpush1.msra.mxu0 0.0
    %3087 = vmatprep.subr.mxu0 0.0
    %3088 = vmatpush1.msra.mxu0 0.0
    %3089 = vmatprep.subr.mxu0 0.0
    %3090 = vmatpush1.msra.mxu0 0.0
    %3091 = vmatprep.subr.mxu0 0.0
    %3092 = vmatpush1.msra.mxu0 0.0
    %3093 = vmatprep.subr.mxu0 0.0
    %3094 = vmatpush1.msra.mxu0 0.0
    %3095 = vmatprep.mubr.f32.mxu0 0.0
    %v3096 = vand.u32 %v43, 4294901760
    %3097 = vmatmul.mubr.f32.gmra.mrb[0].mxu0 %v3096
    %v3098 = vpop.f32.mrb[0].mxu0
    %v3099 = vadd.f32 %v2634, %v3098
    %v3100 = vpop.f32.mrb[0].mxu0
    %3101 = vmatprep.mubr.f32.mxu0 0.0
    %v3102 = vand.u32 %v44, 4294901760
    %3103 = vmatmul.mubr.f32.gmra.mrb[0].mxu0 %v3102
    %v3104 = vpop.f32.mrb[0].mxu0
    %v3105 = vadd.f32 %v2640, %v3104
    %v3106 = vpop.f32.mrb[0].mxu0
    %3107 = vmatprep.mubr.f32.mxu0 0.0
    %v3108 = vand.u32 %v45, 4294901760
    %3109 = vmatmul.mubr.f32.gmra.mrb[0].mxu0 %v3108
    %v3110 = vpop.f32.mrb[0].mxu0
    %v3111 = vadd.f32 %v2646, %v3110
    %v3112 = vpop.f32.mrb[0].mxu0
    %3113 = vmatprep.mubr.f32.mxu0 0.0
    %v3114 = vand.u32 %v46, 4294901760
    %3115 = vmatmul.mubr.f32.gmra.mrb[0].mxu0 %v3114
    %v3116 = vpop.f32.mrb[0].mxu0
    %v3117 = vadd.f32 %v2652, %v3116
    %v3118 = vpop.f32.mrb[0].mxu0
    %3119 = vmatprep.mubr.f32.mxu0 0.0
    %v3120 = vand.u32 %v47, 4294901760
    %3121 = vmatmul.mubr.f32.gmra.mrb[0].mxu0 %v3120
    %v3122 = vpop.f32.mrb[0].mxu0
    %v3123 = vadd.f32 %v2658, %v3122
    %v3124 = vpop.f32.mrb[0].mxu0
    %3125 = vmatprep.mubr.f32.mxu0 0.0
    %v3126 = vand.u32 %v48, 4294901760
    %3127 = vmatmul.mubr.f32.gmra.mrb[0].mxu0 %v3126
    %v3128 = vpop.f32.mrb[0].mxu0
    %v3129 = vadd.f32 %v2664, %v3128
    %v3130 = vpop.f32.mrb[0].mxu0
    %3131 = vmatprep.mubr.f32.mxu0 0.0
    %v3132 = vand.u32 %v49, 4294901760
    %3133 = vmatmul.mubr.f32.gmra.mrb[0].mxu0 %v3132
    %v3134 = vpop.f32.mrb[0].mxu0
    %v3135 = vadd.f32 %v2670, %v3134
    %v3136 = vpop.f32.mrb[0].mxu0
    %3137 = vmatprep.mubr.f32.mxu0 0.0
    %v3138 = vand.u32 %v50, 4294901760
    %3139 = vmatmul.mubr.f32.gmra.mrb[0].mxu0 %v3138
    %v3140 = vpop.f32.mrb[0].mxu0
    %v3141 = vadd.f32 %v2676, %v3140
    %v3142 = vpop.f32.mrb[0].mxu0
    %3143 = vmatprep.mubr.f32.mxu0 0.0
    %v3144 = vand.u32 %v51, 4294901760
    %3145 = vmatmul.mubr.f32.gmra.mrb[0].mxu0 %v3144
    %v3146 = vpop.f32.mrb[0].mxu0
    %v3147 = vadd.f32 %v2682, %v3146
    %v3148 = vpop.f32.mrb[0].mxu0
    %3149 = vmatprep.mubr.f32.mxu0 0.0
    %v3150 = vand.u32 %v52, 4294901760
    %3151 = vmatmul.mubr.f32.gmra.mrb[0].mxu0 %v3150
    %v3152 = vpop.f32.mrb[0].mxu0
    %v3153 = vadd.f32 %v2688, %v3152
    %v3154 = vpop.f32.mrb[0].mxu0
    %3155 = vmatprep.mubr.f32.mxu0 0.0
    %v3156 = vand.u32 %v53, 4294901760
    %3157 = vmatmul.mubr.f32.gmra.mrb[0].mxu0 %v3156
    %v3158 = vpop.f32.mrb[0].mxu0
    %v3159 = vadd.f32 %v2694, %v3158
    %v3160 = vpop.f32.mrb[0].mxu0
    %3161 = vmatprep.mubr.f32.mxu0 0.0
    %v3162 = vand.u32 %v54, 4294901760
    %3163 = vmatmul.mubr.f32.gmra.mrb[0].mxu0 %v3162
    %v3164 = vpop.f32.mrb[0].mxu0
    %v3165 = vadd.f32 %v2700, %v3164
    %v3166 = vpop.f32.mrb[0].mxu0
    %3167 = vmatprep.mubr.f32.mxu0 0.0
    %v3168 = vand.u32 %v55, 4294901760
    %3169 = vmatmul.mubr.f32.gmra.mrb[0].mxu0 %v3168
    %v3170 = vpop.f32.mrb[0].mxu0
    %v3171 = vadd.f32 %v2706, %v3170
    %v3172 = vpop.f32.mrb[0].mxu0
    %3173 = vmatprep.mubr.f32.mxu0 0.0
    %v3174 = vand.u32 %v56, 4294901760
    %3175 = vmatmul.mubr.f32.gmra.mrb[0].mxu0 %v3174
    %v3176 = vpop.f32.mrb[0].mxu0
    %v3177 = vadd.f32 %v2712, %v3176
    %v3178 = vpop.f32.mrb[0].mxu0
    %3179 = vmatprep.mubr.f32.mxu0 0.0
    %v3180 = vand.u32 %v57, 4294901760
    %3181 = vmatmul.mubr.f32.gmra.mrb[0].mxu0 %v3180
    %v3182 = vpop.f32.mrb[0].mxu0
    %v3183 = vadd.f32 %v2718, %v3182
    %v3184 = vpop.f32.mrb[0].mxu0
    %3185 = vmatprep.mubr.f32.mxu0 0.0
    %v3186 = vand.u32 %v58, 4294901760
    %3187 = vmatmul.mubr.f32.gmra.mrb[0].mxu0 %v3186
    %v3188 = vpop.f32.mrb[0].mxu0
    %v3189 = vadd.f32 %v2724, %v3188
    %v3190 = vpop.f32.mrb[0].mxu0
    %3191 = vmatprep.mubr.f32.mxu0 0.0
    %v3192 = vand.u32 %v59, 4294901760
    %3193 = vmatmul.mubr.f32.gmra.mrb[0].mxu0 %v3192
    %v3194 = vpop.f32.mrb[0].mxu0
    %v3195 = vadd.f32 %v2730, %v3194
    %v3196 = vpop.f32.mrb[0].mxu0
    %3197 = vmatprep.mubr.f32.mxu0 0.0
    %v3198 = vand.u32 %v60, 4294901760
    %3199 = vmatmul.mubr.f32.gmra.mrb[0].mxu0 %v3198
    %v3200 = vpop.f32.mrb[0].mxu0
    %v3201 = vadd.f32 %v2736, %v3200
    %v3202 = vpop.f32.mrb[0].mxu0
    %3203 = vmatprep.mubr.f32.mxu0 0.0
    %v3204 = vand.u32 %v61, 4294901760
    %3205 = vmatmul.mubr.f32.gmra.mrb[0].mxu0 %v3204
    %v3206 = vpop.f32.mrb[0].mxu0
    %v3207 = vadd.f32 %v2742, %v3206
    %v3208 = vpop.f32.mrb[0].mxu0
    %3209 = vmatprep.mubr.f32.mxu0 0.0
    %v3210 = vand.u32 %v62, 4294901760
    %3211 = vmatmul.mubr.f32.gmra.mrb[0].mxu0 %v3210
    %v3212 = vpop.f32.mrb[0].mxu0
    %v3213 = vadd.f32 %v2748, %v3212
    %v3214 = vpop.f32.mrb[0].mxu0
    %3215 = vmatprep.mubr.f32.mxu0 0.0
    %v3216 = vand.u32 %v63, 4294901760
    %3217 = vmatmul.mubr.f32.gmra.mrb[0].mxu0 %v3216
    %v3218 = vpop.f32.mrb[0].mxu0
    %v3219 = vadd.f32 %v2754, %v3218
    %v3220 = vpop.f32.mrb[0].mxu0
    %3221 = vmatprep.mubr.f32.mxu0 0.0
    %v3222 = vand.u32 %v64, 4294901760
    %3223 = vmatmul.mubr.f32.gmra.mrb[0].mxu0 %v3222
    %v3224 = vpop.f32.mrb[0].mxu0
    %v3225 = vadd.f32 %v2760, %v3224
    %v3226 = vpop.f32.mrb[0].mxu0
    %3227 = vmatprep.mubr.f32.mxu0 0.0
    %v3228 = vand.u32 %v65, 4294901760
    %3229 = vmatmul.mubr.f32.gmra.mrb[0].mxu0 %v3228
    %v3230 = vpop.f32.mrb[0].mxu0
    %v3231 = vadd.f32 %v2766, %v3230
    %v3232 = vpop.f32.mrb[0].mxu0
    %3233 = vmatprep.mubr.f32.mxu0 0.0
    %v3234 = vand.u32 %v66, 4294901760
    %3235 = vmatmul.mubr.f32.gmra.mrb[0].mxu0 %v3234
    %v3236 = vpop.f32.mrb[0].mxu0
    %v3237 = vadd.f32 %v2772, %v3236
    %v3238 = vpop.f32.mrb[0].mxu0
    %3239 = vmatprep.mubr.f32.mxu0 0.0
    %v3240 = vand.u32 %v67, 4294901760
    %3241 = vmatmul.mubr.f32.gmra.mrb[0].mxu0 %v3240
    %v3242 = vpop.f32.mrb[0].mxu0
    %v3243 = vadd.f32 %v2778, %v3242
    %v3244 = vpop.f32.mrb[0].mxu0
    %3245 = vmatprep.mubr.f32.mxu0 0.0
    %v3246 = vand.u32 %v68, 4294901760
    %3247 = vmatmul.mubr.f32.gmra.mrb[0].mxu0 %v3246
    %v3248 = vpop.f32.mrb[0].mxu0
    %v3249 = vadd.f32 %v2784, %v3248
    %v3250 = vpop.f32.mrb[0].mxu0
    %3251 = vmatprep.mubr.f32.mxu0 0.0
    %v3252 = vand.u32 %v69, 4294901760
    %3253 = vmatmul.mubr.f32.gmra.mrb[0].mxu0 %v3252
    %v3254 = vpop.f32.mrb[0].mxu0
    %v3255 = vadd.f32 %v2790, %v3254
    %v3256 = vpop.f32.mrb[0].mxu0
    %3257 = vmatprep.mubr.f32.mxu0 0.0
    %v3258 = vand.u32 %v70, 4294901760
    %3259 = vmatmul.mubr.f32.gmra.mrb[0].mxu0 %v3258
    %v3260 = vpop.f32.mrb[0].mxu0
    %v3261 = vadd.f32 %v2796, %v3260
    %v3262 = vpop.f32.mrb[0].mxu0
    %3263 = vmatprep.mubr.f32.mxu0 0.0
    %v3264 = vand.u32 %v71, 4294901760
    %3265 = vmatmul.mubr.f32.gmra.mrb[0].mxu0 %v3264
    %v3266 = vpop.f32.mrb[0].mxu0
    %v3267 = vadd.f32 %v2802, %v3266
    %v3268 = vpop.f32.mrb[0].mxu0
    %3269 = vmatprep.mubr.f32.mxu0 0.0
    %v3270 = vand.u32 %v72, 4294901760
    %3271 = vmatmul.mubr.f32.gmra.mrb[0].mxu0 %v3270
    %v3272 = vpop.f32.mrb[0].mxu0
    %v3273 = vadd.f32 %v2808, %v3272
    %v3274 = vpop.f32.mrb[0].mxu0
    %3275 = vmatprep.mubr.f32.mxu0 0.0
    %v3276 = vand.u32 %v73, 4294901760
    %3277 = vmatmul.mubr.f32.gmra.mrb[0].mxu0 %v3276
    %v3278 = vpop.f32.mrb[0].mxu0
    %v3279 = vadd.f32 %v2814, %v3278
    %v3280 = vpop.f32.mrb[0].mxu0
    %3281 = vmatprep.mubr.f32.mxu0 0.0
    %v3282 = vand.u32 %v74, 4294901760
    %3283 = vmatmul.mubr.f32.gmra.mrb[0].mxu0 %v3282
    %v3284 = vpop.f32.mrb[0].mxu0
    %v3285 = vadd.f32 %v2820, %v3284
    %v3286 = vpop.f32.mrb[0].mxu0
    %3287 = vmatprep.mubr.f32.mxu0 0.0
    %v3288 = vand.u32 %v75, 4294901760
    %3289 = vmatmul.mubr.f32.gmra.mrb[0].mxu0 %v3288
    %v3290 = vpop.f32.mrb[0].mxu0
    %v3291 = vadd.f32 %v2826, %v3290
    %v3292 = vpop.f32.mrb[0].mxu0
    %3293 = vmatprep.mubr.f32.mxu0 0.0
    %v3294 = vand.u32 %v76, 4294901760
    %3295 = vmatmul.mubr.f32.gmra.mrb[0].mxu0 %v3294
    %v3296 = vpop.f32.mrb[0].mxu0
    %v3297 = vadd.f32 %v2832, %v3296
    %v3298 = vpop.f32.mrb[0].mxu0
    %3299 = vmatprep.mubr.f32.mxu0 0.0
    %v3300 = vand.u32 %v77, 4294901760
    %3301 = vmatmul.mubr.f32.gmra.mrb[0].mxu0 %v3300
    %v3302 = vpop.f32.mrb[0].mxu0
    %v3303 = vadd.f32 %v2838, %v3302
    %v3304 = vpop.f32.mrb[0].mxu0
    %3305 = vmatprep.mubr.f32.mxu0 0.0
    %v3306 = vand.u32 %v78, 4294901760
    %3307 = vmatmul.mubr.f32.gmra.mrb[0].mxu0 %v3306
    %v3308 = vpop.f32.mrb[0].mxu0
    %v3309 = vadd.f32 %v2844, %v3308
    %v3310 = vpop.f32.mrb[0].mxu0
    %3311 = vmatprep.mubr.f32.mxu0 0.0
    %v3312 = vand.u32 %v79, 4294901760
    %3313 = vmatmul.mubr.f32.gmra.mrb[0].mxu0 %v3312
    %v3314 = vpop.f32.mrb[0].mxu0
    %v3315 = vadd.f32 %v2850, %v3314
    %v3316 = vpop.f32.mrb[0].mxu0
    %3317 = vmatprep.mubr.f32.mxu0 0.0
    %v3318 = vand.u32 %v80, 4294901760
    %3319 = vmatmul.mubr.f32.gmra.mrb[0].mxu0 %v3318
    %v3320 = vpop.f32.mrb[0].mxu0
    %v3321 = vadd.f32 %v2856, %v3320
    %v3322 = vpop.f32.mrb[0].mxu0
    %3323 = vmatprep.mubr.f32.mxu0 0.0
    %v3324 = vand.u32 %v81, 4294901760
    %3325 = vmatmul.mubr.f32.gmra.mrb[0].mxu0 %v3324
    %v3326 = vpop.f32.mrb[0].mxu0
    %v3327 = vadd.f32 %v2862, %v3326
    %v3328 = vpop.f32.mrb[0].mxu0
    %3329 = vmatprep.mubr.f32.mxu0 0.0
    %v3330 = vand.u32 %v82, 4294901760
    %3331 = vmatmul.mubr.f32.gmra.mrb[0].mxu0 %v3330
    %v3332 = vpop.f32.mrb[0].mxu0
    %v3333 = vadd.f32 %v2868, %v3332
    %v3334 = vpop.f32.mrb[0].mxu0
    %3335 = vmatprep.mubr.f32.mxu0 0.0
    %v3336 = vand.u32 %v83, 4294901760
    %3337 = vmatmul.mubr.f32.gmra.mrb[0].mxu0 %v3336
    %v3338 = vpop.f32.mrb[0].mxu0
    %v3339 = vadd.f32 %v2874, %v3338
    %v3340 = vpop.f32.mrb[0].mxu0
    %3341 = vmatprep.mubr.f32.mxu0 0.0
    %v3342 = vand.u32 %v84, 4294901760
    %3343 = vmatmul.mubr.f32.gmra.mrb[0].mxu0 %v3342
    %v3344 = vpop.f32.mrb[0].mxu0
    %v3345 = vadd.f32 %v2880, %v3344
    %v3346 = vpop.f32.mrb[0].mxu0
    %3347 = vmatprep.mubr.f32.mxu0 0.0
    %v3348 = vand.u32 %v85, 4294901760
    %3349 = vmatmul.mubr.f32.gmra.mrb[0].mxu0 %v3348
    %v3350 = vpop.f32.mrb[0].mxu0
    %v3351 = vadd.f32 %v2886, %v3350
    %v3352 = vpop.f32.mrb[0].mxu0
    %3353 = vmatprep.mubr.f32.mxu0 0.0
    %v3354 = vand.u32 %v86, 4294901760
    %3355 = vmatmul.mubr.f32.gmra.mrb[0].mxu0 %v3354
    %v3356 = vpop.f32.mrb[0].mxu0
    %v3357 = vadd.f32 %v2892, %v3356
    %v3358 = vpop.f32.mrb[0].mxu0
    %3359 = vmatprep.mubr.f32.mxu0 0.0
    %v3360 = vand.u32 %v87, 4294901760
    %3361 = vmatmul.mubr.f32.gmra.mrb[0].mxu0 %v3360
    %v3362 = vpop.f32.mrb[0].mxu0
    %v3363 = vadd.f32 %v2898, %v3362
    %v3364 = vpop.f32.mrb[0].mxu0
    %3365 = vmatprep.mubr.f32.mxu0 0.0
    %v3366 = vand.u32 %v88, 4294901760
    %3367 = vmatmul.mubr.f32.gmra.mrb[0].mxu0 %v3366
    %v3368 = vpop.f32.mrb[0].mxu0
    %v3369 = vadd.f32 %v2904, %v3368
    %v3370 = vpop.f32.mrb[0].mxu0
    %3371 = vmatprep.mubr.f32.mxu0 0.0
    %v3372 = vand.u32 %v89, 4294901760
    %3373 = vmatmul.mubr.f32.gmra.mrb[0].mxu0 %v3372
    %v3374 = vpop.f32.mrb[0].mxu0
    %v3375 = vadd.f32 %v2910, %v3374
    %v3376 = vpop.f32.mrb[0].mxu0
    %3377 = vmatprep.mubr.f32.mxu0 0.0
    %v3378 = vand.u32 %v90, 4294901760
    %3379 = vmatmul.mubr.f32.gmra.mrb[0].mxu0 %v3378
    %v3380 = vpop.f32.mrb[0].mxu0
    %v3381 = vadd.f32 %v2916, %v3380
    %v3382 = vpop.f32.mrb[0].mxu0
    %3383 = vmatprep.mubr.f32.mxu0 0.0
    %v3384 = vand.u32 %v91, 4294901760
    %3385 = vmatmul.mubr.f32.gmra.mrb[0].mxu0 %v3384
    %v3386 = vpop.f32.mrb[0].mxu0
    %v3387 = vadd.f32 %v2922, %v3386
    %v3388 = vpop.f32.mrb[0].mxu0
    %3389 = vmatprep.mubr.f32.mxu0 0.0
    %v3390 = vand.u32 %v92, 4294901760
    %3391 = vmatmul.mubr.f32.gmra.mrb[0].mxu0 %v3390
    %v3392 = vpop.f32.mrb[0].mxu0
    %v3393 = vadd.f32 %v2928, %v3392
    %v3394 = vpop.f32.mrb[0].mxu0
    %3395 = vmatprep.mubr.f32.mxu0 0.0
    %v3396 = vand.u32 %v93, 4294901760
    %3397 = vmatmul.mubr.f32.gmra.mrb[0].mxu0 %v3396
    %v3398 = vpop.f32.mrb[0].mxu0
    %v3399 = vadd.f32 %v2934, %v3398
    %v3400 = vpop.f32.mrb[0].mxu0
    %3401 = vmatprep.mubr.f32.mxu0 0.0
    %v3402 = vand.u32 %v94, 4294901760
    %3403 = vmatmul.mubr.f32.gmra.mrb[0].mxu0 %v3402
    %v3404 = vpop.f32.mrb[0].mxu0
    %v3405 = vadd.f32 %v2940, %v3404
    %v3406 = vpop.f32.mrb[0].mxu0
    %3407 = vmatprep.mubr.f32.mxu0 0.0
    %v3408 = vand.u32 %v95, 4294901760
    %3409 = vmatmul.mubr.f32.gmra.mrb[0].mxu0 %v3408
    %v3410 = vpop.f32.mrb[0].mxu0
    %v3411 = vadd.f32 %v2946, %v3410
    %v3412 = vpop.f32.mrb[0].mxu0
    %3413 = vmatprep.mubr.f32.mxu0 0.0
    %v3414 = vand.u32 %v96, 4294901760
    %3415 = vmatmul.mubr.f32.gmra.mrb[0].mxu0 %v3414
    %v3416 = vpop.f32.mrb[0].mxu0
    %v3417 = vadd.f32 %v2952, %v3416
    %v3418 = vpop.f32.mrb[0].mxu0
    %3419 = vmatprep.mubr.f32.mxu0 0.0
    %v3420 = vand.u32 %v97, 4294901760
    %3421 = vmatmul.mubr.f32.gmra.mrb[0].mxu0 %v3420
    %v3422 = vpop.f32.mrb[0].mxu0
    %v3423 = vadd.f32 %v2958, %v3422
    %v3424 = vpop.f32.mrb[0].mxu0
    %3425 = vmatprep.mubr.f32.mxu0 0.0
    %v3426 = vand.u32 %v98, 4294901760
    %3427 = vmatmul.mubr.f32.gmra.mrb[0].mxu0 %v3426
    %v3428 = vpop.f32.mrb[0].mxu0
    %v3429 = vadd.f32 %v2964, %v3428
    %v3430 = vpop.f32.mrb[0].mxu0
    %3431 = vmatprep.mubr.f32.mxu0 0.0
    %v3432 = vand.u32 %v99, 4294901760
    %3433 = vmatmul.mubr.f32.gmra.mrb[0].mxu0 %v3432
    %v3434 = vpop.f32.mrb[0].mxu0
    %v3435 = vadd.f32 %v2970, %v3434
    %v3436 = vpop.f32.mrb[0].mxu0
    %3437 = vmatprep.mubr.f32.mxu0 0.0
    %v3438 = vand.u32 %v100, 4294901760
    %3439 = vmatmul.mubr.f32.gmra.mrb[0].mxu0 %v3438
    %v3440 = vpop.f32.mrb[0].mxu0
    %v3441 = vadd.f32 %v2976, %v3440
    %v3442 = vpop.f32.mrb[0].mxu0
    %3443 = vmatprep.mubr.f32.mxu0 0.0
    %v3444 = vand.u32 %v101, 4294901760
    %3445 = vmatmul.mubr.f32.gmra.mrb[0].mxu0 %v3444
    %v3446 = vpop.f32.mrb[0].mxu0
    %v3447 = vadd.f32 %v2982, %v3446
    %v3448 = vpop.f32.mrb[0].mxu0
    %3449 = vmatprep.mubr.f32.mxu0 0.0
    %v3450 = vand.u32 %v102, 4294901760
    %3451 = vmatmul.mubr.f32.gmra.mrb[0].mxu0 %v3450
    %v3452 = vpop.f32.mrb[0].mxu0
    %v3453 = vadd.f32 %v2988, %v3452
    %v3454 = vpop.f32.mrb[0].mxu0
    %3455 = vmatprep.mubr.f32.mxu0 0.0
    %v3456 = vand.u32 %v103, 4294901760
    %3457 = vmatmul.mubr.f32.gmra.mrb[0].mxu0 %v3456
    %v3458 = vpop.f32.mrb[0].mxu0
    %v3459 = vadd.f32 %v2994, %v3458
    %v3460 = vpop.f32.mrb[0].mxu0
    %3461 = vmatprep.mubr.f32.mxu0 0.0
    %v3462 = vand.u32 %v104, 4294901760
    %3463 = vmatmul.mubr.f32.gmra.mrb[0].mxu0 %v3462
    %v3464 = vpop.f32.mrb[0].mxu0
    %v3465 = vadd.f32 %v3000, %v3464
    %v3466 = vpop.f32.mrb[0].mxu0
    %3467 = vmatprep.mubr.f32.mxu0 0.0
    %v3468 = vand.u32 %v105, 4294901760
    %3469 = vmatmul.mubr.f32.gmra.mrb[0].mxu0 %v3468
    %v3470 = vpop.f32.mrb[0].mxu0
    %v3471 = vadd.f32 %v3006, %v3470
    %v3472 = vpop.f32.mrb[0].mxu0
    %3473 = vmatprep.mubr.f32.mxu0 0.0
    %v3474 = vand.u32 %v106, 4294901760
    %3475 = vmatmul.mubr.f32.gmra.mrb[0].mxu0 %v3474
    %v3476 = vpop.f32.mrb[0].mxu0
    %v3477 = vadd.f32 %v3012, %v3476
    %v3478 = vpop.f32.mrb[0].mxu0
    %3479 = vdwg.mxu0
    %3480 = vst [vmem:[#allocation7] sm:$0xff] %v3099
    %3481 = vst [vmem:[#allocation7 + $0x8] sm:$0xff] %v3105
    %3482 = vst [vmem:[#allocation7 + $0x10] sm:$0xff] %v3111
    %3483 = vst [vmem:[#allocation7 + $0x18] sm:$0xff] %v3117
    %3484 = vst [vmem:[#allocation7 + $0x20] sm:$0xff] %v3123
    %3485 = vst [vmem:[#allocation7 + $0x28] sm:$0xff] %v3129
    %3486 = vst [vmem:[#allocation7 + $0x30] sm:$0xff] %v3135
    %3487 = vst [vmem:[#allocation7 + $0x38] sm:$0xff] %v3141
    %3488 = vst [vmem:[#allocation7 + $0x40] sm:$0xff] %v3147
    %3489 = vst [vmem:[#allocation7 + $0x48] sm:$0xff] %v3153
    %3490 = vst [vmem:[#allocation7 + $0x50] sm:$0xff] %v3159
    %3491 = vst [vmem:[#allocation7 + $0x58] sm:$0xff] %v3165
    %3492 = vst [vmem:[#allocation7 + $0x60] sm:$0xff] %v3171
    %3493 = vst [vmem:[#allocation7 + $0x68] sm:$0xff] %v3177
    %3494 = vst [vmem:[#allocation7 + $0x70] sm:$0xff] %v3183
    %3495 = vst [vmem:[#allocation7 + $0x78] sm:$0xff] %v3189
    %3496 = vst [vmem:[#allocation7 + $0x80] sm:$0xff] %v3195
    %3497 = vst [vmem:[#allocation7 + $0x88] sm:$0xff] %v3201
    %3498 = vst [vmem:[#allocation7 + $0x90] sm:$0xff] %v3207
    %3499 = vst [vmem:[#allocation7 + $0x98] sm:$0xff] %v3213
    %3500 = vst [vmem:[#allocation7 + $0xa0] sm:$0xff] %v3219
    %3501 = vst [vmem:[#allocation7 + $0xa8] sm:$0xff] %v3225
    %3502 = vst [vmem:[#allocation7 + $0xb0] sm:$0xff] %v3231
    %3503 = vst [vmem:[#allocation7 + $0xb8] sm:$0xff] %v3237
    %3504 = vst [vmem:[#allocation7 + $0xc0] sm:$0xff] %v3243
    %3505 = vst [vmem:[#allocation7 + $0xc8] sm:$0xff] %v3249
    %3506 = vst [vmem:[#allocation7 + $0xd0] sm:$0xff] %v3255
    %3507 = vst [vmem:[#allocation7 + $0xd8] sm:$0xff] %v3261
    %3508 = vst [vmem:[#allocation7 + $0xe0] sm:$0xff] %v3267
    %3509 = vst [vmem:[#allocation7 + $0xe8] sm:$0xff] %v3273
    %3510 = vst [vmem:[#allocation7 + $0xf0] sm:$0xff] %v3279
    %3511 = vst [vmem:[#allocation7 + $0xf8] sm:$0xff] %v3285
    %3512 = vst [vmem:[#allocation7 + $0x100] sm:$0xff] %v3291
    %3513 = vst [vmem:[#allocation7 + $0x108] sm:$0xff] %v3297
    %3514 = vst [vmem:[#allocation7 + $0x110] sm:$0xff] %v3303
    %3515 = vst [vmem:[#allocation7 + $0x118] sm:$0xff] %v3309
    %3516 = vst [vmem:[#allocation7 + $0x120] sm:$0xff] %v3315
    %3517 = vst [vmem:[#allocation7 + $0x128] sm:$0xff] %v3321
    %3518 = vst [vmem:[#allocation7 + $0x130] sm:$0xff] %v3327
    %3519 = vst [vmem:[#allocation7 + $0x138] sm:$0xff] %v3333
    %3520 = vst [vmem:[#allocation7 + $0x140] sm:$0xff] %v3339
    %3521 = vst [vmem:[#allocation7 + $0x148] sm:$0xff] %v3345
    %3522 = vst [vmem:[#allocation7 + $0x150] sm:$0xff] %v3351
    %3523 = vst [vmem:[#allocation7 + $0x158] sm:$0xff] %v3357
    %3524 = vst [vmem:[#allocation7 + $0x160] sm:$0xff] %v3363
    %3525 = vst [vmem:[#allocation7 + $0x168] sm:$0xff] %v3369
    %3526 = vst [vmem:[#allocation7 + $0x170] sm:$0xff] %v3375
    %3527 = vst [vmem:[#allocation7 + $0x178] sm:$0xff] %v3381
    %3528 = vst [vmem:[#allocation7 + $0x180] sm:$0xff] %v3387
    %3529 = vst [vmem:[#allocation7 + $0x188] sm:$0xff] %v3393
    %3530 = vst [vmem:[#allocation7 + $0x190] sm:$0xff] %v3399
    %3531 = vst [vmem:[#allocation7 + $0x198] sm:$0xff] %v3405
    %3532 = vst [vmem:[#allocation7 + $0x1a0] sm:$0xff] %v3411
    %3533 = vst [vmem:[#allocation7 + $0x1a8] sm:$0xff] %v3417
    %3534 = vst [vmem:[#allocation7 + $0x1b0] sm:$0xff] %v3423
    %3535 = vst [vmem:[#allocation7 + $0x1b8] sm:$0xff] %v3429
    %3536 = vst [vmem:[#allocation7 + $0x1c0] sm:$0xff] %v3435
    %3537 = vst [vmem:[#allocation7 + $0x1c8] sm:$0xff] %v3441
    %3538 = vst [vmem:[#allocation7 + $0x1d0] sm:$0xff] %v3447
    %3539 = vst [vmem:[#allocation7 + $0x1d8] sm:$0xff] %v3453
    %3540 = vst [vmem:[#allocation7 + $0x1e0] sm:$0xff] %v3459
    %3541 = vst [vmem:[#allocation7 + $0x1e8] sm:$0xff] %v3465
    %3542 = vst [vmem:[#allocation7 + $0x1f0] sm:$0xff] %v3471
    %3543 = vst [vmem:[#allocation7 + $0x1f8] sm:$0xff] %v3477
    // Predicated region
    $region22: #{tpu_custom_call.1} parent=1 // pred_check
      _
    $region23: #{tpu_custom_call.1} parent=1 // pred_check_branch
      %3545 = sbr.rel (0) target = $region25
    $region24: #{tpu_custom_call.1} parent=1 // pred_region
      %s3547 = ssub.s32 8192, 8192
      %3548 = vsyncadd [#allocation4], %s3547
      %s3549 = sshll.u32 [#allocation7], 4
      %s3550 = int_to_ptr.vmem [resolvable:$true] %s3549
      %3555 = dma.vmem_to_hbm [thread:$0]  %s3550, 8192, %s3, [#allocation4], 128, 128, 8
    $region25: #{tpu_custom_call.1} parent=1 // pred_fallthru
      _
    // Predicated region
    $region26: #{tpu_custom_call.1} parent=1 // pred_check
      _
    $region27: #{tpu_custom_call.1} parent=1 // pred_check_branch
      %3557 = sbr.rel (0) target = $region29
    $region28: #{tpu_custom_call.1} parent=1 // pred_region
      %3558 = dma.done [#allocation4], 8192
    $region29: #{tpu_custom_call.1} parent=1 // pred_fallthru
      _
    %3559 = vsyncpa [#allocation3], 1
    %3560 = vsyncpa [#allocation6], 1
    %3561 = vsyncpa [#allocation4], 1

</llo_original>
